<compile_context>
chip_gen: v6e
topology: v6e:2x2x1
jax: 0.10.0
libtpu: 0.0.40
codegen_flags: <defaults>
</compile_context>

<pallas_src>
import functools

import jax
import jax.numpy as jnp
from jax import lax
from jax.experimental import pallas as pl
from jax.experimental.pallas import tpu as pltpu

_EPS = 1e-5       # PyTorch BatchNorm2d default eps
_LANES = 128      # TPU lane width; channel axes are padded to multiples of it


def _round_up(x, m):
    return (x + m - 1) // m * m


def _lane_window(c_lo, c_hi, cpad):
    """Smallest lane-tile-aligned window [lo, lo+width) covering [c_lo, c_hi)
    such that lo is a multiple of width (so it is addressable as a block index)."""
    lo = (c_lo // _LANES) * _LANES
    hi = min(_round_up(c_hi, _LANES), cpad)
    width = hi - lo
    while lo % width:
        lo -= _LANES
        width = hi - lo
    return lo, width


def _compiler_params(num_axes):
    try:
        cap = pltpu.get_tpu_info().vmem_capacity_bytes
    except Exception:
        cap = 128 * 1024 * 1024
    limit = min(int(cap * 3 // 4), 100 * 1024 * 1024)
    return pltpu.CompilerParams(
        dimension_semantics=("parallel",) * num_axes,
        vmem_limit_bytes=limit,
    )


def fold_bn(gamma, beta, mean, var, eps=_EPS):
    scale = gamma / jnp.sqrt(var + eps)
    return scale, beta - mean * scale


def _pad_affine(scale, bias, width):
    c = scale.shape[0]
    s = jnp.ones((width,), jnp.float32).at[:c].set(scale)
    b = jnp.zeros((width,), jnp.float32).at[:c].set(bias)
    return s.reshape(1, width), b.reshape(1, width)


# --------------------------- Pallas kernels ---------------------------------

def _dense_block_kernel(x_ref, s1_ref, b1_ref, w1_ref, s2_ref, b2_ref, w2_ref,
                        ml_ref, mr_ref, o_ref, scr_l, scr_c, scr_r, slab,
                        *, W, pad_top, win_lo):
    """Fused DenseNetBone for one image tile.

    x_ref : (HW, CPAD)  bf16  lane-padded persistent feature tile
    w1_ref: (CPAD, IPAD) bf16  zero-padded 1x1 conv weight
    w2_ref: (9*IPAD, WIN) bf16 fused 3x3 taps; output columns placed at
                               (channel offset - win_lo) inside the window
    ml/mr : (HW, 1) bf16  source-column masks (zero at col W-1 / col 0)
    o_ref : (HW, WIN) bf16  aliased growth-channel lane window of the buffer
    scr_* : (PAD_ROWS, IPAD) bf16 vertically halo'd, horizontally pre-shifted a1
    slab  : (HW, 9*IPAD) bf16 in-VMEM im2col slab
    """
    hw = x_ref.shape[0]
    ipad = w1_ref.shape[1]
    pad_rows = scr_c.shape[0]
    win_cols = o_ref.shape[1]

    x = x_ref[...].astype(jnp.float32)
    # BN1 + ReLU (f32) -> bf16 -> 1x1 conv on the MXU (f32 accumulation).
    a0 = jnp.maximum(x * s1_ref[...] + b1_ref[...], 0.0).astype(jnp.bfloat16)
    y1 = jnp.dot(a0, w1_ref[...], preferred_element_type=jnp.float32)
    # BN2 + ReLU in f32; cast once to bf16 (single cast, not per tap).
    a1 = jnp.maximum(y1 * s2_ref[...] + b2_ref[...], 0.0).astype(jnp.bfloat16)

    # Three halo copies, one per horizontal tap position dx in {0,1,2}; the
    # data is written at row offset pad_top - (dx-1) so every later tap slice
    # read starts at pad_top + (dy-1)*W (sublane-aligned when W % 8 == 0).
    # Column-validity masks are applied on the source side:
    #   dx=0 taps never legitimately read source column W-1 (only via wrap),
    #   dx=2 taps never legitimately read source column 0.
    a1_l = a1 * ml_ref[...]
    a1_r = a1 * mr_ref[...]
    copies = ((scr_l, pad_top + 1, a1_l),
              (scr_c, pad_top, a1),
              (scr_r, pad_top - 1, a1_r))
    for scr, off, val in copies:
        # Re-zero only the small halo rows each step (safe under megacore).
        scr[0:off, :] = jnp.zeros((off, ipad), jnp.bfloat16)
        scr[off + hw:pad_rows, :] = jnp.zeros((pad_rows - off - hw, ipad),
                                              jnp.bfloat16)
        scr[off:off + hw, :] = val

    # Build the im2col slab: tap t = dy*3+dx occupies lanes [t*IPAD, (t+1)*IPAD).
    for dy in range(3):
        start = pad_top + (dy - 1) * W
        for dx, scr in enumerate((scr_l, scr_c, scr_r)):
            t = dy * 3 + dx
            slab[:, t * ipad:(t + 1) * ipad] = scr[start:start + hw, :]

    # Single fused matmul: K = 9*IPAD, N = growth-channel window only.
    acc = jnp.dot(slab[...], w2_ref[...], preferred_element_type=jnp.float32)

    # Dense connection: growth channels occupy zero lanes of x inside the
    # window, so the add is exactly the channel concat; lanes outside the
    # window are never written (input_output_aliases preserves them).
    x_win = x[:, win_lo:win_lo + win_cols]
    o_ref[...] = (x_win + acc).astype(o_ref.dtype)


def _transition_kernel(x_ref, s_ref, b_ref, p_ref, w_ref, o_ref):
    """Fused BN + ReLU + 2x2 avg-pool + 1x1 conv for one pair of image rows.

    x_ref : (2W, CPAD) bf16   two consecutive image rows
    p_ref : (W/2, 2W)  bf16   constant 0.25 pooling matrix (tiny, O(W^2))
    w_ref : (CPAD, COPAD) bf16 zero-padded 1x1 conv weight
    o_ref : (W/2, COPAD) f32  one pooled output row
    Pool-before-conv == conv-before-pool because both are linear (1x1 conv).
    """
    a = jnp.maximum(x_ref[...].astype(jnp.float32) * s_ref[...] + b_ref[...], 0.0)
    pooled = jnp.dot(p_ref[...], a.astype(jnp.bfloat16),
                     preferred_element_type=jnp.float32)
    o_ref[...] = jnp.dot(pooled.astype(jnp.bfloat16), w_ref[...],
                         preferred_element_type=jnp.float32)


# --------------------------- pallas_call wrappers -----------------------------

def dense_block(buf, blk, c_in, *, n, h, w):
    """Apply one DenseNetBone to the padded (N*H*W, CPAD) bf16 feature buffer."""
    cpad = buf.shape[-1]
    inter = blk["conv1_w"].shape[0]
    growth = blk["conv2_w"].shape[0]
    ipad = _round_up(inter, _LANES)
    hw = h * w

    win_lo, win_cols = _lane_window(c_in, c_in + growth, cpad)
    win_blk = win_lo // win_cols

    s1, b1 = fold_bn(blk["bn1_gamma"], blk["bn1_beta"], blk["bn1_mean"], blk["bn1_var"])
    s2, b2 = fold_bn(blk["bn2_gamma"], blk["bn2_beta"], blk["bn2_mean"], blk["bn2_var"])
    s1p, b1p = _pad_affine(s1, b1, cpad)
    s2p, b2p = _pad_affine(s2, b2, ipad)

    w1 = blk["conv1_w"][:, :, 0, 0].T                                   # (c_in, inter)
    w1p = (jnp.zeros((cpad, ipad), jnp.float32)
           .at[:c_in, :inter].set(w1).astype(jnp.bfloat16))

    # 3x3 taps fused along K; output columns placed at the in-window offset.
    w2 = jnp.transpose(blk["conv2_w"], (2, 3, 1, 0)).reshape(9, inter, growth)
    w2p = (jnp.zeros((9, ipad, win_cols), jnp.float32)
           .at[:, :inter, c_in - win_lo:c_in - win_lo + growth].set(w2)
           .reshape(9 * ipad, win_cols).astype(jnp.bfloat16))

    # Source-column masks (indexed by source pixel, broadcast across lanes).
    col = jnp.arange(hw, dtype=jnp.int32) % w
    ml = (col != w - 1).astype(jnp.bfloat16).reshape(hw, 1)   # for dx=0 taps
    mr = (col != 0).astype(jnp.bfloat16).reshape(hw, 1)       # for dx=2 taps

    pad_top = _round_up(w + 1, 8)
    pad_rows = _round_up(pad_top + hw + w + 1, 8)
    kern = functools.partial(_dense_block_kernel, W=w, pad_top=pad_top, win_lo=win_lo)

    return pl.pallas_call(
        kern,
        out_shape=jax.ShapeDtypeStruct(buf.shape, buf.dtype),
        grid=(n,),
        in_specs=[
            pl.BlockSpec((hw, cpad), lambda i: (i, 0)),          # feature tile
            pl.BlockSpec((1, cpad), lambda i: (0, 0)),           # bn1 scale
            pl.BlockSpec((1, cpad), lambda i: (0, 0)),           # bn1 bias
            pl.BlockSpec((cpad, ipad), lambda i: (0, 0)),        # w1 (resident)
            pl.BlockSpec((1, ipad), lambda i: (0, 0)),           # bn2 scale
            pl.BlockSpec((1, ipad), lambda i: (0, 0)),           # bn2 bias
            pl.BlockSpec((9 * ipad, win_cols), lambda i: (0, 0)),  # fused w2
            pl.BlockSpec((hw, 1), lambda i: (0, 0)),             # left mask
            pl.BlockSpec((hw, 1), lambda i: (0, 0)),             # right mask
        ],
        out_specs=pl.BlockSpec((hw, win_cols), lambda i: (i, win_blk)),
        scratch_shapes=[
            pltpu.VMEM((pad_rows, ipad), jnp.bfloat16),   # halo copy, dx=0
            pltpu.VMEM((pad_rows, ipad), jnp.bfloat16),   # halo copy, dx=1
            pltpu.VMEM((pad_rows, ipad), jnp.bfloat16),   # halo copy, dx=2
            pltpu.VMEM((hw, 9 * ipad), jnp.bfloat16),     # im2col slab
        ],
        input_output_aliases={0: 0},
        compiler_params=_compiler_params(1),
    )(buf, s1p, b1p, w1p, s2p, b2p, w2p, ml, mr)


def transition(buf, tr, c_in, *, n, h, w):
    """Fused transition: BN + ReLU + 2x2 average pool + 1x1 conv."""
    cpad = buf.shape[-1]
    cout = tr["conv_w"].shape[0]
    copad = _round_up(cout, _LANES)
    ho, wo = h // 2, w // 2

    st, bt = fold_bn(tr["bn_gamma"], tr["bn_beta"], tr["bn_mean"], tr["bn_var"])
    sp, bp = _pad_affine(st, bt, cpad)
    wt = tr["conv_w"][:, :, 0, 0].T                                     # (c_in, cout)
    wtp = (jnp.zeros((cpad, copad), jnp.float32)
           .at[:c_in, :cout].set(wt).astype(jnp.bfloat16))

    # Tiny constant pooling matrix over a PAIR of image rows: (wo, 2w), so the
    # pooling cost is linear in H*W (no O((H*W)^2) matrix).
    xo = jnp.arange(wo)
    xcol = jnp.arange(2 * w) % w
    pool = jnp.where((xcol[None, :] // 2) == xo[:, None], 0.25, 0.0
                     ).astype(jnp.bfloat16)

    return pl.pallas_call(
        _transition_kernel,
        out_shape=jax.ShapeDtypeStruct((n * ho * wo, copad), jnp.float32),
        grid=(n, ho),
        in_specs=[
            pl.BlockSpec((2 * w, cpad), lambda i, r: (i * ho + r, 0)),
            pl.BlockSpec((1, cpad), lambda i, r: (0, 0)),
            pl.BlockSpec((1, cpad), lambda i, r: (0, 0)),
            pl.BlockSpec((wo, 2 * w), lambda i, r: (0, 0)),
            pl.BlockSpec((cpad, copad), lambda i, r: (0, 0)),
        ],
        out_specs=pl.BlockSpec((wo, copad), lambda i, r: (i * ho + r, 0)),
        compiler_params=_compiler_params(2),
    )(buf, sp, bp, pool, wtp)


# --------------------------- parameters --------------------------------------

def init_params(key, num_blocks, growth_rate, input_channels, bottleneck_width=4):
    inter = int(growth_rate * bottleneck_width / 4) * 4
    blocks = []
    c = input_channels
    for _ in range(num_blocks):
        key, *ks = jax.random.split(key, 11)
        blk = {
            "bn1_gamma": 1.0 + 0.1 * jax.random.normal(ks[0], (c,), jnp.float32),
            "bn1_beta": 0.1 * jax.random.normal(ks[1], (c,), jnp.float32),
            "bn1_mean": 0.1 * jax.random.normal(ks[2], (c,), jnp.float32),
            "bn1_var": 0.5 + jax.random.uniform(ks[3], (c,), jnp.float32),
            "conv1_w": 0.2 * jax.random.normal(ks[4], (inter, c, 1, 1), jnp.float32),   # OIHW
            "bn2_gamma": 1.0 + 0.1 * jax.random.normal(ks[5], (inter,), jnp.float32),
            "bn2_beta": 0.1 * jax.random.normal(ks[6], (inter,), jnp.float32),
            "bn2_mean": 0.1 * jax.random.normal(ks[7], (inter,), jnp.float32),
            "bn2_var": 0.5 + jax.random.uniform(ks[8], (inter,), jnp.float32),
            "conv2_w": 0.1 * jax.random.normal(ks[9], (growth_rate, inter, 3, 3), jnp.float32),
        }
        blocks.append(blk)
        c += growth_rate
    key, k0, k1, k2, k3, k4 = jax.random.split(key, 6)
    trans = {
        "bn_gamma": 1.0 + 0.1 * jax.random.normal(k0, (c,), jnp.float32),
        "bn_beta": 0.1 * jax.random.normal(k1, (c,), jnp.float32),
        "bn_mean": 0.1 * jax.random.normal(k2, (c,), jnp.float32),
        "bn_var": 0.5 + jax.random.uniform(k3, (c,), jnp.float32),
        "conv_w": 0.2 * jax.random.normal(k4, (c // 2, c, 1, 1), jnp.float32),
    }
    return {"blocks": blocks, "transition": trans}


# --------------------------- forward (Pallas) ---------------------------------

def densenet_forward(params, x_nchw):
    n, c0, h, w = x_nchw.shape
    assert (h * w) % 8 == 0 and h % 2 == 0 and w % 16 == 0, (h, w)
    blocks = params["blocks"]
    c_final = c0 + sum(int(b["conv2_w"].shape[0]) for b in blocks)
    cpad = _round_up(max(c_final, 1), _LANES)

    # Persistent lane-padded bf16 feature buffer: rows = N*H*W, lanes = CPAD.
    x_nhwc = jnp.transpose(x_nchw, (0, 2, 3, 1)).astype(jnp.bfloat16)
    buf = (jnp.zeros((n * h * w, cpad), jnp.bfloat16)
           .at[:, :c0].set(x_nhwc.reshape(n * h * w, c0)))

    c_in = c0
    for blk in blocks:
        buf = dense_block(buf, blk, c_in, n=n, h=h, w=w)
        c_in += int(blk["conv2_w"].shape[0])

    out = transition(buf, params["transition"], c_in, n=n, h=h, w=w)
    ho, wo = h // 2, w // 2
    cout = int(params["transition"]["conv_w"].shape[0])
    y = out.reshape(n, ho, wo, -1)[:, :, :, :cout]
    return jnp.transpose(y, (0, 3, 1, 2))                          # NHWC -> NCHW


# --------------------------- pure-JAX reference -------------------------------

def densenet_reference(params, x_nchw):
    dn = ("NCHW", "OIHW", "NCHW")
    x = x_nchw.astype(jnp.float32)
    for blk in params["blocks"]:
        s1, b1 = fold_bn(blk["bn1_gamma"], blk["bn1_beta"], blk["bn1_mean"], blk["bn1_var"])
        a = jax.nn.relu(x * s1[None, :, None, None] + b1[None, :, None, None])
        o = lax.conv_general_dilated(a, blk["conv1_w"], (1, 1), "VALID", dimension_numbers=dn)
        s2, b2 = fold_bn(blk["bn2_gamma"], blk["bn2_beta"], blk["bn2_mean"], blk["bn2_var"])
        a = jax.nn.relu(o * s2[None, :, None, None] + b2[None, :, None, None])
        o = lax.conv_general_dilated(a, blk["conv2_w"], (1, 1), ((1, 1), (1, 1)),
                                     dimension_numbers=dn)
        x = jnp.concatenate([x, o], axis=1)
    tr = params["transition"]
    st, bt = fold_bn(tr["bn_gamma"], tr["bn_beta"], tr["bn_mean"], tr["bn_var"])
    a = jax.nn.relu(x * st[None, :, None, None] + bt[None, :, None, None])
    y = lax.conv_general_dilated(a, tr["conv_w"], (1, 1), "VALID", dimension_numbers=dn)
    y = lax.reduce_window(y, 0.0, lax.add, (1, 1, 2, 2), (1, 1, 2, 2), "VALID") * 0.25
    return y


# --------------------------- main ---------------------------------------------

if __name__ == "__main__":
    num_blocks, growth_rate, input_channels = 3, 8, 4
    key = jax.random.PRNGKey(0)
    kp, kx = jax.random.split(key)
    params = init_params(kp, num_blocks, growth_rate, input_channels, bottleneck_width=4)
    x = jax.random.normal(kx, (2, input_channels, 16, 16), jnp.float32)

    fwd = jax.jit(densenet_forward)
    out = jax.block_until_ready(fwd(params, x))

    ref = densenet_reference(params, x)
    expected_c = (input_channels + num_blocks * growth_rate) // 2
    assert out.shape == ref.shape == (2, expected_c, 8, 8), (out.shape, ref.shape)
    err = float(jnp.max(jnp.abs(out - ref)))
    scale = float(jnp.max(jnp.abs(ref)))
    # bf16 activation storage + bf16 MXU matmuls (f32 accumulation) vs f32 ref.
    assert err <= 3e-2 * max(scale, 1.0), f"max abs error too large: {err} (scale {scale})"
    print("KERNEL_OK")
</pallas_src>

<mosaic_0001>
module attributes {stable_mosaic.version = 11 : i64} {
  func.func @_dense_block_kernel(%arg0: i32, %arg1: memref<256x128xbf16, #tpu.memory_space<vmem>>, %arg2: memref<1x128xf32, #tpu.memory_space<vmem>>, %arg3: memref<1x128xf32, #tpu.memory_space<vmem>>, %arg4: memref<128x128xbf16, #tpu.memory_space<vmem>>, %arg5: memref<1x128xf32, #tpu.memory_space<vmem>>, %arg6: memref<1x128xf32, #tpu.memory_space<vmem>>, %arg7: memref<1152x128xbf16, #tpu.memory_space<vmem>>, %arg8: memref<256x1xbf16, #tpu.memory_space<vmem>>, %arg9: memref<256x1xbf16, #tpu.memory_space<vmem>>, %arg10: memref<256x128xbf16, #tpu.memory_space<vmem>>, %arg11: memref<304x128xbf16, #tpu.memory_space<vmem>>, %arg12: memref<304x128xbf16, #tpu.memory_space<vmem>>, %arg13: memref<304x128xbf16, #tpu.memory_space<vmem>>, %arg14: memref<256x1152xbf16, #tpu.memory_space<vmem>>) attributes {dimension_semantics = [#tpu.dimension_semantics<parallel>], iteration_bounds = array<i64: 2>, scalar_prefetch = 0 : i64, scratch_operands = 4 : i64, tpu.core_type = #tpu.core_type<tc>, window_params = [{transform_indices = @transform_0, window_bounds = array<i64: 256, 128>}, {pipeline_mode = #tpu.pipeline_mode<synchronous>, transform_indices = @transform_1, window_bounds = array<i64: 1, 128>}, {pipeline_mode = #tpu.pipeline_mode<synchronous>, transform_indices = @transform_2, window_bounds = array<i64: 1, 128>}, {pipeline_mode = #tpu.pipeline_mode<synchronous>, transform_indices = @transform_3, window_bounds = array<i64: 128, 128>}, {pipeline_mode = #tpu.pipeline_mode<synchronous>, transform_indices = @transform_4, window_bounds = array<i64: 1, 128>}, {pipeline_mode = #tpu.pipeline_mode<synchronous>, transform_indices = @transform_5, window_bounds = array<i64: 1, 128>}, {pipeline_mode = #tpu.pipeline_mode<synchronous>, transform_indices = @transform_6, window_bounds = array<i64: 1152, 128>}, {pipeline_mode = #tpu.pipeline_mode<synchronous>, transform_indices = @transform_7, window_bounds = array<i64: 256, 1>}, {pipeline_mode = #tpu.pipeline_mode<synchronous>, transform_indices = @transform_8, window_bounds = array<i64: 256, 1>}, {transform_indices = @transform_9, window_bounds = array<i64: 256, 128>}]} {
    %c0 = arith.constant 0 : index
    %c0_0 = arith.constant 0 : index
    %0 = vector.load %arg1[%c0, %c0_0] : memref<256x128xbf16, #tpu.memory_space<vmem>>, vector<256x128xbf16>
    %1 = arith.extf %0 : vector<256x128xbf16> to vector<256x128xf32>
    %c0_1 = arith.constant 0 : index
    %c0_2 = arith.constant 0 : index
    %2 = vector.load %arg2[%c0_1, %c0_2] : memref<1x128xf32, #tpu.memory_space<vmem>>, vector<1x128xf32>
    %3 = vector.broadcast %2 : vector<1x128xf32> to vector<256x128xf32>
    %4 = arith.mulf %1, %3 : vector<256x128xf32>
    %c0_3 = arith.constant 0 : index
    %c0_4 = arith.constant 0 : index
    %5 = vector.load %arg3[%c0_3, %c0_4] : memref<1x128xf32, #tpu.memory_space<vmem>>, vector<1x128xf32>
    %6 = vector.broadcast %5 : vector<1x128xf32> to vector<256x128xf32>
    %7 = arith.addf %4, %6 : vector<256x128xf32>
    %cst = arith.constant 0.000000e+00 : f32
    %8 = vector.broadcast %cst : f32 to vector<256x128xf32>
    %9 = arith.maximumf %7, %8 : vector<256x128xf32>
    %10 = arith.truncf %9 : vector<256x128xf32> to vector<256x128xbf16>
    %c0_5 = arith.constant 0 : index
    %c0_6 = arith.constant 0 : index
    %11 = vector.load %arg4[%c0_5, %c0_6] : memref<128x128xbf16, #tpu.memory_space<vmem>>, vector<128x128xbf16>
    %cst_7 = arith.constant dense<0.000000e+00> : vector<256x128xf32>
    %12 = tpu.matmul %10, %11, %cst_7 {dimension_numbers = #tpu.dot_dimension_numbers<[1], [0], [0], [1], [0, 0, 1, 1], [], []>} : vector<256x128xbf16>, vector<128x128xbf16>, vector<256x128xf32> -> vector<256x128xf32>
    %c0_8 = arith.constant 0 : index
    %c0_9 = arith.constant 0 : index
    %13 = vector.load %arg5[%c0_8, %c0_9] : memref<1x128xf32, #tpu.memory_space<vmem>>, vector<1x128xf32>
    %14 = vector.broadcast %13 : vector<1x128xf32> to vector<256x128xf32>
    %15 = arith.mulf %12, %14 : vector<256x128xf32>
    %c0_10 = arith.constant 0 : index
    %c0_11 = arith.constant 0 : index
    %16 = vector.load %arg6[%c0_10, %c0_11] : memref<1x128xf32, #tpu.memory_space<vmem>>, vector<1x128xf32>
    %17 = vector.broadcast %16 : vector<1x128xf32> to vector<256x128xf32>
    %18 = arith.addf %15, %17 : vector<256x128xf32>
    %cst_12 = arith.constant 0.000000e+00 : f32
    %19 = vector.broadcast %cst_12 : f32 to vector<256x128xf32>
    %20 = arith.maximumf %18, %19 : vector<256x128xf32>
    %21 = arith.truncf %20 : vector<256x128xf32> to vector<256x128xbf16>
    %c0_13 = arith.constant 0 : index
    %c0_14 = arith.constant 0 : index
    %22 = vector.load %arg8[%c0_13, %c0_14] : memref<256x1xbf16, #tpu.memory_space<vmem>>, vector<256x1xbf16>
    %23 = vector.broadcast %22 : vector<256x1xbf16> to vector<256x128xbf16>
    %24 = arith.mulf %21, %23 : vector<256x128xbf16>
    %c0_15 = arith.constant 0 : index
    %c0_16 = arith.constant 0 : index
    %25 = vector.load %arg9[%c0_15, %c0_16] : memref<256x1xbf16, #tpu.memory_space<vmem>>, vector<256x1xbf16>
    %26 = vector.broadcast %25 : vector<256x1xbf16> to vector<256x128xbf16>
    %27 = arith.mulf %21, %26 : vector<256x128xbf16>
    %cst_17 = arith.constant 0.000000e+00 : bf16
    %28 = vector.broadcast %cst_17 : bf16 to vector<25x128xbf16>
    %c0_18 = arith.constant 0 : index
    %c0_19 = arith.constant 0 : index
    %29 = vector.load %arg11[%c0_18, %c0_19] : memref<304x128xbf16, #tpu.memory_space<vmem>>, vector<25x128xbf16>
    tpu.vector_store %arg11[%c0_18, %c0_19], %28 {strides = array<i32>} : memref<304x128xbf16, #tpu.memory_space<vmem>>, vector<25x128xbf16>,
    %cst_20 = arith.constant 0.000000e+00 : bf16
    %30 = vector.broadcast %cst_20 : bf16 to vector<23x128xbf16>
    %c281 = arith.constant 281 : index
    %c0_21 = arith.constant 0 : index
    %31 = vector.load %arg11[%c281, %c0_21] : memref<304x128xbf16, #tpu.memory_space<vmem>>, vector<23x128xbf16>
    tpu.vector_store %arg11[%c281, %c0_21], %30 {strides = array<i32>} : memref<304x128xbf16, #tpu.memory_space<vmem>>, vector<23x128xbf16>,
    %c25 = arith.constant 25 : index
    %c0_22 = arith.constant 0 : index
    %32 = vector.load %arg11[%c25, %c0_22] : memref<304x128xbf16, #tpu.memory_space<vmem>>, vector<256x128xbf16>
    tpu.vector_store %arg11[%c25, %c0_22], %24 {strides = array<i32>} : memref<304x128xbf16, #tpu.memory_space<vmem>>, vector<256x128xbf16>,
    %cst_23 = arith.constant 0.000000e+00 : bf16
    %33 = vector.broadcast %cst_23 : bf16 to vector<24x128xbf16>
    %c0_24 = arith.constant 0 : index
    %c0_25 = arith.constant 0 : index
    %34 = vector.load %arg12[%c0_24, %c0_25] : memref<304x128xbf16, #tpu.memory_space<vmem>>, vector<24x128xbf16>
    tpu.vector_store %arg12[%c0_24, %c0_25], %33 {strides = array<i32>} : memref<304x128xbf16, #tpu.memory_space<vmem>>, vector<24x128xbf16>,
    %cst_26 = arith.constant 0.000000e+00 : bf16
    %35 = vector.broadcast %cst_26 : bf16 to vector<24x128xbf16>
    %c280 = arith.constant 280 : index
    %c0_27 = arith.constant 0 : index
    %36 = vector.load %arg12[%c280, %c0_27] : memref<304x128xbf16, #tpu.memory_space<vmem>>, vector<24x128xbf16>
    tpu.vector_store %arg12[%c280, %c0_27], %35 {strides = array<i32>} : memref<304x128xbf16, #tpu.memory_space<vmem>>, vector<24x128xbf16>,
    %c24 = arith.constant 24 : index
    %c0_28 = arith.constant 0 : index
    %37 = vector.load %arg12[%c24, %c0_28] : memref<304x128xbf16, #tpu.memory_space<vmem>>, vector<256x128xbf16>
    tpu.vector_store %arg12[%c24, %c0_28], %21 {strides = array<i32>} : memref<304x128xbf16, #tpu.memory_space<vmem>>, vector<256x128xbf16>,
    %cst_29 = arith.constant 0.000000e+00 : bf16
    %38 = vector.broadcast %cst_29 : bf16 to vector<23x128xbf16>
    %c0_30 = arith.constant 0 : index
    %c0_31 = arith.constant 0 : index
    %39 = vector.load %arg13[%c0_30, %c0_31] : memref<304x128xbf16, #tpu.memory_space<vmem>>, vector<23x128xbf16>
    tpu.vector_store %arg13[%c0_30, %c0_31], %38 {strides = array<i32>} : memref<304x128xbf16, #tpu.memory_space<vmem>>, vector<23x128xbf16>,
    %cst_32 = arith.constant 0.000000e+00 : bf16
    %40 = vector.broadcast %cst_32 : bf16 to vector<25x128xbf16>
    %c279 = arith.constant 279 : index
    %c0_33 = arith.constant 0 : index
    %41 = vector.load %arg13[%c279, %c0_33] : memref<304x128xbf16, #tpu.memory_space<vmem>>, vector<25x128xbf16>
    tpu.vector_store %arg13[%c279, %c0_33], %40 {strides = array<i32>} : memref<304x128xbf16, #tpu.memory_space<vmem>>, vector<25x128xbf16>,
    %c23 = arith.constant 23 : index
    %c0_34 = arith.constant 0 : index
    %42 = vector.load %arg13[%c23, %c0_34] : memref<304x128xbf16, #tpu.memory_space<vmem>>, vector<256x128xbf16>
    tpu.vector_store %arg13[%c23, %c0_34], %27 {strides = array<i32>} : memref<304x128xbf16, #tpu.memory_space<vmem>>, vector<256x128xbf16>,
    %c8 = arith.constant 8 : index
    %c0_35 = arith.constant 0 : index
    %43 = vector.load %arg11[%c8, %c0_35] : memref<304x128xbf16, #tpu.memory_space<vmem>>, vector<256x128xbf16>
    %c0_36 = arith.constant 0 : index
    %c0_37 = arith.constant 0 : index
    %44 = vector.load %arg14[%c0_36, %c0_37] : memref<256x1152xbf16, #tpu.memory_space<vmem>>, vector<256x128xbf16>
    tpu.vector_store %arg14[%c0_36, %c0_37], %43 {strides = array<i32>} : memref<256x1152xbf16, #tpu.memory_space<vmem>>, vector<256x128xbf16>,
    %c8_38 = arith.constant 8 : index
    %c0_39 = arith.constant 0 : index
    %45 = vector.load %arg12[%c8_38, %c0_39] : memref<304x128xbf16, #tpu.memory_space<vmem>>, vector<256x128xbf16>
    %c0_40 = arith.constant 0 : index
    %c128 = arith.constant 128 : index
    %46 = vector.load %arg14[%c0_40, %c128] : memref<256x1152xbf16, #tpu.memory_space<vmem>>, vector<256x128xbf16>
    tpu.vector_store %arg14[%c0_40, %c128], %45 {strides = array<i32>} : memref<256x1152xbf16, #tpu.memory_space<vmem>>, vector<256x128xbf16>,
    %c8_41 = arith.constant 8 : index
    %c0_42 = arith.constant 0 : index
    %47 = vector.load %arg13[%c8_41, %c0_42] : memref<304x128xbf16, #tpu.memory_space<vmem>>, vector<256x128xbf16>
    %c0_43 = arith.constant 0 : index
    %c256 = arith.constant 256 : index
    %48 = vector.load %arg14[%c0_43, %c256] : memref<256x1152xbf16, #tpu.memory_space<vmem>>, vector<256x128xbf16>
    tpu.vector_store %arg14[%c0_43, %c256], %47 {strides = array<i32>} : memref<256x1152xbf16, #tpu.memory_space<vmem>>, vector<256x128xbf16>,
    %c24_44 = arith.constant 24 : index
    %c0_45 = arith.constant 0 : index
    %49 = vector.load %arg11[%c24_44, %c0_45] : memref<304x128xbf16, #tpu.memory_space<vmem>>, vector<256x128xbf16>
    %c0_46 = arith.constant 0 : index
    %c384 = arith.constant 384 : index
    %50 = vector.load %arg14[%c0_46, %c384] : memref<256x1152xbf16, #tpu.memory_space<vmem>>, vector<256x128xbf16>
    tpu.vector_store %arg14[%c0_46, %c384], %49 {strides = array<i32>} : memref<256x1152xbf16, #tpu.memory_space<vmem>>, vector<256x128xbf16>,
    %c24_47 = arith.constant 24 : index
    %c0_48 = arith.constant 0 : index
    %51 = vector.load %arg12[%c24_47, %c0_48] : memref<304x128xbf16, #tpu.memory_space<vmem>>, vector<256x128xbf16>
    %c0_49 = arith.constant 0 : index
    %c512 = arith.constant 512 : index
    %52 = vector.load %arg14[%c0_49, %c512] : memref<256x1152xbf16, #tpu.memory_space<vmem>>, vector<256x128xbf16>
    tpu.vector_store %arg14[%c0_49, %c512], %51 {strides = array<i32>} : memref<256x1152xbf16, #tpu.memory_space<vmem>>, vector<256x128xbf16>,
    %c24_50 = arith.constant 24 : index
    %c0_51 = arith.constant 0 : index
    %53 = vector.load %arg13[%c24_50, %c0_51] : memref<304x128xbf16, #tpu.memory_space<vmem>>, vector<256x128xbf16>
    %c0_52 = arith.constant 0 : index
    %c640 = arith.constant 640 : index
    %54 = vector.load %arg14[%c0_52, %c640] : memref<256x1152xbf16, #tpu.memory_space<vmem>>, vector<256x128xbf16>
    tpu.vector_store %arg14[%c0_52, %c640], %53 {strides = array<i32>} : memref<256x1152xbf16, #tpu.memory_space<vmem>>, vector<256x128xbf16>,
    %c40 = arith.constant 40 : index
    %c0_53 = arith.constant 0 : index
    %55 = vector.load %arg11[%c40, %c0_53] : memref<304x128xbf16, #tpu.memory_space<vmem>>, vector<256x128xbf16>
    %c0_54 = arith.constant 0 : index
    %c768 = arith.constant 768 : index
    %56 = vector.load %arg14[%c0_54, %c768] : memref<256x1152xbf16, #tpu.memory_space<vmem>>, vector<256x128xbf16>
    tpu.vector_store %arg14[%c0_54, %c768], %55 {strides = array<i32>} : memref<256x1152xbf16, #tpu.memory_space<vmem>>, vector<256x128xbf16>,
    %c40_55 = arith.constant 40 : index
    %c0_56 = arith.constant 0 : index
    %57 = vector.load %arg12[%c40_55, %c0_56] : memref<304x128xbf16, #tpu.memory_space<vmem>>, vector<256x128xbf16>
    %c0_57 = arith.constant 0 : index
    %c896 = arith.constant 896 : index
    %58 = vector.load %arg14[%c0_57, %c896] : memref<256x1152xbf16, #tpu.memory_space<vmem>>, vector<256x128xbf16>
    tpu.vector_store %arg14[%c0_57, %c896], %57 {strides = array<i32>} : memref<256x1152xbf16, #tpu.memory_space<vmem>>, vector<256x128xbf16>,
    %c40_58 = arith.constant 40 : index
    %c0_59 = arith.constant 0 : index
    %59 = vector.load %arg13[%c40_58, %c0_59] : memref<304x128xbf16, #tpu.memory_space<vmem>>, vector<256x128xbf16>
    %c0_60 = arith.constant 0 : index
    %c1024 = arith.constant 1024 : index
    %60 = vector.load %arg14[%c0_60, %c1024] : memref<256x1152xbf16, #tpu.memory_space<vmem>>, vector<256x128xbf16>
    tpu.vector_store %arg14[%c0_60, %c1024], %59 {strides = array<i32>} : memref<256x1152xbf16, #tpu.memory_space<vmem>>, vector<256x128xbf16>,
    %c0_61 = arith.constant 0 : index
    %c0_62 = arith.constant 0 : index
    %61 = vector.load %arg14[%c0_61, %c0_62] : memref<256x1152xbf16, #tpu.memory_space<vmem>>, vector<256x1152xbf16>
    %c0_63 = arith.constant 0 : index
    %c0_64 = arith.constant 0 : index
    %62 = vector.load %arg7[%c0_63, %c0_64] : memref<1152x128xbf16, #tpu.memory_space<vmem>>, vector<1152x128xbf16>
    %cst_65 = arith.constant dense<0.000000e+00> : vector<256x128xf32>
    %63 = tpu.matmul %61, %62, %cst_65 {dimension_numbers = #tpu.dot_dimension_numbers<[1], [0], [0], [1], [0, 0, 1, 1], [], []>} : vector<256x1152xbf16>, vector<1152x128xbf16>, vector<256x128xf32> -> vector<256x128xf32>
    %64 = arith.addf %1, %63 : vector<256x128xf32>
    %65 = arith.truncf %64 : vector<256x128xf32> to vector<256x128xbf16>
    %c0_66 = arith.constant 0 : index
    %c0_67 = arith.constant 0 : index
    %66 = vector.load %arg10[%c0_66, %c0_67] : memref<256x128xbf16, #tpu.memory_space<vmem>>, vector<256x128xbf16>
    tpu.vector_store %arg10[%c0_66, %c0_67], %65 {strides = array<i32>} : memref<256x128xbf16, #tpu.memory_space<vmem>>, vector<256x128xbf16>,
    return
  }
  func.func @transform_0(%arg0: i32) -> (i32, i32) {
    %c0_i32 = arith.constant 0 : i32
    %c0_i32_0 = arith.constant 0 : i32
    return %arg0, %c0_i32 : i32, i32
  }
  func.func @transform_1(%arg0: i32) -> (i32, i32) {
    %c0_i32 = arith.constant 0 : i32
    %c0_i32_0 = arith.constant 0 : i32
    %c0_i32_1 = arith.constant 0 : i32
    return %c0_i32, %c0_i32_0 : i32, i32
  }
  func.func @transform_2(%arg0: i32) -> (i32, i32) {
    %c0_i32 = arith.constant 0 : i32
    %c0_i32_0 = arith.constant 0 : i32
    %c0_i32_1 = arith.constant 0 : i32
    return %c0_i32, %c0_i32_0 : i32, i32
  }
  func.func @transform_3(%arg0: i32) -> (i32, i32) {
    %c0_i32 = arith.constant 0 : i32
    %c0_i32_0 = arith.constant 0 : i32
    %c0_i32_1 = arith.constant 0 : i32
    return %c0_i32, %c0_i32_0 : i32, i32
  }
  func.func @transform_4(%arg0: i32) -> (i32, i32) {
    %c0_i32 = arith.constant 0 : i32
    %c0_i32_0 = arith.constant 0 : i32
    %c0_i32_1 = arith.constant 0 : i32
    return %c0_i32, %c0_i32_0 : i32, i32
  }
  func.func @transform_5(%arg0: i32) -> (i32, i32) {
    %c0_i32 = arith.constant 0 : i32
    %c0_i32_0 = arith.constant 0 : i32
    %c0_i32_1 = arith.constant 0 : i32
    return %c0_i32, %c0_i32_0 : i32, i32
  }
  func.func @transform_6(%arg0: i32) -> (i32, i32) {
    %c0_i32 = arith.constant 0 : i32
    %c0_i32_0 = arith.constant 0 : i32
    %c0_i32_1 = arith.constant 0 : i32
    return %c0_i32, %c0_i32_0 : i32, i32
  }
  func.func @transform_7(%arg0: i32) -> (i32, i32) {
    %c0_i32 = arith.constant 0 : i32
    %c0_i32_0 = arith.constant 0 : i32
    %c0_i32_1 = arith.constant 0 : i32
    return %c0_i32, %c0_i32_0 : i32, i32
  }
  func.func @transform_8(%arg0: i32) -> (i32, i32) {
    %c0_i32 = arith.constant 0 : i32
    %c0_i32_0 = arith.constant 0 : i32
    %c0_i32_1 = arith.constant 0 : i32
    return %c0_i32, %c0_i32_0 : i32, i32
  }
  func.func @transform_9(%arg0: i32) -> (i32, i32) {
    %c0_i32 = arith.constant 0 : i32
    %c0_i32_0 = arith.constant 0 : i32
    return %arg0, %c0_i32 : i32, i32
  }
}

module attributes {stable_mosaic.version = 11 : i64} {
  func.func @_transition_kernel(%arg0: i32, %arg1: i32, %arg2: memref<32x128xbf16, #tpu.memory_space<vmem>>, %arg3: memref<1x128xf32, #tpu.memory_space<vmem>>, %arg4: memref<1x128xf32, #tpu.memory_space<vmem>>, %arg5: memref<8x32xbf16, #tpu.memory_space<vmem>>, %arg6: memref<128x128xbf16, #tpu.memory_space<vmem>>, %arg7: memref<8x128xf32, #tpu.memory_space<vmem>>) attributes {dimension_semantics = [#tpu.dimension_semantics<parallel>, #tpu.dimension_semantics<parallel>], iteration_bounds = array<i64: 2, 8>, scalar_prefetch = 0 : i64, scratch_operands = 0 : i64, tpu.core_type = #tpu.core_type<tc>, window_params = [{transform_indices = @transform_0, window_bounds = array<i64: 32, 128>}, {pipeline_mode = #tpu.pipeline_mode<synchronous>, transform_indices = @transform_1, window_bounds = array<i64: 1, 128>}, {pipeline_mode = #tpu.pipeline_mode<synchronous>, transform_indices = @transform_2, window_bounds = array<i64: 1, 128>}, {pipeline_mode = #tpu.pipeline_mode<synchronous>, transform_indices = @transform_3, window_bounds = array<i64: 8, 32>}, {pipeline_mode = #tpu.pipeline_mode<synchronous>, transform_indices = @transform_4, window_bounds = array<i64: 128, 128>}, {transform_indices = @transform_5, window_bounds = array<i64: 8, 128>}]} {
    %c0 = arith.constant 0 : index
    %c0_0 = arith.constant 0 : index
    %0 = vector.load %arg2[%c0, %c0_0] : memref<32x128xbf16, #tpu.memory_space<vmem>>, vector<32x128xbf16>
    %1 = arith.extf %0 : vector<32x128xbf16> to vector<32x128xf32>
    %c0_1 = arith.constant 0 : index
    %c0_2 = arith.constant 0 : index
    %2 = vector.load %arg3[%c0_1, %c0_2] : memref<1x128xf32, #tpu.memory_space<vmem>>, vector<1x128xf32>
    %3 = vector.broadcast %2 : vector<1x128xf32> to vector<32x128xf32>
    %4 = arith.mulf %1, %3 : vector<32x128xf32>
    %c0_3 = arith.constant 0 : index
    %c0_4 = arith.constant 0 : index
    %5 = vector.load %arg4[%c0_3, %c0_4] : memref<1x128xf32, #tpu.memory_space<vmem>>, vector<1x128xf32>
    %6 = vector.broadcast %5 : vector<1x128xf32> to vector<32x128xf32>
    %7 = arith.addf %4, %6 : vector<32x128xf32>
    %cst = arith.constant 0.000000e+00 : f32
    %8 = vector.broadcast %cst : f32 to vector<32x128xf32>
    %9 = arith.maximumf %7, %8 : vector<32x128xf32>
    %c0_5 = arith.constant 0 : index
    %c0_6 = arith.constant 0 : index
    %10 = vector.load %arg5[%c0_5, %c0_6] : memref<8x32xbf16, #tpu.memory_space<vmem>>, vector<8x32xbf16>
    %11 = arith.truncf %9 : vector<32x128xf32> to vector<32x128xbf16>
    %cst_7 = arith.constant dense<0.000000e+00> : vector<8x128xf32>
    %12 = tpu.matmul %10, %11, %cst_7 {dimension_numbers = #tpu.dot_dimension_numbers<[1], [0], [0], [1], [0, 0, 1, 1], [], []>} : vector<8x32xbf16>, vector<32x128xbf16>, vector<8x128xf32> -> vector<8x128xf32>
    %13 = arith.truncf %12 : vector<8x128xf32> to vector<8x128xbf16>
    %c0_8 = arith.constant 0 : index
    %c0_9 = arith.constant 0 : index
    %14 = vector.load %arg6[%c0_8, %c0_9] : memref<128x128xbf16, #tpu.memory_space<vmem>>, vector<128x128xbf16>
    %cst_10 = arith.constant dense<0.000000e+00> : vector<8x128xf32>
    %15 = tpu.matmul %13, %14, %cst_10 {dimension_numbers = #tpu.dot_dimension_numbers<[1], [0], [0], [1], [0, 0, 1, 1], [], []>} : vector<8x128xbf16>, vector<128x128xbf16>, vector<8x128xf32> -> vector<8x128xf32>
    %c0_11 = arith.constant 0 : index
    %c0_12 = arith.constant 0 : index
    %16 = vector.load %arg7[%c0_11, %c0_12] : memref<8x128xf32, #tpu.memory_space<vmem>>, vector<8x128xf32>
    tpu.vector_store %arg7[%c0_11, %c0_12], %15 {strides = array<i32>} : memref<8x128xf32, #tpu.memory_space<vmem>>, vector<8x128xf32>,
    return
  }
  func.func @transform_0(%arg0: i32, %arg1: i32) -> (i32, i32) {
    %c8_i32 = arith.constant 8 : i32
    %0 = arith.muli %arg0, %c8_i32 : i32
    %1 = arith.addi %0, %arg1 : i32
    %c0_i32 = arith.constant 0 : i32
    %c0_i32_0 = arith.constant 0 : i32
    return %1, %c0_i32 : i32, i32
  }
  func.func @transform_1(%arg0: i32, %arg1: i32) -> (i32, i32) {
    %c0_i32 = arith.constant 0 : i32
    %c0_i32_0 = arith.constant 0 : i32
    %c0_i32_1 = arith.constant 0 : i32
    return %c0_i32, %c0_i32_0 : i32, i32
  }
  func.func @transform_2(%arg0: i32, %arg1: i32) -> (i32, i32) {
    %c0_i32 = arith.constant 0 : i32
    %c0_i32_0 = arith.constant 0 : i32
    %c0_i32_1 = arith.constant 0 : i32
    return %c0_i32, %c0_i32_0 : i32, i32
  }
  func.func @transform_3(%arg0: i32, %arg1: i32) -> (i32, i32) {
    %c0_i32 = arith.constant 0 : i32
    %c0_i32_0 = arith.constant 0 : i32
    %c0_i32_1 = arith.constant 0 : i32
    return %c0_i32, %c0_i32_0 : i32, i32
  }
  func.func @transform_4(%arg0: i32, %arg1: i32) -> (i32, i32) {
    %c0_i32 = arith.constant 0 : i32
    %c0_i32_0 = arith.constant 0 : i32
    %c0_i32_1 = arith.constant 0 : i32
    return %c0_i32, %c0_i32_0 : i32, i32
  }
  func.func @transform_5(%arg0: i32, %arg1: i32) -> (i32, i32) {
    %c8_i32 = arith.constant 8 : i32
    %0 = arith.muli %arg0, %c8_i32 : i32
    %1 = arith.addi %0, %arg1 : i32
    %c0_i32 = arith.constant 0 : i32
    %c0_i32_0 = arith.constant 0 : i32
    return %1, %c0_i32 : i32, i32
  }
}

</mosaic_0001>

<llo_original>
// kernel: densenet_forward.7
$region0: #{densenet_forward.7}
  #allocation0 [shape = 'u32[]', space=smem, size = 0x4, offset = 0x4, fixed_abs, tag = 'smem constant byte address 0x4 - core index']
  #allocation1 [shape = 'u32[144,128]{1,0:T(1,128)}', space=vmem, size = 0x12000, scoped, tag = 'internal scratch']
  %s0 = inlined_call_operand.vmem [shape: bf16[512,128], index: 0, kind: input, shape index: {}]
  %s1 = inlined_call_operand.vmem [shape: f32[1,128], index: 1, kind: input, shape index: {}]
  %s2 = inlined_call_operand.vmem [shape: f32[1,128], index: 2, kind: input, shape index: {}]
  %s3 = inlined_call_operand.vmem [shape: bf16[8,32], index: 3, kind: input, shape index: {}]
  %s4 = inlined_call_operand.vmem [shape: bf16[128,128], index: 4, kind: input, shape index: {}]
  %s5 = inlined_call_operand.vmem [shape: f32[128,128], index: 5, kind: output, shape index: {}]
  %s6 = sld [smem:[#allocation0]]
  $region53: #{densenet_forward.7} parent=0
    _
  %s8 = ssub.s32 1, %s6
  %s9 = scalar_select 0, %s8, %s6
  loop: start=0, step=1, limit=18
  $region2: #{densenet_forward.7} parent=0 // loop_pre_header
    _
  $region3: #{densenet_forward.7} parent=0 // loop_header
    %s11 = sphi 0, %s15
    %p12 = scmp.ge.s32.totalorder %s11, 18
    %s18 = sphi 0, %s30
    %s19 = sphi 0, %s26
    %s20 = sphi 0, %s18
    %s21 = sphi 0, %s19
    %s22 = sphi 0, %s20
    %s23 = sphi 0, %s21
    %s37 = sphi 0, %s39
    %s40 = sphi 0, %s37
    %s41 = sphi 0, %s40
    %s57 = sphi 0, %s41
    %s61 = sphi 0, %s61
    %s63 = sphi 0, %s61
    %s64 = sphi 0, %s63
    %s78 = sphi 0, %s64
    %s82 = sphi 0, %s82
    %s84 = sphi 0, %s82
    %s85 = sphi 0, %s84
    %s99 = sphi 0, %s85
    %s103 = sphi 0, %s103
    %s105 = sphi 0, %s103
    %s106 = sphi 0, %s105
    %s120 = sphi 0, %s106
    %s124 = sphi 0, %s124
    %s126 = sphi 0, %s124
    %s127 = sphi 0, %s126
    %s141 = sphi 0, %s127
    %s151 = sphi 0, %s153
    %s154 = sphi 0, %s151
    %s155 = sphi 0, %s154
    %s171 = sphi 0, %s155
  $region4: #{densenet_forward.7} parent=0 // loop_header_branch
    %14 = sbr.rel (%p12) target = $region8
  $region5: #{densenet_forward.7} parent=0 // loop_body
    %s16 = ssub.s32 %s11, 1
    %s17 = ssub.s32 %s11, 2
    %s24 = sadd.s32 1, %s19
    %p25 = scmp.ge.s32.totalorder %s24, 8
    %s26 = scalar_select %p25, 0, %s24
    %s27 = sadd.s32 1, %s18
    %s28 = scalar_select %p25, %s27, %s18
    %p29 = scmp.ge.s32.totalorder %s28, 2
    %s30 = scalar_select %p29, 0, %s28
    %s31 = smul.u32 %s18, 8
    %s32 = sadd.s32 %s31, %s19
    %s33 = smul.u32 %s30, 8
    %s34 = sadd.s32 %s33, %s26
    %s35 = ssub.s32 %s32, %s34
    %p36 = scmp.eq.s32.totalorder %s35, 0
    %s38 = sadd.s32 %s37, 1
    %s39 = scalar_select %p36, %s37, %s38
    %p42 = pneg %p36
    %p43 = scmp.eq.s32.totalorder %s11, 15
    %p44 = por %p42, %p43
    %p45 = scmp.ne.s32.totalorder %s37, %s40
    %p46 = scmp.eq.s32.totalorder %s11, 0
    %p47 = por %p45, %p46
    %p48 = scmp.ne.s32.totalorder %s37, %s40
    %p49 = scmp.eq.s32.totalorder %s16, 15
    %p50 = por %p48, %p49
    %p51 = scmp.ne.s32.totalorder %s40, %s41
    %p52 = scmp.eq.s32.totalorder %s16, 0
    %p53 = por %p51, %p52
    %p54 = scmp.ne.s32.totalorder %s40, %s41
    %p55 = scmp.eq.s32.totalorder %s17, 15
    %p56 = por %p54, %p55
    %p58 = scmp.ne.s32.totalorder %s41, %s57
    %p59 = scmp.eq.s32.totalorder %s17, 0
    %p60 = por %p58, %p59
    %s62 = sadd.s32 %s61, 1
    %p65 = scmp.eq.s32.totalorder %s11, 15
    %p66 = scmp.ne.s32.totalorder %s61, %s63
    %p67 = scmp.eq.s32.totalorder %s11, 0
    %p68 = por %p66, %p67
    %p69 = scmp.ne.s32.totalorder %s61, %s63
    %p70 = scmp.eq.s32.totalorder %s16, 15
    %p71 = por %p69, %p70
    %p72 = scmp.ne.s32.totalorder %s63, %s64
    %p73 = scmp.eq.s32.totalorder %s16, 0
    %p74 = por %p72, %p73
    %p75 = scmp.ne.s32.totalorder %s63, %s64
    %p76 = scmp.eq.s32.totalorder %s17, 15
    %p77 = por %p75, %p76
    %p79 = scmp.ne.s32.totalorder %s64, %s78
    %p80 = scmp.eq.s32.totalorder %s17, 0
    %p81 = por %p79, %p80
    %s83 = sadd.s32 %s82, 1
    %p86 = scmp.eq.s32.totalorder %s11, 15
    %p87 = scmp.ne.s32.totalorder %s82, %s84
    %p88 = scmp.eq.s32.totalorder %s11, 0
    %p89 = por %p87, %p88
    %p90 = scmp.ne.s32.totalorder %s82, %s84
    %p91 = scmp.eq.s32.totalorder %s16, 15
    %p92 = por %p90, %p91
    %p93 = scmp.ne.s32.totalorder %s84, %s85
    %p94 = scmp.eq.s32.totalorder %s16, 0
    %p95 = por %p93, %p94
    %p96 = scmp.ne.s32.totalorder %s84, %s85
    %p97 = scmp.eq.s32.totalorder %s17, 15
    %p98 = por %p96, %p97
    %p100 = scmp.ne.s32.totalorder %s85, %s99
    %p101 = scmp.eq.s32.totalorder %s17, 0
    %p102 = por %p100, %p101
    %s104 = sadd.s32 %s103, 1
    %p107 = scmp.eq.s32.totalorder %s11, 15
    %p108 = scmp.ne.s32.totalorder %s103, %s105
    %p109 = scmp.eq.s32.totalorder %s11, 0
    %p110 = por %p108, %p109
    %p111 = scmp.ne.s32.totalorder %s103, %s105
    %p112 = scmp.eq.s32.totalorder %s16, 15
    %p113 = por %p111, %p112
    %p114 = scmp.ne.s32.totalorder %s105, %s106
    %p115 = scmp.eq.s32.totalorder %s16, 0
    %p116 = por %p114, %p115
    %p117 = scmp.ne.s32.totalorder %s105, %s106
    %p118 = scmp.eq.s32.totalorder %s17, 15
    %p119 = por %p117, %p118
    %p121 = scmp.ne.s32.totalorder %s106, %s120
    %p122 = scmp.eq.s32.totalorder %s17, 0
    %p123 = por %p121, %p122
    %s125 = sadd.s32 %s124, 1
    %p128 = scmp.eq.s32.totalorder %s11, 15
    %p129 = scmp.ne.s32.totalorder %s124, %s126
    %p130 = scmp.eq.s32.totalorder %s11, 0
    %p131 = por %p129, %p130
    %p132 = scmp.ne.s32.totalorder %s124, %s126
    %p133 = scmp.eq.s32.totalorder %s16, 15
    %p134 = por %p132, %p133
    %p135 = scmp.ne.s32.totalorder %s126, %s127
    %p136 = scmp.eq.s32.totalorder %s16, 0
    %p137 = por %p135, %p136
    %p138 = scmp.ne.s32.totalorder %s126, %s127
    %p139 = scmp.eq.s32.totalorder %s17, 15
    %p140 = por %p138, %p139
    %p142 = scmp.ne.s32.totalorder %s127, %s141
    %p143 = scmp.eq.s32.totalorder %s17, 0
    %p144 = por %p142, %p143
    %s145 = smul.u32 %s18, 8
    %s146 = sadd.s32 %s145, %s19
    %s147 = smul.u32 %s30, 8
    %s148 = sadd.s32 %s147, %s26
    %s149 = ssub.s32 %s146, %s148
    %p150 = scmp.eq.s32.totalorder %s149, 0
    %s152 = sadd.s32 %s151, 1
    %s153 = scalar_select %p150, %s151, %s152
    %p156 = pneg %p150
    %p157 = scmp.eq.s32.totalorder %s11, 15
    %p158 = por %p156, %p157
    %p159 = scmp.ne.s32.totalorder %s151, %s154
    %p160 = scmp.eq.s32.totalorder %s11, 0
    %p161 = por %p159, %p160
    %p162 = scmp.ne.s32.totalorder %s151, %s154
    %p163 = scmp.eq.s32.totalorder %s16, 15
    %p164 = por %p162, %p163
    %p165 = scmp.ne.s32.totalorder %s154, %s155
    %p166 = scmp.eq.s32.totalorder %s16, 0
    %p167 = por %p165, %p166
    %p168 = scmp.ne.s32.totalorder %s154, %s155
    %p169 = scmp.eq.s32.totalorder %s17, 15
    %p170 = por %p168, %p169
    %p172 = scmp.ne.s32.totalorder %s155, %s171
    %p173 = scmp.eq.s32.totalorder %s17, 0
    %p174 = por %p172, %p173
    %p175 = scmp.le.s32.totalorder 1, %s11
    %p176 = scmp.lt.s32.totalorder %s11, 17
    %p177 = pnand %p175, %p176
    %p178 = pneg %p177
    // Predicated region
    $region9: #{densenet_forward.7} parent=5 // pred_check
      _
    $region10: #{densenet_forward.7} parent=5 // pred_check_branch
      %180 = sbr.rel (%p177) target = $region12
    $region11: #{densenet_forward.7} parent=5 // pred_region
      %s181 = ssub.s32 %s11, 1
      // Predicated region
      $region13: #{densenet_forward.7} parent=11 // pred_check
        %p182 = pneg %p74
      $region14: #{densenet_forward.7} parent=11 // pred_check_branch
        %184 = sbr.rel (%p182) target = $region16
      $region15: #{densenet_forward.7} parent=11 // pred_region
        _
      $region16: #{densenet_forward.7} parent=11 // pred_fallthru
        _
      // Predicated region
      $region17: #{densenet_forward.7} parent=11 // pred_check
        %p185 = pneg %p95
      $region18: #{densenet_forward.7} parent=11 // pred_check_branch
        %187 = sbr.rel (%p185) target = $region20
      $region19: #{densenet_forward.7} parent=11 // pred_region
        _
      $region20: #{densenet_forward.7} parent=11 // pred_fallthru
        _
      // Predicated region
      $region21: #{densenet_forward.7} parent=11 // pred_check
        %p188 = pneg %p116
      $region22: #{densenet_forward.7} parent=11 // pred_check_branch
        %190 = sbr.rel (%p188) target = $region24
      $region23: #{densenet_forward.7} parent=11 // pred_region
        _
      $region24: #{densenet_forward.7} parent=11 // pred_fallthru
        _
      // Predicated region
      $region25: #{densenet_forward.7} parent=11 // pred_check
        %p191 = pneg %p137
      $region26: #{densenet_forward.7} parent=11 // pred_check_branch
        %193 = sbr.rel (%p191) target = $region28
      $region27: #{densenet_forward.7} parent=11 // pred_region
        _
      $region28: #{densenet_forward.7} parent=11 // pred_fallthru
        _
    $region12: #{densenet_forward.7} parent=5 // pred_fallthru
      _
    %p194 = scmp.lt.s32.totalorder %s11, 16
    // Predicated region
    $region29: #{densenet_forward.7} parent=5 // pred_check
      %p195 = pneg %p194
    $region30: #{densenet_forward.7} parent=5 // pred_check_branch
      %197 = sbr.rel (%p195) target = $region32
    $region31: #{densenet_forward.7} parent=5 // pred_region
      // Predicated region
      $region33: #{densenet_forward.7} parent=31 // pred_check
        %p198 = pneg %p47
      $region34: #{densenet_forward.7} parent=31 // pred_check_branch
        %200 = sbr.rel (%p198) target = $region36
      $region35: #{densenet_forward.7} parent=31 // pred_region
        %s201 = smul.u32 %s18, 8
        %s202 = sadd.s32 %s201, %s19
        %s203 = smul.u32 4, %s202
        %p204 = scmp.lt.s32.totalorder %s203, 63
        %s205 = scalar_select %p204, %s203, 63
        %s206 = smul.addr %s205, 4
        %s207 = scalar_lea.vmem %s0, %s206
        %s208 = smul.u32 %s18, 8
        %s209 = sadd.s32 %s208, %s19
        %s210 = smul.u32 4, %s209
      $region36: #{densenet_forward.7} parent=31 // pred_fallthru
        _
    $region32: #{densenet_forward.7} parent=5 // pred_fallthru
      _
    %p211 = scmp.le.s32.totalorder 1, %s11
    %p212 = scmp.lt.s32.totalorder %s11, 17
    %p213 = pnand %p211, %p212
    %p214 = pneg %p213
    // Predicated region
    $region37: #{densenet_forward.7} parent=5 // pred_check
      _
    $region38: #{densenet_forward.7} parent=5 // pred_check_branch
      %216 = sbr.rel (%p213) target = $region40
    $region39: #{densenet_forward.7} parent=5 // pred_region
      %s217 = ssub.s32 %s11, 1
      %s218 = smul.u32 %s20, 8
      %s219 = sadd.s32 %s218, %s21
      %s220 = smul.u32 4, %s219
      %p221 = scmp.lt.s32.totalorder %s220, 63
      %s222 = scalar_select %p221, %s220, 63
      %s223 = smul.addr %s222, 4
      %s224 = scalar_lea.vmem %s0, %s223
      %p225 = pneg %p53
      %p226 = pneg %p50
      %p227 = pneg %p74
      %p228 = pneg %p71
      %p229 = pneg %p95
      %p230 = pneg %p92
      %p231 = pneg %p116
      %p232 = pneg %p113
      %p233 = pneg %p137
      %p234 = pneg %p134
      %p235 = pneg %p167
      %p236 = pneg %p164
      %s237 = smul.u32 %s20, 8
      %s238 = sadd.s32 %s237, %s21
      %p239 = scmp.lt.s32.totalorder %s238, 15
      %s240 = scalar_select %p239, %s238, 15
      %s241 = smul.addr %s240, 8
      %s242 = scalar_lea.vmem %s5, %s241
      %s243 = smul.u32 %s20, 8
      %s244 = sadd.s32 %s243, %s21
      %s245 = smul.u32 4, %s244
      %p246 = scmp.lt.s32.totalorder %s245, 63
      %s247 = scalar_select %p246, %s245, 63
      %s248 = smul.addr %s247, 4
      %s249 = scalar_lea.vmem %s0, %s248
      %s250 = smul.u32 %s20, 8
      %s251 = sadd.s32 %s250, %s21
      %s252 = smul.u32 4, %s251
      %s253 = smul.u32 %s20, 8
      %s254 = sadd.s32 %s253, %s21
      %p255 = scmp.lt.s32.totalorder %s254, 15
      %s256 = scalar_select %p255, %s254, 15
      %s257 = smul.addr %s256, 8
      %s258 = scalar_lea.vmem %s5, %s257
      %s259 = smul.u32 %s20, 8
      %s260 = sadd.s32 %s259, %s21
      %v262 = vld [vmem:[%s249] sm:$0xf]
      %v263 = vld [vmem:[%s249 + $0x4] sm:$0xf]
      %v264 = vld [vmem:[%s249 + $0x8] sm:$0xf]
      %v265 = vld [vmem:[%s249 + $0xc] sm:$0xf]
      %v266 = vunpack.c.l.bf16 %v262
      %v267 = vunpack.c.l.bf16 %v263
      %v268 = vunpack.c.l.bf16 %v264
      %v269 = vunpack.c.l.bf16 %v265
      %v270 = vld [vmem:[%s1] sm:$0x1]
      %v272 = vlaneseq
      %v273 = vshrl.u32 %v272, 7
      %v274 = vsub.s32 0, %v273
      %v275 = vrot.slane %v270, %v274
      %v277 = vmul.f32 %v266, %v275
      %v278 = vmul.f32 %v267, %v275
      %v279 = vmul.f32 %v268, %v275
      %v280 = vmul.f32 %v269, %v275
      %v281 = vld [vmem:[%s2] sm:$0x1]
      %v283 = vlaneseq
      %v284 = vshrl.u32 %v283, 7
      %v285 = vsub.s32 0, %v284
      %v286 = vrot.slane %v281, %v285
      %v288 = vadd.f32 %v277, %v286
      %v289 = vadd.f32 %v278, %v286
      %v290 = vadd.f32 %v279, %v286
      %v291 = vadd.f32 %v280, %v286
      %v292 = vmax.f32 %v288, 0.0
      %v293 = vmax.f32 %v289, 0.0
      %v294 = vmax.f32 %v290, 0.0
      %v295 = vmax.f32 %v291, 0.0
      %v296 = vld [vmem:[%s3] sm:$0xf]
      %v297 = vpack.c.bf16 %v293, %v292
      %v298 = vpack.c.bf16 %v295, %v294
      %vm299 = vcmask 261120
      %v301 = vsel %vm299, %v296, 0
      %303 = vmatprep.subr.bf16.mxu0 0
      %304 = vmatpush1.bf16.msra.mxu0 0
      %305 = vmatprep.subr.bf16.mxu0 0
      %306 = vmatpush1.bf16.msra.mxu0 0
      %307 = vmatprep.subr.bf16.mxu0 0
      %308 = vmatpush1.bf16.msra.mxu0 0
      %309 = vmatprep.subr.bf16.mxu0 0
      %310 = vmatpush1.bf16.msra.mxu0 0
      %311 = vmatprep.subr.bf16.mxu0 0
      %312 = vmatpush1.bf16.msra.mxu0 0
      %313 = vmatprep.subr.bf16.mxu0 0
      %314 = vmatpush1.bf16.msra.mxu0 0
      %315 = vmatprep.subr.bf16.mxu0 0
      %316 = vmatpush1.bf16.msra.mxu0 %v298
      %317 = vmatprep.subr.bf16.mxu0 0
      %318 = vmatpush1.bf16.msra.mxu0 %v297
      %319 = vmatprep.subr.bf16.mxu0 0
      %320 = vmatpush2.bf16.msra.mxu0 0
      %321 = vmatprep.subr.bf16.mxu0 0
      %322 = vmatpush2.bf16.msra.mxu0 0
      %323 = vmatprep.subr.bf16.mxu0 0
      %324 = vmatpush2.bf16.msra.mxu0 0
      %325 = vmatprep.subr.bf16.mxu0 0
      %326 = vmatpush2.bf16.msra.mxu0 0
      %327 = vmatprep.subr.bf16.mxu0 0
      %328 = vmatpush2.bf16.msra.mxu0 0
      %329 = vmatprep.subr.bf16.mxu0 0
      %330 = vmatpush2.bf16.msra.mxu0 0
      %331 = vmatprep.subr.bf16.mxu0 0
      %332 = vmatpush2.bf16.msra.mxu0 0
      %333 = vmatprep.subr.bf16.mxu0 0
      %334 = vmatpush2.bf16.msra.mxu0 0
      %335 = vmatprep.mubr.bf16.mxu0 0
      %336 = vmatmul.mubr.bf16.gmra.mxu0 %v301
      %v337 = vpop.f32.mrf.mxu0
      %v338 = vadd.f32 0.0, %v337
      %v339 = vpop.f32.mrf.mxu0
      %v340 = vpop.f32.mrf.mxu0
      %v341 = vpop.f32.mrf.mxu0
      %342 = vdwg.mxu0
      %v343 = vpack.c.bf16 %v338, %v338
      %v344 = vld [vmem:[%s4] sm:$0xf]
      %v345 = vld [vmem:[%s4 + $0x4] sm:$0xf]
      %v346 = vld [vmem:[%s4 + $0x8] sm:$0xf]
      %v347 = vld [vmem:[%s4 + $0xc] sm:$0xf]
      %v348 = vld [vmem:[%s4 + $0x10] sm:$0xf]
      %v349 = vld [vmem:[%s4 + $0x14] sm:$0xf]
      %v350 = vld [vmem:[%s4 + $0x18] sm:$0xf]
      %v351 = vld [vmem:[%s4 + $0x1c] sm:$0xf]
      %v352 = vld [vmem:[%s4 + $0x20] sm:$0xf]
      %v353 = vld [vmem:[%s4 + $0x24] sm:$0xf]
      %v354 = vld [vmem:[%s4 + $0x28] sm:$0xf]
      %v355 = vld [vmem:[%s4 + $0x2c] sm:$0xf]
      %v356 = vld [vmem:[%s4 + $0x30] sm:$0xf]
      %v357 = vld [vmem:[%s4 + $0x34] sm:$0xf]
      %v358 = vld [vmem:[%s4 + $0x38] sm:$0xf]
      %v359 = vld [vmem:[%s4 + $0x3c] sm:$0xf]
      %v376 = vunpack.c.l.b16 %v344
      %v377 = vunpack.c.l.b16 %v345
      %v378 = vunpack.c.l.b16 %v346
      %v379 = vunpack.c.l.b16 %v347
      %v380 = vunpack.c.l.b16 %v348
      %v381 = vunpack.c.l.b16 %v349
      %v382 = vunpack.c.l.b16 %v350
      %v383 = vunpack.c.l.b16 %v351
      %v384 = vunpack.c.l.b16 %v352
      %v385 = vunpack.c.l.b16 %v353
      %v386 = vunpack.c.l.b16 %v354
      %v387 = vunpack.c.l.b16 %v355
      %v388 = vunpack.c.l.b16 %v356
      %v389 = vunpack.c.l.b16 %v357
      %v390 = vunpack.c.l.b16 %v358
      %v391 = vunpack.c.l.b16 %v359
      %v392 = vpack.c.b16 %v377, %v376
      %v393 = vpack.c.b16 %v379, %v378
      %v394 = vpack.c.b16 %v381, %v380
      %v395 = vpack.c.b16 %v383, %v382
      %v396 = vpack.c.b16 %v385, %v384
      %v397 = vpack.c.b16 %v387, %v386
      %v398 = vpack.c.b16 %v389, %v388
      %v399 = vpack.c.b16 %v391, %v390
      %408 = vmatprep.subr.bf16.mxu0 0
      %409 = vmatpush1.bf16.msra.mxu0 %v399
      %410 = vmatprep.subr.bf16.mxu0 0
      %411 = vmatpush1.bf16.msra.mxu0 %v398
      %412 = vmatprep.subr.bf16.mxu0 0
      %413 = vmatpush1.bf16.msra.mxu0 %v397
      %414 = vmatprep.subr.bf16.mxu0 0
      %415 = vmatpush1.bf16.msra.mxu0 %v396
      %416 = vmatprep.subr.bf16.mxu0 0
      %417 = vmatpush1.bf16.msra.mxu0 %v395
      %418 = vmatprep.subr.bf16.mxu0 0
      %419 = vmatpush1.bf16.msra.mxu0 %v394
      %420 = vmatprep.subr.bf16.mxu0 0
      %421 = vmatpush1.bf16.msra.mxu0 %v393
      %422 = vmatprep.subr.bf16.mxu0 0
      %423 = vmatpush1.bf16.msra.mxu0 %v392
      %424 = vmatprep.subr.bf16.mxu0 0
      %425 = vmatpush2.bf16.msra.mxu0 0
      %426 = vmatprep.subr.bf16.mxu0 0
      %427 = vmatpush2.bf16.msra.mxu0 0
      %428 = vmatprep.subr.bf16.mxu0 0
      %429 = vmatpush2.bf16.msra.mxu0 0
      %430 = vmatprep.subr.bf16.mxu0 0
      %431 = vmatpush2.bf16.msra.mxu0 0
      %432 = vmatprep.subr.bf16.mxu0 0
      %433 = vmatpush2.bf16.msra.mxu0 0
      %434 = vmatprep.subr.bf16.mxu0 0
      %435 = vmatpush2.bf16.msra.mxu0 0
      %436 = vmatprep.subr.bf16.mxu0 0
      %437 = vmatpush2.bf16.msra.mxu0 0
      %438 = vmatprep.subr.bf16.mxu0 0
      %439 = vmatpush2.bf16.msra.mxu0 0
      %440 = vmatprep.mubr.bf16.mxu0 0
      %441 = vmatmul.mubr.bf16.gmra.mxu0 %v343
      %v442 = vpop.f32.mrf.mxu0
      %v443 = vadd.f32 0.0, %v442
      %v444 = vpop.f32.mrf.mxu0
      %v445 = vpop.f32.mrf.mxu0
      %v446 = vpop.f32.mrf.mxu0
      %447 = vdwg.mxu0
      %448 = vst [vmem:[%s258] sm:$0xff] %v443
      %s449 = smul.u32 %s20, 8
      %s450 = sadd.s32 %s449, %s21
      %p451 = scmp.lt.s32.totalorder %s450, 15
      %s452 = scalar_select %p451, %s450, 15
      %s453 = smul.addr %s452, 8
      %s454 = scalar_lea.vmem %s5, %s453
      // Predicated region
      $region41: #{densenet_forward.7} parent=39 // pred_check
        %p455 = pneg %p164
      $region42: #{densenet_forward.7} parent=39 // pred_check_branch
        %457 = sbr.rel (%p455) target = $region44
      $region43: #{densenet_forward.7} parent=39 // pred_region
        %s458 = smul.u32 %s20, 8
        %s459 = sadd.s32 %s458, %s21
      $region44: #{densenet_forward.7} parent=39 // pred_fallthru
        _
    $region40: #{densenet_forward.7} parent=5 // pred_fallthru
      _
    %p460 = scmp.le.s32.totalorder 2, %s11
    // Predicated region
    $region45: #{densenet_forward.7} parent=5 // pred_check
      %p461 = pneg %p460
    $region46: #{densenet_forward.7} parent=5 // pred_check_branch
      %463 = sbr.rel (%p461) target = $region48
    $region47: #{densenet_forward.7} parent=5 // pred_region
      %s464 = ssub.s32 %s11, 2
      // Predicated region
      $region49: #{densenet_forward.7} parent=47 // pred_check
        %p465 = pneg %p170
      $region50: #{densenet_forward.7} parent=47 // pred_check_branch
        %467 = sbr.rel (%p465) target = $region52
      $region51: #{densenet_forward.7} parent=47 // pred_region
        %s468 = smul.u32 %s22, 8
        %s469 = sadd.s32 %s468, %s23
        %p470 = scmp.lt.s32.totalorder %s469, 15
        %s471 = scalar_select %p470, %s469, 15
        %s472 = smul.addr %s471, 8
        %s473 = scalar_lea.vmem %s5, %s472
      $region52: #{densenet_forward.7} parent=47 // pred_fallthru
        _
    $region48: #{densenet_forward.7} parent=5 // pred_fallthru
      _
  $region6: #{densenet_forward.7} parent=0 // loop_footer
    %s15 = sadd.s32 1, %s11
  $region7: #{densenet_forward.7} parent=0 // loop_footer_branch
    %10 = sbr.rel target = $region3
  $region8: #{densenet_forward.7} parent=0 // loop_exit
    _

// kernel: densenet_forward.4
$region0: #{densenet_forward.4}
  #allocation0 [shape = 'u32[]', space=smem, size = 0x4, offset = 0x4, fixed_abs, tag = 'smem constant byte address 0x4 - core index']
  #allocation1 [shape = 'u32[144,128]{1,0:T(1,128)}', space=vmem, size = 0x12000, scoped, tag = 'internal scratch']
  #allocation2 [shape = 'bf16[304,128]{1,0:T(8,128)(2,1)}', space=vmem, size = 0x13000, scoped, tag = 'scratch operand']
  #allocation3 [shape = 'bf16[304,128]{1,0:T(8,128)(2,1)}', space=vmem, size = 0x13000, scoped, tag = 'scratch operand']
  #allocation4 [shape = 'bf16[304,128]{1,0:T(8,128)(2,1)}', space=vmem, size = 0x13000, scoped, tag = 'scratch operand']
  #allocation5 [shape = 'bf16[256,1152]{1,0:T(8,128)(2,1)}', space=vmem, size = 0x90000, scoped, tag = 'scratch operand']
  %s0 = inlined_call_operand.vmem [shape: bf16[512,128], index: 0, kind: input, shape index: {}, may-alias: {0,9}]
  %s1 = inlined_call_operand.vmem [shape: f32[1,128], index: 1, kind: input, shape index: {}]
  %s2 = inlined_call_operand.vmem [shape: f32[1,128], index: 2, kind: input, shape index: {}]
  %s3 = inlined_call_operand.vmem [shape: bf16[128,128], index: 3, kind: input, shape index: {}]
  %s4 = inlined_call_operand.vmem [shape: f32[1,128], index: 4, kind: input, shape index: {}]
  %s5 = inlined_call_operand.vmem [shape: f32[1,128], index: 5, kind: input, shape index: {}]
  %s6 = inlined_call_operand.vmem [shape: bf16[1152,128], index: 6, kind: input, shape index: {}]
  %s7 = inlined_call_operand.vmem [shape: bf16[256,1], index: 7, kind: input, shape index: {}]
  %s8 = inlined_call_operand.vmem [shape: bf16[256,1], index: 8, kind: input, shape index: {}]
  %s9 = inlined_call_operand.vmem [shape: bf16[512,128], index: 9, kind: output, shape index: {}, may-alias: {0,9}]
  %s10 = sld [smem:[#allocation0]]
  $region69: #{densenet_forward.4} parent=0
    _
  %s12 = ssub.s32 1, %s10
  %s13 = scalar_select 0, %s12, %s10
  loop: start=0, step=1, limit=4
  $region2: #{densenet_forward.4} parent=0 // loop_pre_header
    _
  $region3: #{densenet_forward.4} parent=0 // loop_header
    %s15 = sphi 0, %s19
    %p16 = scmp.ge.s32.totalorder %s15, 4
    %s25 = sphi 0, %s27
    %s28 = sphi 0, %s25
    %s29 = sphi 0, %s28
    %s45 = sphi 0, %s29
    %s49 = sphi 0, %s49
    %s51 = sphi 0, %s49
    %s52 = sphi 0, %s51
    %s66 = sphi 0, %s52
    %s70 = sphi 0, %s70
    %s72 = sphi 0, %s70
    %s73 = sphi 0, %s72
    %s87 = sphi 0, %s73
    %s91 = sphi 0, %s91
    %s93 = sphi 0, %s91
    %s94 = sphi 0, %s93
    %s108 = sphi 0, %s94
    %s112 = sphi 0, %s112
    %s114 = sphi 0, %s112
    %s115 = sphi 0, %s114
    %s129 = sphi 0, %s115
    %s133 = sphi 0, %s133
    %s135 = sphi 0, %s133
    %s136 = sphi 0, %s135
    %s150 = sphi 0, %s136
    %s154 = sphi 0, %s154
    %s156 = sphi 0, %s154
    %s157 = sphi 0, %s156
    %s171 = sphi 0, %s157
    %s175 = sphi 0, %s175
    %s177 = sphi 0, %s175
    %s178 = sphi 0, %s177
    %s192 = sphi 0, %s178
    %s196 = sphi 0, %s196
    %s198 = sphi 0, %s196
    %s199 = sphi 0, %s198
    %s213 = sphi 0, %s199
    %s219 = sphi 0, %s221
    %s222 = sphi 0, %s219
    %s223 = sphi 0, %s222
    %s239 = sphi 0, %s223
  $region4: #{densenet_forward.4} parent=0 // loop_header_branch
    %18 = sbr.rel (%p16) target = $region8
  $region5: #{densenet_forward.4} parent=0 // loop_body
    %s20 = ssub.s32 %s15, 1
    %s21 = ssub.s32 %s15, 2
    %s22 = sadd.s32 %s15, 1
    %s23 = ssub.s32 %s15, %s22
    %p24 = scmp.eq.s32.totalorder %s23, 0
    %s26 = sadd.s32 %s25, 1
    %s27 = scalar_select %p24, %s25, %s26
    %p30 = pneg %p24
    %p31 = scmp.eq.s32.totalorder %s15, 1
    %p32 = por %p30, %p31
    %p33 = scmp.ne.s32.totalorder %s25, %s28
    %p34 = scmp.eq.s32.totalorder %s15, 0
    %p35 = por %p33, %p34
    %p36 = scmp.ne.s32.totalorder %s25, %s28
    %p37 = scmp.eq.s32.totalorder %s20, 1
    %p38 = por %p36, %p37
    %p39 = scmp.ne.s32.totalorder %s28, %s29
    %p40 = scmp.eq.s32.totalorder %s20, 0
    %p41 = por %p39, %p40
    %p42 = scmp.ne.s32.totalorder %s28, %s29
    %p43 = scmp.eq.s32.totalorder %s21, 1
    %p44 = por %p42, %p43
    %p46 = scmp.ne.s32.totalorder %s29, %s45
    %p47 = scmp.eq.s32.totalorder %s21, 0
    %p48 = por %p46, %p47
    %s50 = sadd.s32 %s49, 1
    %p53 = scmp.eq.s32.totalorder %s15, 1
    %p54 = scmp.ne.s32.totalorder %s49, %s51
    %p55 = scmp.eq.s32.totalorder %s15, 0
    %p56 = por %p54, %p55
    %p57 = scmp.ne.s32.totalorder %s49, %s51
    %p58 = scmp.eq.s32.totalorder %s20, 1
    %p59 = por %p57, %p58
    %p60 = scmp.ne.s32.totalorder %s51, %s52
    %p61 = scmp.eq.s32.totalorder %s20, 0
    %p62 = por %p60, %p61
    %p63 = scmp.ne.s32.totalorder %s51, %s52
    %p64 = scmp.eq.s32.totalorder %s21, 1
    %p65 = por %p63, %p64
    %p67 = scmp.ne.s32.totalorder %s52, %s66
    %p68 = scmp.eq.s32.totalorder %s21, 0
    %p69 = por %p67, %p68
    %s71 = sadd.s32 %s70, 1
    %p74 = scmp.eq.s32.totalorder %s15, 1
    %p75 = scmp.ne.s32.totalorder %s70, %s72
    %p76 = scmp.eq.s32.totalorder %s15, 0
    %p77 = por %p75, %p76
    %p78 = scmp.ne.s32.totalorder %s70, %s72
    %p79 = scmp.eq.s32.totalorder %s20, 1
    %p80 = por %p78, %p79
    %p81 = scmp.ne.s32.totalorder %s72, %s73
    %p82 = scmp.eq.s32.totalorder %s20, 0
    %p83 = por %p81, %p82
    %p84 = scmp.ne.s32.totalorder %s72, %s73
    %p85 = scmp.eq.s32.totalorder %s21, 1
    %p86 = por %p84, %p85
    %p88 = scmp.ne.s32.totalorder %s73, %s87
    %p89 = scmp.eq.s32.totalorder %s21, 0
    %p90 = por %p88, %p89
    %s92 = sadd.s32 %s91, 1
    %p95 = scmp.eq.s32.totalorder %s15, 1
    %p96 = scmp.ne.s32.totalorder %s91, %s93
    %p97 = scmp.eq.s32.totalorder %s15, 0
    %p98 = por %p96, %p97
    %p99 = scmp.ne.s32.totalorder %s91, %s93
    %p100 = scmp.eq.s32.totalorder %s20, 1
    %p101 = por %p99, %p100
    %p102 = scmp.ne.s32.totalorder %s93, %s94
    %p103 = scmp.eq.s32.totalorder %s20, 0
    %p104 = por %p102, %p103
    %p105 = scmp.ne.s32.totalorder %s93, %s94
    %p106 = scmp.eq.s32.totalorder %s21, 1
    %p107 = por %p105, %p106
    %p109 = scmp.ne.s32.totalorder %s94, %s108
    %p110 = scmp.eq.s32.totalorder %s21, 0
    %p111 = por %p109, %p110
    %s113 = sadd.s32 %s112, 1
    %p116 = scmp.eq.s32.totalorder %s15, 1
    %p117 = scmp.ne.s32.totalorder %s112, %s114
    %p118 = scmp.eq.s32.totalorder %s15, 0
    %p119 = por %p117, %p118
    %p120 = scmp.ne.s32.totalorder %s112, %s114
    %p121 = scmp.eq.s32.totalorder %s20, 1
    %p122 = por %p120, %p121
    %p123 = scmp.ne.s32.totalorder %s114, %s115
    %p124 = scmp.eq.s32.totalorder %s20, 0
    %p125 = por %p123, %p124
    %p126 = scmp.ne.s32.totalorder %s114, %s115
    %p127 = scmp.eq.s32.totalorder %s21, 1
    %p128 = por %p126, %p127
    %p130 = scmp.ne.s32.totalorder %s115, %s129
    %p131 = scmp.eq.s32.totalorder %s21, 0
    %p132 = por %p130, %p131
    %s134 = sadd.s32 %s133, 1
    %p137 = scmp.eq.s32.totalorder %s15, 1
    %p138 = scmp.ne.s32.totalorder %s133, %s135
    %p139 = scmp.eq.s32.totalorder %s15, 0
    %p140 = por %p138, %p139
    %p141 = scmp.ne.s32.totalorder %s133, %s135
    %p142 = scmp.eq.s32.totalorder %s20, 1
    %p143 = por %p141, %p142
    %p144 = scmp.ne.s32.totalorder %s135, %s136
    %p145 = scmp.eq.s32.totalorder %s20, 0
    %p146 = por %p144, %p145
    %p147 = scmp.ne.s32.totalorder %s135, %s136
    %p148 = scmp.eq.s32.totalorder %s21, 1
    %p149 = por %p147, %p148
    %p151 = scmp.ne.s32.totalorder %s136, %s150
    %p152 = scmp.eq.s32.totalorder %s21, 0
    %p153 = por %p151, %p152
    %s155 = sadd.s32 %s154, 1
    %p158 = scmp.eq.s32.totalorder %s15, 1
    %p159 = scmp.ne.s32.totalorder %s154, %s156
    %p160 = scmp.eq.s32.totalorder %s15, 0
    %p161 = por %p159, %p160
    %p162 = scmp.ne.s32.totalorder %s154, %s156
    %p163 = scmp.eq.s32.totalorder %s20, 1
    %p164 = por %p162, %p163
    %p165 = scmp.ne.s32.totalorder %s156, %s157
    %p166 = scmp.eq.s32.totalorder %s20, 0
    %p167 = por %p165, %p166
    %p168 = scmp.ne.s32.totalorder %s156, %s157
    %p169 = scmp.eq.s32.totalorder %s21, 1
    %p170 = por %p168, %p169
    %p172 = scmp.ne.s32.totalorder %s157, %s171
    %p173 = scmp.eq.s32.totalorder %s21, 0
    %p174 = por %p172, %p173
    %s176 = sadd.s32 %s175, 1
    %p179 = scmp.eq.s32.totalorder %s15, 1
    %p180 = scmp.ne.s32.totalorder %s175, %s177
    %p181 = scmp.eq.s32.totalorder %s15, 0
    %p182 = por %p180, %p181
    %p183 = scmp.ne.s32.totalorder %s175, %s177
    %p184 = scmp.eq.s32.totalorder %s20, 1
    %p185 = por %p183, %p184
    %p186 = scmp.ne.s32.totalorder %s177, %s178
    %p187 = scmp.eq.s32.totalorder %s20, 0
    %p188 = por %p186, %p187
    %p189 = scmp.ne.s32.totalorder %s177, %s178
    %p190 = scmp.eq.s32.totalorder %s21, 1
    %p191 = por %p189, %p190
    %p193 = scmp.ne.s32.totalorder %s178, %s192
    %p194 = scmp.eq.s32.totalorder %s21, 0
    %p195 = por %p193, %p194
    %s197 = sadd.s32 %s196, 1
    %p200 = scmp.eq.s32.totalorder %s15, 1
    %p201 = scmp.ne.s32.totalorder %s196, %s198
    %p202 = scmp.eq.s32.totalorder %s15, 0
    %p203 = por %p201, %p202
    %p204 = scmp.ne.s32.totalorder %s196, %s198
    %p205 = scmp.eq.s32.totalorder %s20, 1
    %p206 = por %p204, %p205
    %p207 = scmp.ne.s32.totalorder %s198, %s199
    %p208 = scmp.eq.s32.totalorder %s20, 0
    %p209 = por %p207, %p208
    %p210 = scmp.ne.s32.totalorder %s198, %s199
    %p211 = scmp.eq.s32.totalorder %s21, 1
    %p212 = por %p210, %p211
    %p214 = scmp.ne.s32.totalorder %s199, %s213
    %p215 = scmp.eq.s32.totalorder %s21, 0
    %p216 = por %p214, %p215
    %s217 = ssub.s32 %s15, %s22
    %p218 = scmp.eq.s32.totalorder %s217, 0
    %s220 = sadd.s32 %s219, 1
    %s221 = scalar_select %p218, %s219, %s220
    %p224 = pneg %p218
    %p225 = scmp.eq.s32.totalorder %s15, 1
    %p226 = por %p224, %p225
    %p227 = scmp.ne.s32.totalorder %s219, %s222
    %p228 = scmp.eq.s32.totalorder %s15, 0
    %p229 = por %p227, %p228
    %p230 = scmp.ne.s32.totalorder %s219, %s222
    %p231 = scmp.eq.s32.totalorder %s20, 1
    %p232 = por %p230, %p231
    %p233 = scmp.ne.s32.totalorder %s222, %s223
    %p234 = scmp.eq.s32.totalorder %s20, 0
    %p235 = por %p233, %p234
    %p236 = scmp.ne.s32.totalorder %s222, %s223
    %p237 = scmp.eq.s32.totalorder %s21, 1
    %p238 = por %p236, %p237
    %p240 = scmp.ne.s32.totalorder %s223, %s239
    %p241 = scmp.eq.s32.totalorder %s21, 0
    %p242 = por %p240, %p241
    %p243 = scmp.le.s32.totalorder 1, %s15
    %p244 = scmp.lt.s32.totalorder %s15, 3
    %p245 = pnand %p243, %p244
    %p246 = pneg %p245
    // Predicated region
    $region9: #{densenet_forward.4} parent=5 // pred_check
      _
    $region10: #{densenet_forward.4} parent=5 // pred_check_branch
      %248 = sbr.rel (%p245) target = $region12
    $region11: #{densenet_forward.4} parent=5 // pred_region
      %s249 = ssub.s32 %s15, 1
      // Predicated region
      $region13: #{densenet_forward.4} parent=11 // pred_check
        %p250 = pneg %p62
      $region14: #{densenet_forward.4} parent=11 // pred_check_branch
        %252 = sbr.rel (%p250) target = $region16
      $region15: #{densenet_forward.4} parent=11 // pred_region
        _
      $region16: #{densenet_forward.4} parent=11 // pred_fallthru
        _
      // Predicated region
      $region17: #{densenet_forward.4} parent=11 // pred_check
        %p253 = pneg %p83
      $region18: #{densenet_forward.4} parent=11 // pred_check_branch
        %255 = sbr.rel (%p253) target = $region20
      $region19: #{densenet_forward.4} parent=11 // pred_region
        _
      $region20: #{densenet_forward.4} parent=11 // pred_fallthru
        _
      // Predicated region
      $region21: #{densenet_forward.4} parent=11 // pred_check
        %p256 = pneg %p104
      $region22: #{densenet_forward.4} parent=11 // pred_check_branch
        %258 = sbr.rel (%p256) target = $region24
      $region23: #{densenet_forward.4} parent=11 // pred_region
        _
      $region24: #{densenet_forward.4} parent=11 // pred_fallthru
        _
      // Predicated region
      $region25: #{densenet_forward.4} parent=11 // pred_check
        %p259 = pneg %p125
      $region26: #{densenet_forward.4} parent=11 // pred_check_branch
        %261 = sbr.rel (%p259) target = $region28
      $region27: #{densenet_forward.4} parent=11 // pred_region
        _
      $region28: #{densenet_forward.4} parent=11 // pred_fallthru
        _
      // Predicated region
      $region29: #{densenet_forward.4} parent=11 // pred_check
        %p262 = pneg %p146
      $region30: #{densenet_forward.4} parent=11 // pred_check_branch
        %264 = sbr.rel (%p262) target = $region32
      $region31: #{densenet_forward.4} parent=11 // pred_region
        _
      $region32: #{densenet_forward.4} parent=11 // pred_fallthru
        _
      // Predicated region
      $region33: #{densenet_forward.4} parent=11 // pred_check
        %p265 = pneg %p167
      $region34: #{densenet_forward.4} parent=11 // pred_check_branch
        %267 = sbr.rel (%p265) target = $region36
      $region35: #{densenet_forward.4} parent=11 // pred_region
        _
      $region36: #{densenet_forward.4} parent=11 // pred_fallthru
        _
      // Predicated region
      $region37: #{densenet_forward.4} parent=11 // pred_check
        %p268 = pneg %p188
      $region38: #{densenet_forward.4} parent=11 // pred_check_branch
        %270 = sbr.rel (%p268) target = $region40
      $region39: #{densenet_forward.4} parent=11 // pred_region
        _
      $region40: #{densenet_forward.4} parent=11 // pred_fallthru
        _
      // Predicated region
      $region41: #{densenet_forward.4} parent=11 // pred_check
        %p271 = pneg %p209
      $region42: #{densenet_forward.4} parent=11 // pred_check_branch
        %273 = sbr.rel (%p271) target = $region44
      $region43: #{densenet_forward.4} parent=11 // pred_region
        _
      $region44: #{densenet_forward.4} parent=11 // pred_fallthru
        _
    $region12: #{densenet_forward.4} parent=5 // pred_fallthru
      _
    %p274 = scmp.lt.s32.totalorder %s15, 2
    // Predicated region
    $region45: #{densenet_forward.4} parent=5 // pred_check
      %p275 = pneg %p274
    $region46: #{densenet_forward.4} parent=5 // pred_check_branch
      %277 = sbr.rel (%p275) target = $region48
    $region47: #{densenet_forward.4} parent=5 // pred_region
      // Predicated region
      $region49: #{densenet_forward.4} parent=47 // pred_check
        %p278 = pneg %p35
      $region50: #{densenet_forward.4} parent=47 // pred_check_branch
        %280 = sbr.rel (%p278) target = $region52
      $region51: #{densenet_forward.4} parent=47 // pred_region
        %s281 = smul.u32 32, %s15
        %p282 = scmp.lt.s32.totalorder %s281, 63
        %s283 = scalar_select %p282, %s281, 63
        %s284 = smul.addr %s283, 4
        %s285 = scalar_lea.vmem %s0, %s284
        %s286 = smul.u32 32, %s15
      $region52: #{densenet_forward.4} parent=47 // pred_fallthru
        _
    $region48: #{densenet_forward.4} parent=5 // pred_fallthru
      _
    %p287 = scmp.le.s32.totalorder 1, %s15
    %p288 = scmp.lt.s32.totalorder %s15, 3
    %p289 = pnand %p287, %p288
    %p290 = pneg %p289
    // Predicated region
    $region53: #{densenet_forward.4} parent=5 // pred_check
      _
    $region54: #{densenet_forward.4} parent=5 // pred_check_branch
      %292 = sbr.rel (%p289) target = $region56
    $region55: #{densenet_forward.4} parent=5 // pred_region
      %s293 = ssub.s32 %s15, 1
      %s294 = smul.u32 32, %s20
      %p295 = scmp.lt.s32.totalorder %s294, 63
      %s296 = scalar_select %p295, %s294, 63
      %s297 = smul.addr %s296, 4
      %s298 = scalar_lea.vmem %s0, %s297
      %p299 = pneg %p41
      %p300 = pneg %p38
      %p301 = pneg %p62
      %p302 = pneg %p59
      %p303 = pneg %p83
      %p304 = pneg %p80
      %p305 = pneg %p104
      %p306 = pneg %p101
      %p307 = pneg %p125
      %p308 = pneg %p122
      %p309 = pneg %p146
      %p310 = pneg %p143
      %p311 = pneg %p167
      %p312 = pneg %p164
      %p313 = pneg %p188
      %p314 = pneg %p185
      %p315 = pneg %p209
      %p316 = pneg %p206
      %p317 = pneg %p235
      %p318 = pneg %p232
      %s319 = smul.u32 32, %s20
      %p320 = scmp.lt.s32.totalorder %s319, 63
      %s321 = scalar_select %p320, %s319, 63
      %s322 = smul.addr %s321, 4
      %s323 = scalar_lea.vmem %s9, %s322
      %s324 = smul.u32 32, %s20
      %p325 = scmp.lt.s32.totalorder %s324, 63
      %s326 = scalar_select %p325, %s324, 63
      %s327 = smul.addr %s326, 4
      %s328 = scalar_lea.vmem %s0, %s327
      %s329 = smul.u32 32, %s20
      %s330 = smul.u32 32, %s20
      %p331 = scmp.lt.s32.totalorder %s330, 63
      %s332 = scalar_select %p331, %s330, 63
      %s333 = smul.addr %s332, 4
      %s334 = scalar_lea.vmem %s9, %s333
      %s335 = smul.u32 32, %s20
      %v337 = vld [vmem:[%s328] sm:$0xf]
      %v338 = vld [vmem:[%s328 + $0x4] sm:$0xf]
      %v339 = vld [vmem:[%s328 + $0x8] sm:$0xf]
      %v340 = vld [vmem:[%s328 + $0xc] sm:$0xf]
      %v341 = vld [vmem:[%s328 + $0x10] sm:$0xf]
      %v342 = vld [vmem:[%s328 + $0x14] sm:$0xf]
      %v343 = vld [vmem:[%s328 + $0x18] sm:$0xf]
      %v344 = vld [vmem:[%s328 + $0x1c] sm:$0xf]
      %v345 = vld [vmem:[%s328 + $0x20] sm:$0xf]
      %v346 = vld [vmem:[%s328 + $0x24] sm:$0xf]
      %v347 = vld [vmem:[%s328 + $0x28] sm:$0xf]
      %v348 = vld [vmem:[%s328 + $0x2c] sm:$0xf]
      %v349 = vld [vmem:[%s328 + $0x30] sm:$0xf]
      %v350 = vld [vmem:[%s328 + $0x34] sm:$0xf]
      %v351 = vld [vmem:[%s328 + $0x38] sm:$0xf]
      %v352 = vld [vmem:[%s328 + $0x3c] sm:$0xf]
      %v353 = vld [vmem:[%s328 + $0x40] sm:$0xf]
      %v354 = vld [vmem:[%s328 + $0x44] sm:$0xf]
      %v355 = vld [vmem:[%s328 + $0x48] sm:$0xf]
      %v356 = vld [vmem:[%s328 + $0x4c] sm:$0xf]
      %v357 = vld [vmem:[%s328 + $0x50] sm:$0xf]
      %v358 = vld [vmem:[%s328 + $0x54] sm:$0xf]
      %v359 = vld [vmem:[%s328 + $0x58] sm:$0xf]
      %v360 = vld [vmem:[%s328 + $0x5c] sm:$0xf]
      %v361 = vld [vmem:[%s328 + $0x60] sm:$0xf]
      %v362 = vld [vmem:[%s328 + $0x64] sm:$0xf]
      %v363 = vld [vmem:[%s328 + $0x68] sm:$0xf]
      %v364 = vld [vmem:[%s328 + $0x6c] sm:$0xf]
      %v365 = vld [vmem:[%s328 + $0x70] sm:$0xf]
      %v366 = vld [vmem:[%s328 + $0x74] sm:$0xf]
      %v367 = vld [vmem:[%s328 + $0x78] sm:$0xf]
      %v368 = vld [vmem:[%s328 + $0x7c] sm:$0xf]
      %v369 = vunpack.c.l.bf16 %v337
      %v370 = vunpack.c.l.bf16 %v338
      %v371 = vunpack.c.l.bf16 %v339
      %v372 = vunpack.c.l.bf16 %v340
      %v373 = vunpack.c.l.bf16 %v341
      %v374 = vunpack.c.l.bf16 %v342
      %v375 = vunpack.c.l.bf16 %v343
      %v376 = vunpack.c.l.bf16 %v344
      %v377 = vunpack.c.l.bf16 %v345
      %v378 = vunpack.c.l.bf16 %v346
      %v379 = vunpack.c.l.bf16 %v347
      %v380 = vunpack.c.l.bf16 %v348
      %v381 = vunpack.c.l.bf16 %v349
      %v382 = vunpack.c.l.bf16 %v350
      %v383 = vunpack.c.l.bf16 %v351
      %v384 = vunpack.c.l.bf16 %v352
      %v385 = vunpack.c.l.bf16 %v353
      %v386 = vunpack.c.l.bf16 %v354
      %v387 = vunpack.c.l.bf16 %v355
      %v388 = vunpack.c.l.bf16 %v356
      %v389 = vunpack.c.l.bf16 %v357
      %v390 = vunpack.c.l.bf16 %v358
      %v391 = vunpack.c.l.bf16 %v359
      %v392 = vunpack.c.l.bf16 %v360
      %v393 = vunpack.c.l.bf16 %v361
      %v394 = vunpack.c.l.bf16 %v362
      %v395 = vunpack.c.l.bf16 %v363
      %v396 = vunpack.c.l.bf16 %v364
      %v397 = vunpack.c.l.bf16 %v365
      %v398 = vunpack.c.l.bf16 %v366
      %v399 = vunpack.c.l.bf16 %v367
      %v400 = vunpack.c.l.bf16 %v368
      %v401 = vld [vmem:[%s1] sm:$0x1]
      %v403 = vlaneseq
      %v404 = vshrl.u32 %v403, 7
      %v405 = vsub.s32 0, %v404
      %v406 = vrot.slane %v401, %v405
      %v408 = vmul.f32 %v369, %v406
      %v409 = vmul.f32 %v370, %v406
      %v410 = vmul.f32 %v371, %v406
      %v411 = vmul.f32 %v372, %v406
      %v412 = vmul.f32 %v373, %v406
      %v413 = vmul.f32 %v374, %v406
      %v414 = vmul.f32 %v375, %v406
      %v415 = vmul.f32 %v376, %v406
      %v416 = vmul.f32 %v377, %v406
      %v417 = vmul.f32 %v378, %v406
      %v418 = vmul.f32 %v379, %v406
      %v419 = vmul.f32 %v380, %v406
      %v420 = vmul.f32 %v381, %v406
      %v421 = vmul.f32 %v382, %v406
      %v422 = vmul.f32 %v383, %v406
      %v423 = vmul.f32 %v384, %v406
      %v424 = vmul.f32 %v385, %v406
      %v425 = vmul.f32 %v386, %v406
      %v426 = vmul.f32 %v387, %v406
      %v427 = vmul.f32 %v388, %v406
      %v428 = vmul.f32 %v389, %v406
      %v429 = vmul.f32 %v390, %v406
      %v430 = vmul.f32 %v391, %v406
      %v431 = vmul.f32 %v392, %v406
      %v432 = vmul.f32 %v393, %v406
      %v433 = vmul.f32 %v394, %v406
      %v434 = vmul.f32 %v395, %v406
      %v435 = vmul.f32 %v396, %v406
      %v436 = vmul.f32 %v397, %v406
      %v437 = vmul.f32 %v398, %v406
      %v438 = vmul.f32 %v399, %v406
      %v439 = vmul.f32 %v400, %v406
      %v440 = vld [vmem:[%s2] sm:$0x1]
      %v442 = vlaneseq
      %v443 = vshrl.u32 %v442, 7
      %v444 = vsub.s32 0, %v443
      %v445 = vrot.slane %v440, %v444
      %v447 = vadd.f32 %v408, %v445
      %v448 = vadd.f32 %v409, %v445
      %v449 = vadd.f32 %v410, %v445
      %v450 = vadd.f32 %v411, %v445
      %v451 = vadd.f32 %v412, %v445
      %v452 = vadd.f32 %v413, %v445
      %v453 = vadd.f32 %v414, %v445
      %v454 = vadd.f32 %v415, %v445
      %v455 = vadd.f32 %v416, %v445
      %v456 = vadd.f32 %v417, %v445
      %v457 = vadd.f32 %v418, %v445
      %v458 = vadd.f32 %v419, %v445
      %v459 = vadd.f32 %v420, %v445
      %v460 = vadd.f32 %v421, %v445
      %v461 = vadd.f32 %v422, %v445
      %v462 = vadd.f32 %v423, %v445
      %v463 = vadd.f32 %v424, %v445
      %v464 = vadd.f32 %v425, %v445
      %v465 = vadd.f32 %v426, %v445
      %v466 = vadd.f32 %v427, %v445
      %v467 = vadd.f32 %v428, %v445
      %v468 = vadd.f32 %v429, %v445
      %v469 = vadd.f32 %v430, %v445
      %v470 = vadd.f32 %v431, %v445
      %v471 = vadd.f32 %v432, %v445
      %v472 = vadd.f32 %v433, %v445
      %v473 = vadd.f32 %v434, %v445
      %v474 = vadd.f32 %v435, %v445
      %v475 = vadd.f32 %v436, %v445
      %v476 = vadd.f32 %v437, %v445
      %v477 = vadd.f32 %v438, %v445
      %v478 = vadd.f32 %v439, %v445
      %v479 = vmax.f32 %v447, 0.0
      %v480 = vmax.f32 %v448, 0.0
      %v481 = vmax.f32 %v449, 0.0
      %v482 = vmax.f32 %v450, 0.0
      %v483 = vmax.f32 %v451, 0.0
      %v484 = vmax.f32 %v452, 0.0
      %v485 = vmax.f32 %v453, 0.0
      %v486 = vmax.f32 %v454, 0.0
      %v487 = vmax.f32 %v455, 0.0
      %v488 = vmax.f32 %v456, 0.0
      %v489 = vmax.f32 %v457, 0.0
      %v490 = vmax.f32 %v458, 0.0
      %v491 = vmax.f32 %v459, 0.0
      %v492 = vmax.f32 %v460, 0.0
      %v493 = vmax.f32 %v461, 0.0
      %v494 = vmax.f32 %v462, 0.0
      %v495 = vmax.f32 %v463, 0.0
      %v496 = vmax.f32 %v464, 0.0
      %v497 = vmax.f32 %v465, 0.0
      %v498 = vmax.f32 %v466, 0.0
      %v499 = vmax.f32 %v467, 0.0
      %v500 = vmax.f32 %v468, 0.0
      %v501 = vmax.f32 %v469, 0.0
      %v502 = vmax.f32 %v470, 0.0
      %v503 = vmax.f32 %v471, 0.0
      %v504 = vmax.f32 %v472, 0.0
      %v505 = vmax.f32 %v473, 0.0
      %v506 = vmax.f32 %v474, 0.0
      %v507 = vmax.f32 %v475, 0.0
      %v508 = vmax.f32 %v476, 0.0
      %v509 = vmax.f32 %v477, 0.0
      %v510 = vmax.f32 %v478, 0.0
      %v511 = vpack.c.bf16 %v480, %v479
      %v512 = vpack.c.bf16 %v482, %v481
      %v513 = vpack.c.bf16 %v484, %v483
      %v514 = vpack.c.bf16 %v486, %v485
      %v515 = vpack.c.bf16 %v488, %v487
      %v516 = vpack.c.bf16 %v490, %v489
      %v517 = vpack.c.bf16 %v492, %v491
      %v518 = vpack.c.bf16 %v494, %v493
      %v519 = vpack.c.bf16 %v496, %v495
      %v520 = vpack.c.bf16 %v498, %v497
      %v521 = vpack.c.bf16 %v500, %v499
      %v522 = vpack.c.bf16 %v502, %v501
      %v523 = vpack.c.bf16 %v504, %v503
      %v524 = vpack.c.bf16 %v506, %v505
      %v525 = vpack.c.bf16 %v508, %v507
      %v526 = vpack.c.bf16 %v510, %v509
      %v527 = vld [vmem:[%s3] sm:$0xf]
      %v528 = vld [vmem:[%s3 + $0x4] sm:$0xf]
      %v529 = vld [vmem:[%s3 + $0x8] sm:$0xf]
      %v530 = vld [vmem:[%s3 + $0xc] sm:$0xf]
      %v531 = vld [vmem:[%s3 + $0x10] sm:$0xf]
      %v532 = vld [vmem:[%s3 + $0x14] sm:$0xf]
      %v533 = vld [vmem:[%s3 + $0x18] sm:$0xf]
      %v534 = vld [vmem:[%s3 + $0x1c] sm:$0xf]
      %v535 = vld [vmem:[%s3 + $0x20] sm:$0xf]
      %v536 = vld [vmem:[%s3 + $0x24] sm:$0xf]
      %v537 = vld [vmem:[%s3 + $0x28] sm:$0xf]
      %v538 = vld [vmem:[%s3 + $0x2c] sm:$0xf]
      %v539 = vld [vmem:[%s3 + $0x30] sm:$0xf]
      %v540 = vld [vmem:[%s3 + $0x34] sm:$0xf]
      %v541 = vld [vmem:[%s3 + $0x38] sm:$0xf]
      %v542 = vld [vmem:[%s3 + $0x3c] sm:$0xf]
      %v559 = vunpack.c.l.b16 %v527
      %v560 = vunpack.c.l.b16 %v528
      %v561 = vunpack.c.l.b16 %v529
      %v562 = vunpack.c.l.b16 %v530
      %v563 = vunpack.c.l.b16 %v531
      %v564 = vunpack.c.l.b16 %v532
      %v565 = vunpack.c.l.b16 %v533
      %v566 = vunpack.c.l.b16 %v534
      %v567 = vunpack.c.l.b16 %v535
      %v568 = vunpack.c.l.b16 %v536
      %v569 = vunpack.c.l.b16 %v537
      %v570 = vunpack.c.l.b16 %v538
      %v571 = vunpack.c.l.b16 %v539
      %v572 = vunpack.c.l.b16 %v540
      %v573 = vunpack.c.l.b16 %v541
      %v574 = vunpack.c.l.b16 %v542
      %v575 = vpack.c.b16 %v560, %v559
      %v576 = vpack.c.b16 %v562, %v561
      %v577 = vpack.c.b16 %v564, %v563
      %v578 = vpack.c.b16 %v566, %v565
      %v579 = vpack.c.b16 %v568, %v567
      %v580 = vpack.c.b16 %v570, %v569
      %v581 = vpack.c.b16 %v572, %v571
      %v582 = vpack.c.b16 %v574, %v573
      %591 = vmatprep.subr.bf16.mxu0 0
      %592 = vmatpush1.bf16.msra.mxu0 %v582
      %593 = vmatprep.subr.bf16.mxu0 0
      %594 = vmatpush1.bf16.msra.mxu0 %v581
      %595 = vmatprep.subr.bf16.mxu0 0
      %596 = vmatpush1.bf16.msra.mxu0 %v580
      %597 = vmatprep.subr.bf16.mxu0 0
      %598 = vmatpush1.bf16.msra.mxu0 %v579
      %599 = vmatprep.subr.bf16.mxu0 0
      %600 = vmatpush1.bf16.msra.mxu0 %v578
      %601 = vmatprep.subr.bf16.mxu0 0
      %602 = vmatpush1.bf16.msra.mxu0 %v577
      %603 = vmatprep.subr.bf16.mxu0 0
      %604 = vmatpush1.bf16.msra.mxu0 %v576
      %605 = vmatprep.subr.bf16.mxu0 0
      %606 = vmatpush1.bf16.msra.mxu0 %v575
      %607 = vmatprep.subr.bf16.mxu0 0
      %608 = vmatpush2.bf16.msra.mxu0 0
      %609 = vmatprep.subr.bf16.mxu0 0
      %610 = vmatpush2.bf16.msra.mxu0 0
      %611 = vmatprep.subr.bf16.mxu0 0
      %612 = vmatpush2.bf16.msra.mxu0 0
      %613 = vmatprep.subr.bf16.mxu0 0
      %614 = vmatpush2.bf16.msra.mxu0 0
      %615 = vmatprep.subr.bf16.mxu0 0
      %616 = vmatpush2.bf16.msra.mxu0 0
      %617 = vmatprep.subr.bf16.mxu0 0
      %618 = vmatpush2.bf16.msra.mxu0 0
      %619 = vmatprep.subr.bf16.mxu0 0
      %620 = vmatpush2.bf16.msra.mxu0 0
      %621 = vmatprep.subr.bf16.mxu0 0
      %622 = vmatpush2.bf16.msra.mxu0 0
      %623 = vmatprep.mubr.bf16.mxu0 0
      %624 = vmatmul.mubr.bf16.gmra.mxu0 %v511
      %v625 = vpop.f32.mrf.mxu0
      %v626 = vadd.f32 0.0, %v625
      %v627 = vpop.f32.mrf.mxu0
      %v628 = vpop.f32.mrf.mxu0
      %v629 = vadd.f32 0.0, %v628
      %v630 = vpop.f32.mrf.mxu0
      %631 = vmatprep.mubr.bf16.mxu0 0
      %632 = vmatmul.mubr.bf16.gmra.mxu0 %v512
      %v633 = vpop.f32.mrf.mxu0
      %v634 = vadd.f32 0.0, %v633
      %v635 = vpop.f32.mrf.mxu0
      %v636 = vpop.f32.mrf.mxu0
      %v637 = vadd.f32 0.0, %v636
      %v638 = vpop.f32.mrf.mxu0
      %639 = vmatprep.mubr.bf16.mxu0 0
      %640 = vmatmul.mubr.bf16.gmra.mxu0 %v513
      %v641 = vpop.f32.mrf.mxu0
      %v642 = vadd.f32 0.0, %v641
      %v643 = vpop.f32.mrf.mxu0
      %v644 = vpop.f32.mrf.mxu0
      %v645 = vadd.f32 0.0, %v644
      %v646 = vpop.f32.mrf.mxu0
      %647 = vmatprep.mubr.bf16.mxu0 0
      %648 = vmatmul.mubr.bf16.gmra.mxu0 %v514
      %v649 = vpop.f32.mrf.mxu0
      %v650 = vadd.f32 0.0, %v649
      %v651 = vpop.f32.mrf.mxu0
      %v652 = vpop.f32.mrf.mxu0
      %v653 = vadd.f32 0.0, %v652
      %v654 = vpop.f32.mrf.mxu0
      %655 = vmatprep.mubr.bf16.mxu0 0
      %656 = vmatmul.mubr.bf16.gmra.mxu0 %v515
      %v657 = vpop.f32.mrf.mxu0
      %v658 = vadd.f32 0.0, %v657
      %v659 = vpop.f32.mrf.mxu0
      %v660 = vpop.f32.mrf.mxu0
      %v661 = vadd.f32 0.0, %v660
      %v662 = vpop.f32.mrf.mxu0
      %663 = vmatprep.mubr.bf16.mxu0 0
      %664 = vmatmul.mubr.bf16.gmra.mxu0 %v516
      %v665 = vpop.f32.mrf.mxu0
      %v666 = vadd.f32 0.0, %v665
      %v667 = vpop.f32.mrf.mxu0
      %v668 = vpop.f32.mrf.mxu0
      %v669 = vadd.f32 0.0, %v668
      %v670 = vpop.f32.mrf.mxu0
      %671 = vmatprep.mubr.bf16.mxu0 0
      %672 = vmatmul.mubr.bf16.gmra.mxu0 %v517
      %v673 = vpop.f32.mrf.mxu0
      %v674 = vadd.f32 0.0, %v673
      %v675 = vpop.f32.mrf.mxu0
      %v676 = vpop.f32.mrf.mxu0
      %v677 = vadd.f32 0.0, %v676
      %v678 = vpop.f32.mrf.mxu0
      %679 = vmatprep.mubr.bf16.mxu0 0
      %680 = vmatmul.mubr.bf16.gmra.mxu0 %v518
      %v681 = vpop.f32.mrf.mxu0
      %v682 = vadd.f32 0.0, %v681
      %v683 = vpop.f32.mrf.mxu0
      %v684 = vpop.f32.mrf.mxu0
      %v685 = vadd.f32 0.0, %v684
      %v686 = vpop.f32.mrf.mxu0
      %687 = vmatprep.mubr.bf16.mxu0 0
      %688 = vmatmul.mubr.bf16.gmra.mxu0 %v519
      %v689 = vpop.f32.mrf.mxu0
      %v690 = vadd.f32 0.0, %v689
      %v691 = vpop.f32.mrf.mxu0
      %v692 = vpop.f32.mrf.mxu0
      %v693 = vadd.f32 0.0, %v692
      %v694 = vpop.f32.mrf.mxu0
      %695 = vmatprep.mubr.bf16.mxu0 0
      %696 = vmatmul.mubr.bf16.gmra.mxu0 %v520
      %v697 = vpop.f32.mrf.mxu0
      %v698 = vadd.f32 0.0, %v697
      %v699 = vpop.f32.mrf.mxu0
      %v700 = vpop.f32.mrf.mxu0
      %v701 = vadd.f32 0.0, %v700
      %v702 = vpop.f32.mrf.mxu0
      %703 = vmatprep.mubr.bf16.mxu0 0
      %704 = vmatmul.mubr.bf16.gmra.mxu0 %v521
      %v705 = vpop.f32.mrf.mxu0
      %v706 = vadd.f32 0.0, %v705
      %v707 = vpop.f32.mrf.mxu0
      %v708 = vpop.f32.mrf.mxu0
      %v709 = vadd.f32 0.0, %v708
      %v710 = vpop.f32.mrf.mxu0
      %711 = vmatprep.mubr.bf16.mxu0 0
      %712 = vmatmul.mubr.bf16.gmra.mxu0 %v522
      %v713 = vpop.f32.mrf.mxu0
      %v714 = vadd.f32 0.0, %v713
      %v715 = vpop.f32.mrf.mxu0
      %v716 = vpop.f32.mrf.mxu0
      %v717 = vadd.f32 0.0, %v716
      %v718 = vpop.f32.mrf.mxu0
      %719 = vmatprep.mubr.bf16.mxu0 0
      %720 = vmatmul.mubr.bf16.gmra.mxu0 %v523
      %v721 = vpop.f32.mrf.mxu0
      %v722 = vadd.f32 0.0, %v721
      %v723 = vpop.f32.mrf.mxu0
      %v724 = vpop.f32.mrf.mxu0
      %v725 = vadd.f32 0.0, %v724
      %v726 = vpop.f32.mrf.mxu0
      %727 = vmatprep.mubr.bf16.mxu0 0
      %728 = vmatmul.mubr.bf16.gmra.mxu0 %v524
      %v729 = vpop.f32.mrf.mxu0
      %v730 = vadd.f32 0.0, %v729
      %v731 = vpop.f32.mrf.mxu0
      %v732 = vpop.f32.mrf.mxu0
      %v733 = vadd.f32 0.0, %v732
      %v734 = vpop.f32.mrf.mxu0
      %735 = vmatprep.mubr.bf16.mxu0 0
      %736 = vmatmul.mubr.bf16.gmra.mxu0 %v525
      %v737 = vpop.f32.mrf.mxu0
      %v738 = vadd.f32 0.0, %v737
      %v739 = vpop.f32.mrf.mxu0
      %v740 = vpop.f32.mrf.mxu0
      %v741 = vadd.f32 0.0, %v740
      %v742 = vpop.f32.mrf.mxu0
      %743 = vmatprep.mubr.bf16.mxu0 0
      %744 = vmatmul.mubr.bf16.gmra.mxu0 %v526
      %v745 = vpop.f32.mrf.mxu0
      %v746 = vadd.f32 0.0, %v745
      %v747 = vpop.f32.mrf.mxu0
      %v748 = vpop.f32.mrf.mxu0
      %v749 = vadd.f32 0.0, %v748
      %v750 = vpop.f32.mrf.mxu0
      %751 = vdwg.mxu0
      %v752 = vld [vmem:[%s4] sm:$0x1]
      %v754 = vlaneseq
      %v755 = vshrl.u32 %v754, 7
      %v756 = vsub.s32 0, %v755
      %v757 = vrot.slane %v752, %v756
      %v759 = vmul.f32 %v626, %v757
      %v760 = vmul.f32 %v629, %v757
      %v761 = vmul.f32 %v634, %v757
      %v762 = vmul.f32 %v637, %v757
      %v763 = vmul.f32 %v642, %v757
      %v764 = vmul.f32 %v645, %v757
      %v765 = vmul.f32 %v650, %v757
      %v766 = vmul.f32 %v653, %v757
      %v767 = vmul.f32 %v658, %v757
      %v768 = vmul.f32 %v661, %v757
      %v769 = vmul.f32 %v666, %v757
      %v770 = vmul.f32 %v669, %v757
      %v771 = vmul.f32 %v674, %v757
      %v772 = vmul.f32 %v677, %v757
      %v773 = vmul.f32 %v682, %v757
      %v774 = vmul.f32 %v685, %v757
      %v775 = vmul.f32 %v690, %v757
      %v776 = vmul.f32 %v693, %v757
      %v777 = vmul.f32 %v698, %v757
      %v778 = vmul.f32 %v701, %v757
      %v779 = vmul.f32 %v706, %v757
      %v780 = vmul.f32 %v709, %v757
      %v781 = vmul.f32 %v714, %v757
      %v782 = vmul.f32 %v717, %v757
      %v783 = vmul.f32 %v722, %v757
      %v784 = vmul.f32 %v725, %v757
      %v785 = vmul.f32 %v730, %v757
      %v786 = vmul.f32 %v733, %v757
      %v787 = vmul.f32 %v738, %v757
      %v788 = vmul.f32 %v741, %v757
      %v789 = vmul.f32 %v746, %v757
      %v790 = vmul.f32 %v749, %v757
      %v791 = vld [vmem:[%s5] sm:$0x1]
      %v793 = vlaneseq
      %v794 = vshrl.u32 %v793, 7
      %v795 = vsub.s32 0, %v794
      %v796 = vrot.slane %v791, %v795
      %v798 = vadd.f32 %v759, %v796
      %v799 = vadd.f32 %v760, %v796
      %v800 = vadd.f32 %v761, %v796
      %v801 = vadd.f32 %v762, %v796
      %v802 = vadd.f32 %v763, %v796
      %v803 = vadd.f32 %v764, %v796
      %v804 = vadd.f32 %v765, %v796
      %v805 = vadd.f32 %v766, %v796
      %v806 = vadd.f32 %v767, %v796
      %v807 = vadd.f32 %v768, %v796
      %v808 = vadd.f32 %v769, %v796
      %v809 = vadd.f32 %v770, %v796
      %v810 = vadd.f32 %v771, %v796
      %v811 = vadd.f32 %v772, %v796
      %v812 = vadd.f32 %v773, %v796
      %v813 = vadd.f32 %v774, %v796
      %v814 = vadd.f32 %v775, %v796
      %v815 = vadd.f32 %v776, %v796
      %v816 = vadd.f32 %v777, %v796
      %v817 = vadd.f32 %v778, %v796
      %v818 = vadd.f32 %v779, %v796
      %v819 = vadd.f32 %v780, %v796
      %v820 = vadd.f32 %v781, %v796
      %v821 = vadd.f32 %v782, %v796
      %v822 = vadd.f32 %v783, %v796
      %v823 = vadd.f32 %v784, %v796
      %v824 = vadd.f32 %v785, %v796
      %v825 = vadd.f32 %v786, %v796
      %v826 = vadd.f32 %v787, %v796
      %v827 = vadd.f32 %v788, %v796
      %v828 = vadd.f32 %v789, %v796
      %v829 = vadd.f32 %v790, %v796
      %v830 = vmax.f32 %v798, 0.0
      %v831 = vmax.f32 %v799, 0.0
      %v832 = vmax.f32 %v800, 0.0
      %v833 = vmax.f32 %v801, 0.0
      %v834 = vmax.f32 %v802, 0.0
      %v835 = vmax.f32 %v803, 0.0
      %v836 = vmax.f32 %v804, 0.0
      %v837 = vmax.f32 %v805, 0.0
      %v838 = vmax.f32 %v806, 0.0
      %v839 = vmax.f32 %v807, 0.0
      %v840 = vmax.f32 %v808, 0.0
      %v841 = vmax.f32 %v809, 0.0
      %v842 = vmax.f32 %v810, 0.0
      %v843 = vmax.f32 %v811, 0.0
      %v844 = vmax.f32 %v812, 0.0
      %v845 = vmax.f32 %v813, 0.0
      %v846 = vmax.f32 %v814, 0.0
      %v847 = vmax.f32 %v815, 0.0
      %v848 = vmax.f32 %v816, 0.0
      %v849 = vmax.f32 %v817, 0.0
      %v850 = vmax.f32 %v818, 0.0
      %v851 = vmax.f32 %v819, 0.0
      %v852 = vmax.f32 %v820, 0.0
      %v853 = vmax.f32 %v821, 0.0
      %v854 = vmax.f32 %v822, 0.0
      %v855 = vmax.f32 %v823, 0.0
      %v856 = vmax.f32 %v824, 0.0
      %v857 = vmax.f32 %v825, 0.0
      %v858 = vmax.f32 %v826, 0.0
      %v859 = vmax.f32 %v827, 0.0
      %v860 = vmax.f32 %v828, 0.0
      %v861 = vmax.f32 %v829, 0.0
      %v862 = vpack.c.bf16 %v831, %v830
      %v863 = vpack.c.bf16 %v833, %v832
      %v864 = vpack.c.bf16 %v835, %v834
      %v865 = vpack.c.bf16 %v837, %v836
      %v866 = vpack.c.bf16 %v839, %v838
      %v867 = vpack.c.bf16 %v841, %v840
      %v868 = vpack.c.bf16 %v843, %v842
      %v869 = vpack.c.bf16 %v845, %v844
      %v870 = vpack.c.bf16 %v847, %v846
      %v871 = vpack.c.bf16 %v849, %v848
      %v872 = vpack.c.bf16 %v851, %v850
      %v873 = vpack.c.bf16 %v853, %v852
      %v874 = vpack.c.bf16 %v855, %v854
      %v875 = vpack.c.bf16 %v857, %v856
      %v876 = vpack.c.bf16 %v859, %v858
      %v877 = vpack.c.bf16 %v861, %v860
      %v878 = vld [vmem:[%s7] sm:$0xf]
      %v879 = vld [vmem:[%s7 + $0x4] sm:$0xf]
      %v880 = vld [vmem:[%s7 + $0x8] sm:$0xf]
      %v881 = vld [vmem:[%s7 + $0xc] sm:$0xf]
      %v882 = vld [vmem:[%s7 + $0x10] sm:$0xf]
      %v883 = vld [vmem:[%s7 + $0x14] sm:$0xf]
      %v884 = vld [vmem:[%s7 + $0x18] sm:$0xf]
      %v885 = vld [vmem:[%s7 + $0x1c] sm:$0xf]
      %v886 = vld [vmem:[%s7 + $0x20] sm:$0xf]
      %v887 = vld [vmem:[%s7 + $0x24] sm:$0xf]
      %v888 = vld [vmem:[%s7 + $0x28] sm:$0xf]
      %v889 = vld [vmem:[%s7 + $0x2c] sm:$0xf]
      %v890 = vld [vmem:[%s7 + $0x30] sm:$0xf]
      %v891 = vld [vmem:[%s7 + $0x34] sm:$0xf]
      %v892 = vld [vmem:[%s7 + $0x38] sm:$0xf]
      %v893 = vld [vmem:[%s7 + $0x3c] sm:$0xf]
      %v894 = vld [vmem:[%s7 + $0x40] sm:$0xf]
      %v895 = vld [vmem:[%s7 + $0x44] sm:$0xf]
      %v896 = vld [vmem:[%s7 + $0x48] sm:$0xf]
      %v897 = vld [vmem:[%s7 + $0x4c] sm:$0xf]
      %v898 = vld [vmem:[%s7 + $0x50] sm:$0xf]
      %v899 = vld [vmem:[%s7 + $0x54] sm:$0xf]
      %v900 = vld [vmem:[%s7 + $0x58] sm:$0xf]
      %v901 = vld [vmem:[%s7 + $0x5c] sm:$0xf]
      %v902 = vld [vmem:[%s7 + $0x60] sm:$0xf]
      %v903 = vld [vmem:[%s7 + $0x64] sm:$0xf]
      %v904 = vld [vmem:[%s7 + $0x68] sm:$0xf]
      %v905 = vld [vmem:[%s7 + $0x6c] sm:$0xf]
      %v906 = vld [vmem:[%s7 + $0x70] sm:$0xf]
      %v907 = vld [vmem:[%s7 + $0x74] sm:$0xf]
      %v908 = vld [vmem:[%s7 + $0x78] sm:$0xf]
      %v909 = vld [vmem:[%s7 + $0x7c] sm:$0xf]
      %911 = vset.pattern.permute.xlu0 0
      %912 = vperm.xlu0 %911, %v878
      %v913 = vpop.permute.xlu0 %912
      %v916 = vunpack.c.l.s4 839922192
      %v917 = vunpack.c.0.s8 %v916
      %v918 = vlaneseq
      %v919 = vshrl.u32 %v918, 7
      %v920 = vsub.s32 %v917, %v919
      %v921 = vrot.slane %v913, %v920
      %923 = vset.pattern.permute.xlu0 0
      %924 = vperm.xlu0 %923, %v879
      %v925 = vpop.permute.xlu0 %924
      %v928 = vunpack.c.l.s4 839922192
      %v929 = vunpack.c.0.s8 %v928
      %v930 = vlaneseq
      %v931 = vshrl.u32 %v930, 7
      %v932 = vsub.s32 %v929, %v931
      %v933 = vrot.slane %v925, %v932
      %935 = vset.pattern.permute.xlu0 0
      %936 = vperm.xlu0 %935, %v880
      %v937 = vpop.permute.xlu0 %936
      %v940 = vunpack.c.l.s4 839922192
      %v941 = vunpack.c.0.s8 %v940
      %v942 = vlaneseq
      %v943 = vshrl.u32 %v942, 7
      %v944 = vsub.s32 %v941, %v943
      %v945 = vrot.slane %v937, %v944
      %947 = vset.pattern.permute.xlu0 0
      %948 = vperm.xlu0 %947, %v881
      %v949 = vpop.permute.xlu0 %948
      %v952 = vunpack.c.l.s4 839922192
      %v953 = vunpack.c.0.s8 %v952
      %v954 = vlaneseq
      %v955 = vshrl.u32 %v954, 7
      %v956 = vsub.s32 %v953, %v955
      %v957 = vrot.slane %v949, %v956
      %959 = vset.pattern.permute.xlu0 0
      %960 = vperm.xlu0 %959, %v882
      %v961 = vpop.permute.xlu0 %960
      %v964 = vunpack.c.l.s4 839922192
      %v965 = vunpack.c.0.s8 %v964
      %v966 = vlaneseq
      %v967 = vshrl.u32 %v966, 7
      %v968 = vsub.s32 %v965, %v967
      %v969 = vrot.slane %v961, %v968
      %971 = vset.pattern.permute.xlu0 0
      %972 = vperm.xlu0 %971, %v883
      %v973 = vpop.permute.xlu0 %972
      %v976 = vunpack.c.l.s4 839922192
      %v977 = vunpack.c.0.s8 %v976
      %v978 = vlaneseq
      %v979 = vshrl.u32 %v978, 7
      %v980 = vsub.s32 %v977, %v979
      %v981 = vrot.slane %v973, %v980
      %983 = vset.pattern.permute.xlu0 0
      %984 = vperm.xlu0 %983, %v884
      %v985 = vpop.permute.xlu0 %984
      %v988 = vunpack.c.l.s4 839922192
      %v989 = vunpack.c.0.s8 %v988
      %v990 = vlaneseq
      %v991 = vshrl.u32 %v990, 7
      %v992 = vsub.s32 %v989, %v991
      %v993 = vrot.slane %v985, %v992
      %995 = vset.pattern.permute.xlu0 0
      %996 = vperm.xlu0 %995, %v885
      %v997 = vpop.permute.xlu0 %996
      %v1000 = vunpack.c.l.s4 839922192
      %v1001 = vunpack.c.0.s8 %v1000
      %v1002 = vlaneseq
      %v1003 = vshrl.u32 %v1002, 7
      %v1004 = vsub.s32 %v1001, %v1003
      %v1005 = vrot.slane %v997, %v1004
      %1007 = vset.pattern.permute.xlu0 0
      %1008 = vperm.xlu0 %1007, %v886
      %v1009 = vpop.permute.xlu0 %1008
      %v1012 = vunpack.c.l.s4 839922192
      %v1013 = vunpack.c.0.s8 %v1012
      %v1014 = vlaneseq
      %v1015 = vshrl.u32 %v1014, 7
      %v1016 = vsub.s32 %v1013, %v1015
      %v1017 = vrot.slane %v1009, %v1016
      %1019 = vset.pattern.permute.xlu0 0
      %1020 = vperm.xlu0 %1019, %v887
      %v1021 = vpop.permute.xlu0 %1020
      %v1024 = vunpack.c.l.s4 839922192
      %v1025 = vunpack.c.0.s8 %v1024
      %v1026 = vlaneseq
      %v1027 = vshrl.u32 %v1026, 7
      %v1028 = vsub.s32 %v1025, %v1027
      %v1029 = vrot.slane %v1021, %v1028
      %1031 = vset.pattern.permute.xlu0 0
      %1032 = vperm.xlu0 %1031, %v888
      %v1033 = vpop.permute.xlu0 %1032
      %v1036 = vunpack.c.l.s4 839922192
      %v1037 = vunpack.c.0.s8 %v1036
      %v1038 = vlaneseq
      %v1039 = vshrl.u32 %v1038, 7
      %v1040 = vsub.s32 %v1037, %v1039
      %v1041 = vrot.slane %v1033, %v1040
      %1043 = vset.pattern.permute.xlu0 0
      %1044 = vperm.xlu0 %1043, %v889
      %v1045 = vpop.permute.xlu0 %1044
      %v1048 = vunpack.c.l.s4 839922192
      %v1049 = vunpack.c.0.s8 %v1048
      %v1050 = vlaneseq
      %v1051 = vshrl.u32 %v1050, 7
      %v1052 = vsub.s32 %v1049, %v1051
      %v1053 = vrot.slane %v1045, %v1052
      %1055 = vset.pattern.permute.xlu0 0
      %1056 = vperm.xlu0 %1055, %v890
      %v1057 = vpop.permute.xlu0 %1056
      %v1060 = vunpack.c.l.s4 839922192
      %v1061 = vunpack.c.0.s8 %v1060
      %v1062 = vlaneseq
      %v1063 = vshrl.u32 %v1062, 7
      %v1064 = vsub.s32 %v1061, %v1063
      %v1065 = vrot.slane %v1057, %v1064
      %1067 = vset.pattern.permute.xlu0 0
      %1068 = vperm.xlu0 %1067, %v891
      %v1069 = vpop.permute.xlu0 %1068
      %v1072 = vunpack.c.l.s4 839922192
      %v1073 = vunpack.c.0.s8 %v1072
      %v1074 = vlaneseq
      %v1075 = vshrl.u32 %v1074, 7
      %v1076 = vsub.s32 %v1073, %v1075
      %v1077 = vrot.slane %v1069, %v1076
      %1079 = vset.pattern.permute.xlu0 0
      %1080 = vperm.xlu0 %1079, %v892
      %v1081 = vpop.permute.xlu0 %1080
      %v1084 = vunpack.c.l.s4 839922192
      %v1085 = vunpack.c.0.s8 %v1084
      %v1086 = vlaneseq
      %v1087 = vshrl.u32 %v1086, 7
      %v1088 = vsub.s32 %v1085, %v1087
      %v1089 = vrot.slane %v1081, %v1088
      %1091 = vset.pattern.permute.xlu0 0
      %1092 = vperm.xlu0 %1091, %v893
      %v1093 = vpop.permute.xlu0 %1092
      %v1096 = vunpack.c.l.s4 839922192
      %v1097 = vunpack.c.0.s8 %v1096
      %v1098 = vlaneseq
      %v1099 = vshrl.u32 %v1098, 7
      %v1100 = vsub.s32 %v1097, %v1099
      %v1101 = vrot.slane %v1093, %v1100
      %1103 = vset.pattern.permute.xlu0 0
      %1104 = vperm.xlu0 %1103, %v894
      %v1105 = vpop.permute.xlu0 %1104
      %v1108 = vunpack.c.l.s4 839922192
      %v1109 = vunpack.c.0.s8 %v1108
      %v1110 = vlaneseq
      %v1111 = vshrl.u32 %v1110, 7
      %v1112 = vsub.s32 %v1109, %v1111
      %v1113 = vrot.slane %v1105, %v1112
      %1115 = vset.pattern.permute.xlu0 0
      %1116 = vperm.xlu0 %1115, %v895
      %v1117 = vpop.permute.xlu0 %1116
      %v1120 = vunpack.c.l.s4 839922192
      %v1121 = vunpack.c.0.s8 %v1120
      %v1122 = vlaneseq
      %v1123 = vshrl.u32 %v1122, 7
      %v1124 = vsub.s32 %v1121, %v1123
      %v1125 = vrot.slane %v1117, %v1124
      %1127 = vset.pattern.permute.xlu0 0
      %1128 = vperm.xlu0 %1127, %v896
      %v1129 = vpop.permute.xlu0 %1128
      %v1132 = vunpack.c.l.s4 839922192
      %v1133 = vunpack.c.0.s8 %v1132
      %v1134 = vlaneseq
      %v1135 = vshrl.u32 %v1134, 7
      %v1136 = vsub.s32 %v1133, %v1135
      %v1137 = vrot.slane %v1129, %v1136
      %1139 = vset.pattern.permute.xlu0 0
      %1140 = vperm.xlu0 %1139, %v897
      %v1141 = vpop.permute.xlu0 %1140
      %v1144 = vunpack.c.l.s4 839922192
      %v1145 = vunpack.c.0.s8 %v1144
      %v1146 = vlaneseq
      %v1147 = vshrl.u32 %v1146, 7
      %v1148 = vsub.s32 %v1145, %v1147
      %v1149 = vrot.slane %v1141, %v1148
      %1151 = vset.pattern.permute.xlu0 0
      %1152 = vperm.xlu0 %1151, %v898
      %v1153 = vpop.permute.xlu0 %1152
      %v1156 = vunpack.c.l.s4 839922192
      %v1157 = vunpack.c.0.s8 %v1156
      %v1158 = vlaneseq
      %v1159 = vshrl.u32 %v1158, 7
      %v1160 = vsub.s32 %v1157, %v1159
      %v1161 = vrot.slane %v1153, %v1160
      %1163 = vset.pattern.permute.xlu0 0
      %1164 = vperm.xlu0 %1163, %v899
      %v1165 = vpop.permute.xlu0 %1164
      %v1168 = vunpack.c.l.s4 839922192
      %v1169 = vunpack.c.0.s8 %v1168
      %v1170 = vlaneseq
      %v1171 = vshrl.u32 %v1170, 7
      %v1172 = vsub.s32 %v1169, %v1171
      %v1173 = vrot.slane %v1165, %v1172
      %1175 = vset.pattern.permute.xlu0 0
      %1176 = vperm.xlu0 %1175, %v900
      %v1177 = vpop.permute.xlu0 %1176
      %v1180 = vunpack.c.l.s4 839922192
      %v1181 = vunpack.c.0.s8 %v1180
      %v1182 = vlaneseq
      %v1183 = vshrl.u32 %v1182, 7
      %v1184 = vsub.s32 %v1181, %v1183
      %v1185 = vrot.slane %v1177, %v1184
      %1187 = vset.pattern.permute.xlu0 0
      %1188 = vperm.xlu0 %1187, %v901
      %v1189 = vpop.permute.xlu0 %1188
      %v1192 = vunpack.c.l.s4 839922192
      %v1193 = vunpack.c.0.s8 %v1192
      %v1194 = vlaneseq
      %v1195 = vshrl.u32 %v1194, 7
      %v1196 = vsub.s32 %v1193, %v1195
      %v1197 = vrot.slane %v1189, %v1196
      %1199 = vset.pattern.permute.xlu0 0
      %1200 = vperm.xlu0 %1199, %v902
      %v1201 = vpop.permute.xlu0 %1200
      %v1204 = vunpack.c.l.s4 839922192
      %v1205 = vunpack.c.0.s8 %v1204
      %v1206 = vlaneseq
      %v1207 = vshrl.u32 %v1206, 7
      %v1208 = vsub.s32 %v1205, %v1207
      %v1209 = vrot.slane %v1201, %v1208
      %1211 = vset.pattern.permute.xlu0 0
      %1212 = vperm.xlu0 %1211, %v903
      %v1213 = vpop.permute.xlu0 %1212
      %v1216 = vunpack.c.l.s4 839922192
      %v1217 = vunpack.c.0.s8 %v1216
      %v1218 = vlaneseq
      %v1219 = vshrl.u32 %v1218, 7
      %v1220 = vsub.s32 %v1217, %v1219
      %v1221 = vrot.slane %v1213, %v1220
      %1223 = vset.pattern.permute.xlu0 0
      %1224 = vperm.xlu0 %1223, %v904
      %v1225 = vpop.permute.xlu0 %1224
      %v1228 = vunpack.c.l.s4 839922192
      %v1229 = vunpack.c.0.s8 %v1228
      %v1230 = vlaneseq
      %v1231 = vshrl.u32 %v1230, 7
      %v1232 = vsub.s32 %v1229, %v1231
      %v1233 = vrot.slane %v1225, %v1232
      %1235 = vset.pattern.permute.xlu0 0
      %1236 = vperm.xlu0 %1235, %v905
      %v1237 = vpop.permute.xlu0 %1236
      %v1240 = vunpack.c.l.s4 839922192
      %v1241 = vunpack.c.0.s8 %v1240
      %v1242 = vlaneseq
      %v1243 = vshrl.u32 %v1242, 7
      %v1244 = vsub.s32 %v1241, %v1243
      %v1245 = vrot.slane %v1237, %v1244
      %1247 = vset.pattern.permute.xlu0 0
      %1248 = vperm.xlu0 %1247, %v906
      %v1249 = vpop.permute.xlu0 %1248
      %v1252 = vunpack.c.l.s4 839922192
      %v1253 = vunpack.c.0.s8 %v1252
      %v1254 = vlaneseq
      %v1255 = vshrl.u32 %v1254, 7
      %v1256 = vsub.s32 %v1253, %v1255
      %v1257 = vrot.slane %v1249, %v1256
      %1259 = vset.pattern.permute.xlu0 0
      %1260 = vperm.xlu0 %1259, %v907
      %v1261 = vpop.permute.xlu0 %1260
      %v1264 = vunpack.c.l.s4 839922192
      %v1265 = vunpack.c.0.s8 %v1264
      %v1266 = vlaneseq
      %v1267 = vshrl.u32 %v1266, 7
      %v1268 = vsub.s32 %v1265, %v1267
      %v1269 = vrot.slane %v1261, %v1268
      %1271 = vset.pattern.permute.xlu0 0
      %1272 = vperm.xlu0 %1271, %v908
      %v1273 = vpop.permute.xlu0 %1272
      %v1276 = vunpack.c.l.s4 839922192
      %v1277 = vunpack.c.0.s8 %v1276
      %v1278 = vlaneseq
      %v1279 = vshrl.u32 %v1278, 7
      %v1280 = vsub.s32 %v1277, %v1279
      %v1281 = vrot.slane %v1273, %v1280
      %1283 = vset.pattern.permute.xlu0 0
      %1284 = vperm.xlu0 %1283, %v909
      %v1285 = vpop.permute.xlu0 %1284
      %v1288 = vunpack.c.l.s4 839922192
      %v1289 = vunpack.c.0.s8 %v1288
      %v1290 = vlaneseq
      %v1291 = vshrl.u32 %v1290, 7
      %v1292 = vsub.s32 %v1289, %v1291
      %v1293 = vrot.slane %v1285, %v1292
      %v1326 = vunpack.c.l.b16 %v921
      %v1327 = vunpack.c.l.b16 %v933
      %v1328 = vunpack.c.l.b16 %v945
      %v1329 = vunpack.c.l.b16 %v957
      %v1330 = vunpack.c.l.b16 %v969
      %v1331 = vunpack.c.l.b16 %v981
      %v1332 = vunpack.c.l.b16 %v993
      %v1333 = vunpack.c.l.b16 %v1005
      %v1334 = vunpack.c.l.b16 %v1017
      %v1335 = vunpack.c.l.b16 %v1029
      %v1336 = vunpack.c.l.b16 %v1041
      %v1337 = vunpack.c.l.b16 %v1053
      %v1338 = vunpack.c.l.b16 %v1065
      %v1339 = vunpack.c.l.b16 %v1077
      %v1340 = vunpack.c.l.b16 %v1089
      %v1341 = vunpack.c.l.b16 %v1101
      %v1342 = vunpack.c.l.b16 %v1113
      %v1343 = vunpack.c.l.b16 %v1125
      %v1344 = vunpack.c.l.b16 %v1137
      %v1345 = vunpack.c.l.b16 %v1149
      %v1346 = vunpack.c.l.b16 %v1161
      %v1347 = vunpack.c.l.b16 %v1173
      %v1348 = vunpack.c.l.b16 %v1185
      %v1349 = vunpack.c.l.b16 %v1197
      %v1350 = vunpack.c.l.b16 %v1209
      %v1351 = vunpack.c.l.b16 %v1221
      %v1352 = vunpack.c.l.b16 %v1233
      %v1353 = vunpack.c.l.b16 %v1245
      %v1354 = vunpack.c.l.b16 %v1257
      %v1355 = vunpack.c.l.b16 %v1269
      %v1356 = vunpack.c.l.b16 %v1281
      %v1357 = vunpack.c.l.b16 %v1293
      %v1358 = vpack.c.b16 %v1327, %v1326
      %v1359 = vpack.c.b16 %v1329, %v1328
      %v1360 = vpack.c.b16 %v1331, %v1330
      %v1361 = vpack.c.b16 %v1333, %v1332
      %v1362 = vpack.c.b16 %v1335, %v1334
      %v1363 = vpack.c.b16 %v1337, %v1336
      %v1364 = vpack.c.b16 %v1339, %v1338
      %v1365 = vpack.c.b16 %v1341, %v1340
      %v1366 = vpack.c.b16 %v1343, %v1342
      %v1367 = vpack.c.b16 %v1345, %v1344
      %v1368 = vpack.c.b16 %v1347, %v1346
      %v1369 = vpack.c.b16 %v1349, %v1348
      %v1370 = vpack.c.b16 %v1351, %v1350
      %v1371 = vpack.c.b16 %v1353, %v1352
      %v1372 = vpack.c.b16 %v1355, %v1354
      %v1373 = vpack.c.b16 %v1357, %v1356
      %v1390 = vmul.bf16 %v862, %v1358
      %v1391 = vmul.bf16 %v863, %v1359
      %v1392 = vmul.bf16 %v864, %v1360
      %v1393 = vmul.bf16 %v865, %v1361
      %v1394 = vmul.bf16 %v866, %v1362
      %v1395 = vmul.bf16 %v867, %v1363
      %v1396 = vmul.bf16 %v868, %v1364
      %v1397 = vmul.bf16 %v869, %v1365
      %v1398 = vmul.bf16 %v870, %v1366
      %v1399 = vmul.bf16 %v871, %v1367
      %v1400 = vmul.bf16 %v872, %v1368
      %v1401 = vmul.bf16 %v873, %v1369
      %v1402 = vmul.bf16 %v874, %v1370
      %v1403 = vmul.bf16 %v875, %v1371
      %v1404 = vmul.bf16 %v876, %v1372
      %v1405 = vmul.bf16 %v877, %v1373
      %v1406 = vld [vmem:[%s8] sm:$0xf]
      %v1407 = vld [vmem:[%s8 + $0x4] sm:$0xf]
      %v1408 = vld [vmem:[%s8 + $0x8] sm:$0xf]
      %v1409 = vld [vmem:[%s8 + $0xc] sm:$0xf]
      %v1410 = vld [vmem:[%s8 + $0x10] sm:$0xf]
      %v1411 = vld [vmem:[%s8 + $0x14] sm:$0xf]
      %v1412 = vld [vmem:[%s8 + $0x18] sm:$0xf]
      %v1413 = vld [vmem:[%s8 + $0x1c] sm:$0xf]
      %v1414 = vld [vmem:[%s8 + $0x20] sm:$0xf]
      %v1415 = vld [vmem:[%s8 + $0x24] sm:$0xf]
      %v1416 = vld [vmem:[%s8 + $0x28] sm:$0xf]
      %v1417 = vld [vmem:[%s8 + $0x2c] sm:$0xf]
      %v1418 = vld [vmem:[%s8 + $0x30] sm:$0xf]
      %v1419 = vld [vmem:[%s8 + $0x34] sm:$0xf]
      %v1420 = vld [vmem:[%s8 + $0x38] sm:$0xf]
      %v1421 = vld [vmem:[%s8 + $0x3c] sm:$0xf]
      %v1422 = vld [vmem:[%s8 + $0x40] sm:$0xf]
      %v1423 = vld [vmem:[%s8 + $0x44] sm:$0xf]
      %v1424 = vld [vmem:[%s8 + $0x48] sm:$0xf]
      %v1425 = vld [vmem:[%s8 + $0x4c] sm:$0xf]
      %v1426 = vld [vmem:[%s8 + $0x50] sm:$0xf]
      %v1427 = vld [vmem:[%s8 + $0x54] sm:$0xf]
      %v1428 = vld [vmem:[%s8 + $0x58] sm:$0xf]
      %v1429 = vld [vmem:[%s8 + $0x5c] sm:$0xf]
      %v1430 = vld [vmem:[%s8 + $0x60] sm:$0xf]
      %v1431 = vld [vmem:[%s8 + $0x64] sm:$0xf]
      %v1432 = vld [vmem:[%s8 + $0x68] sm:$0xf]
      %v1433 = vld [vmem:[%s8 + $0x6c] sm:$0xf]
      %v1434 = vld [vmem:[%s8 + $0x70] sm:$0xf]
      %v1435 = vld [vmem:[%s8 + $0x74] sm:$0xf]
      %v1436 = vld [vmem:[%s8 + $0x78] sm:$0xf]
      %v1437 = vld [vmem:[%s8 + $0x7c] sm:$0xf]
      %1439 = vset.pattern.permute.xlu0 0
      %1440 = vperm.xlu0 %1439, %v1406
      %v1441 = vpop.permute.xlu0 %1440
      %v1444 = vunpack.c.l.s4 839922192
      %v1445 = vunpack.c.0.s8 %v1444
      %v1446 = vlaneseq
      %v1447 = vshrl.u32 %v1446, 7
      %v1448 = vsub.s32 %v1445, %v1447
      %v1449 = vrot.slane %v1441, %v1448
      %1451 = vset.pattern.permute.xlu0 0
      %1452 = vperm.xlu0 %1451, %v1407
      %v1453 = vpop.permute.xlu0 %1452
      %v1456 = vunpack.c.l.s4 839922192
      %v1457 = vunpack.c.0.s8 %v1456
      %v1458 = vlaneseq
      %v1459 = vshrl.u32 %v1458, 7
      %v1460 = vsub.s32 %v1457, %v1459
      %v1461 = vrot.slane %v1453, %v1460
      %1463 = vset.pattern.permute.xlu0 0
      %1464 = vperm.xlu0 %1463, %v1408
      %v1465 = vpop.permute.xlu0 %1464
      %v1468 = vunpack.c.l.s4 839922192
      %v1469 = vunpack.c.0.s8 %v1468
      %v1470 = vlaneseq
      %v1471 = vshrl.u32 %v1470, 7
      %v1472 = vsub.s32 %v1469, %v1471
      %v1473 = vrot.slane %v1465, %v1472
      %1475 = vset.pattern.permute.xlu0 0
      %1476 = vperm.xlu0 %1475, %v1409
      %v1477 = vpop.permute.xlu0 %1476
      %v1480 = vunpack.c.l.s4 839922192
      %v1481 = vunpack.c.0.s8 %v1480
      %v1482 = vlaneseq
      %v1483 = vshrl.u32 %v1482, 7
      %v1484 = vsub.s32 %v1481, %v1483
      %v1485 = vrot.slane %v1477, %v1484
      %1487 = vset.pattern.permute.xlu0 0
      %1488 = vperm.xlu0 %1487, %v1410
      %v1489 = vpop.permute.xlu0 %1488
      %v1492 = vunpack.c.l.s4 839922192
      %v1493 = vunpack.c.0.s8 %v1492
      %v1494 = vlaneseq
      %v1495 = vshrl.u32 %v1494, 7
      %v1496 = vsub.s32 %v1493, %v1495
      %v1497 = vrot.slane %v1489, %v1496
      %1499 = vset.pattern.permute.xlu0 0
      %1500 = vperm.xlu0 %1499, %v1411
      %v1501 = vpop.permute.xlu0 %1500
      %v1504 = vunpack.c.l.s4 839922192
      %v1505 = vunpack.c.0.s8 %v1504
      %v1506 = vlaneseq
      %v1507 = vshrl.u32 %v1506, 7
      %v1508 = vsub.s32 %v1505, %v1507
      %v1509 = vrot.slane %v1501, %v1508
      %1511 = vset.pattern.permute.xlu0 0
      %1512 = vperm.xlu0 %1511, %v1412
      %v1513 = vpop.permute.xlu0 %1512
      %v1516 = vunpack.c.l.s4 839922192
      %v1517 = vunpack.c.0.s8 %v1516
      %v1518 = vlaneseq
      %v1519 = vshrl.u32 %v1518, 7
      %v1520 = vsub.s32 %v1517, %v1519
      %v1521 = vrot.slane %v1513, %v1520
      %1523 = vset.pattern.permute.xlu0 0
      %1524 = vperm.xlu0 %1523, %v1413
      %v1525 = vpop.permute.xlu0 %1524
      %v1528 = vunpack.c.l.s4 839922192
      %v1529 = vunpack.c.0.s8 %v1528
      %v1530 = vlaneseq
      %v1531 = vshrl.u32 %v1530, 7
      %v1532 = vsub.s32 %v1529, %v1531
      %v1533 = vrot.slane %v1525, %v1532
      %1535 = vset.pattern.permute.xlu0 0
      %1536 = vperm.xlu0 %1535, %v1414
      %v1537 = vpop.permute.xlu0 %1536
      %v1540 = vunpack.c.l.s4 839922192
      %v1541 = vunpack.c.0.s8 %v1540
      %v1542 = vlaneseq
      %v1543 = vshrl.u32 %v1542, 7
      %v1544 = vsub.s32 %v1541, %v1543
      %v1545 = vrot.slane %v1537, %v1544
      %1547 = vset.pattern.permute.xlu0 0
      %1548 = vperm.xlu0 %1547, %v1415
      %v1549 = vpop.permute.xlu0 %1548
      %v1552 = vunpack.c.l.s4 839922192
      %v1553 = vunpack.c.0.s8 %v1552
      %v1554 = vlaneseq
      %v1555 = vshrl.u32 %v1554, 7
      %v1556 = vsub.s32 %v1553, %v1555
      %v1557 = vrot.slane %v1549, %v1556
      %1559 = vset.pattern.permute.xlu0 0
      %1560 = vperm.xlu0 %1559, %v1416
      %v1561 = vpop.permute.xlu0 %1560
      %v1564 = vunpack.c.l.s4 839922192
      %v1565 = vunpack.c.0.s8 %v1564
      %v1566 = vlaneseq
      %v1567 = vshrl.u32 %v1566, 7
      %v1568 = vsub.s32 %v1565, %v1567
      %v1569 = vrot.slane %v1561, %v1568
      %1571 = vset.pattern.permute.xlu0 0
      %1572 = vperm.xlu0 %1571, %v1417
      %v1573 = vpop.permute.xlu0 %1572
      %v1576 = vunpack.c.l.s4 839922192
      %v1577 = vunpack.c.0.s8 %v1576
      %v1578 = vlaneseq
      %v1579 = vshrl.u32 %v1578, 7
      %v1580 = vsub.s32 %v1577, %v1579
      %v1581 = vrot.slane %v1573, %v1580
      %1583 = vset.pattern.permute.xlu0 0
      %1584 = vperm.xlu0 %1583, %v1418
      %v1585 = vpop.permute.xlu0 %1584
      %v1588 = vunpack.c.l.s4 839922192
      %v1589 = vunpack.c.0.s8 %v1588
      %v1590 = vlaneseq
      %v1591 = vshrl.u32 %v1590, 7
      %v1592 = vsub.s32 %v1589, %v1591
      %v1593 = vrot.slane %v1585, %v1592
      %1595 = vset.pattern.permute.xlu0 0
      %1596 = vperm.xlu0 %1595, %v1419
      %v1597 = vpop.permute.xlu0 %1596
      %v1600 = vunpack.c.l.s4 839922192
      %v1601 = vunpack.c.0.s8 %v1600
      %v1602 = vlaneseq
      %v1603 = vshrl.u32 %v1602, 7
      %v1604 = vsub.s32 %v1601, %v1603
      %v1605 = vrot.slane %v1597, %v1604
      %1607 = vset.pattern.permute.xlu0 0
      %1608 = vperm.xlu0 %1607, %v1420
      %v1609 = vpop.permute.xlu0 %1608
      %v1612 = vunpack.c.l.s4 839922192
      %v1613 = vunpack.c.0.s8 %v1612
      %v1614 = vlaneseq
      %v1615 = vshrl.u32 %v1614, 7
      %v1616 = vsub.s32 %v1613, %v1615
      %v1617 = vrot.slane %v1609, %v1616
      %1619 = vset.pattern.permute.xlu0 0
      %1620 = vperm.xlu0 %1619, %v1421
      %v1621 = vpop.permute.xlu0 %1620
      %v1624 = vunpack.c.l.s4 839922192
      %v1625 = vunpack.c.0.s8 %v1624
      %v1626 = vlaneseq
      %v1627 = vshrl.u32 %v1626, 7
      %v1628 = vsub.s32 %v1625, %v1627
      %v1629 = vrot.slane %v1621, %v1628
      %1631 = vset.pattern.permute.xlu0 0
      %1632 = vperm.xlu0 %1631, %v1422
      %v1633 = vpop.permute.xlu0 %1632
      %v1636 = vunpack.c.l.s4 839922192
      %v1637 = vunpack.c.0.s8 %v1636
      %v1638 = vlaneseq
      %v1639 = vshrl.u32 %v1638, 7
      %v1640 = vsub.s32 %v1637, %v1639
      %v1641 = vrot.slane %v1633, %v1640
      %1643 = vset.pattern.permute.xlu0 0
      %1644 = vperm.xlu0 %1643, %v1423
      %v1645 = vpop.permute.xlu0 %1644
      %v1648 = vunpack.c.l.s4 839922192
      %v1649 = vunpack.c.0.s8 %v1648
      %v1650 = vlaneseq
      %v1651 = vshrl.u32 %v1650, 7
      %v1652 = vsub.s32 %v1649, %v1651
      %v1653 = vrot.slane %v1645, %v1652
      %1655 = vset.pattern.permute.xlu0 0
      %1656 = vperm.xlu0 %1655, %v1424
      %v1657 = vpop.permute.xlu0 %1656
      %v1660 = vunpack.c.l.s4 839922192
      %v1661 = vunpack.c.0.s8 %v1660
      %v1662 = vlaneseq
      %v1663 = vshrl.u32 %v1662, 7
      %v1664 = vsub.s32 %v1661, %v1663
      %v1665 = vrot.slane %v1657, %v1664
      %1667 = vset.pattern.permute.xlu0 0
      %1668 = vperm.xlu0 %1667, %v1425
      %v1669 = vpop.permute.xlu0 %1668
      %v1672 = vunpack.c.l.s4 839922192
      %v1673 = vunpack.c.0.s8 %v1672
      %v1674 = vlaneseq
      %v1675 = vshrl.u32 %v1674, 7
      %v1676 = vsub.s32 %v1673, %v1675
      %v1677 = vrot.slane %v1669, %v1676
      %1679 = vset.pattern.permute.xlu0 0
      %1680 = vperm.xlu0 %1679, %v1426
      %v1681 = vpop.permute.xlu0 %1680
      %v1684 = vunpack.c.l.s4 839922192
      %v1685 = vunpack.c.0.s8 %v1684
      %v1686 = vlaneseq
      %v1687 = vshrl.u32 %v1686, 7
      %v1688 = vsub.s32 %v1685, %v1687
      %v1689 = vrot.slane %v1681, %v1688
      %1691 = vset.pattern.permute.xlu0 0
      %1692 = vperm.xlu0 %1691, %v1427
      %v1693 = vpop.permute.xlu0 %1692
      %v1696 = vunpack.c.l.s4 839922192
      %v1697 = vunpack.c.0.s8 %v1696
      %v1698 = vlaneseq
      %v1699 = vshrl.u32 %v1698, 7
      %v1700 = vsub.s32 %v1697, %v1699
      %v1701 = vrot.slane %v1693, %v1700
      %1703 = vset.pattern.permute.xlu0 0
      %1704 = vperm.xlu0 %1703, %v1428
      %v1705 = vpop.permute.xlu0 %1704
      %v1708 = vunpack.c.l.s4 839922192
      %v1709 = vunpack.c.0.s8 %v1708
      %v1710 = vlaneseq
      %v1711 = vshrl.u32 %v1710, 7
      %v1712 = vsub.s32 %v1709, %v1711
      %v1713 = vrot.slane %v1705, %v1712
      %1715 = vset.pattern.permute.xlu0 0
      %1716 = vperm.xlu0 %1715, %v1429
      %v1717 = vpop.permute.xlu0 %1716
      %v1720 = vunpack.c.l.s4 839922192
      %v1721 = vunpack.c.0.s8 %v1720
      %v1722 = vlaneseq
      %v1723 = vshrl.u32 %v1722, 7
      %v1724 = vsub.s32 %v1721, %v1723
      %v1725 = vrot.slane %v1717, %v1724
      %1727 = vset.pattern.permute.xlu0 0
      %1728 = vperm.xlu0 %1727, %v1430
      %v1729 = vpop.permute.xlu0 %1728
      %v1732 = vunpack.c.l.s4 839922192
      %v1733 = vunpack.c.0.s8 %v1732
      %v1734 = vlaneseq
      %v1735 = vshrl.u32 %v1734, 7
      %v1736 = vsub.s32 %v1733, %v1735
      %v1737 = vrot.slane %v1729, %v1736
      %1739 = vset.pattern.permute.xlu0 0
      %1740 = vperm.xlu0 %1739, %v1431
      %v1741 = vpop.permute.xlu0 %1740
      %v1744 = vunpack.c.l.s4 839922192
      %v1745 = vunpack.c.0.s8 %v1744
      %v1746 = vlaneseq
      %v1747 = vshrl.u32 %v1746, 7
      %v1748 = vsub.s32 %v1745, %v1747
      %v1749 = vrot.slane %v1741, %v1748
      %1751 = vset.pattern.permute.xlu0 0
      %1752 = vperm.xlu0 %1751, %v1432
      %v1753 = vpop.permute.xlu0 %1752
      %v1756 = vunpack.c.l.s4 839922192
      %v1757 = vunpack.c.0.s8 %v1756
      %v1758 = vlaneseq
      %v1759 = vshrl.u32 %v1758, 7
      %v1760 = vsub.s32 %v1757, %v1759
      %v1761 = vrot.slane %v1753, %v1760
      %1763 = vset.pattern.permute.xlu0 0
      %1764 = vperm.xlu0 %1763, %v1433
      %v1765 = vpop.permute.xlu0 %1764
      %v1768 = vunpack.c.l.s4 839922192
      %v1769 = vunpack.c.0.s8 %v1768
      %v1770 = vlaneseq
      %v1771 = vshrl.u32 %v1770, 7
      %v1772 = vsub.s32 %v1769, %v1771
      %v1773 = vrot.slane %v1765, %v1772
      %1775 = vset.pattern.permute.xlu0 0
      %1776 = vperm.xlu0 %1775, %v1434
      %v1777 = vpop.permute.xlu0 %1776
      %v1780 = vunpack.c.l.s4 839922192
      %v1781 = vunpack.c.0.s8 %v1780
      %v1782 = vlaneseq
      %v1783 = vshrl.u32 %v1782, 7
      %v1784 = vsub.s32 %v1781, %v1783
      %v1785 = vrot.slane %v1777, %v1784
      %1787 = vset.pattern.permute.xlu0 0
      %1788 = vperm.xlu0 %1787, %v1435
      %v1789 = vpop.permute.xlu0 %1788
      %v1792 = vunpack.c.l.s4 839922192
      %v1793 = vunpack.c.0.s8 %v1792
      %v1794 = vlaneseq
      %v1795 = vshrl.u32 %v1794, 7
      %v1796 = vsub.s32 %v1793, %v1795
      %v1797 = vrot.slane %v1789, %v1796
      %1799 = vset.pattern.permute.xlu0 0
      %1800 = vperm.xlu0 %1799, %v1436
      %v1801 = vpop.permute.xlu0 %1800
      %v1804 = vunpack.c.l.s4 839922192
      %v1805 = vunpack.c.0.s8 %v1804
      %v1806 = vlaneseq
      %v1807 = vshrl.u32 %v1806, 7
      %v1808 = vsub.s32 %v1805, %v1807
      %v1809 = vrot.slane %v1801, %v1808
      %1811 = vset.pattern.permute.xlu0 0
      %1812 = vperm.xlu0 %1811, %v1437
      %v1813 = vpop.permute.xlu0 %1812
      %v1816 = vunpack.c.l.s4 839922192
      %v1817 = vunpack.c.0.s8 %v1816
      %v1818 = vlaneseq
      %v1819 = vshrl.u32 %v1818, 7
      %v1820 = vsub.s32 %v1817, %v1819
      %v1821 = vrot.slane %v1813, %v1820
      %v1854 = vunpack.c.l.b16 %v1449
      %v1855 = vunpack.c.l.b16 %v1461
      %v1856 = vunpack.c.l.b16 %v1473
      %v1857 = vunpack.c.l.b16 %v1485
      %v1858 = vunpack.c.l.b16 %v1497
      %v1859 = vunpack.c.l.b16 %v1509
      %v1860 = vunpack.c.l.b16 %v1521
      %v1861 = vunpack.c.l.b16 %v1533
      %v1862 = vunpack.c.l.b16 %v1545
      %v1863 = vunpack.c.l.b16 %v1557
      %v1864 = vunpack.c.l.b16 %v1569
      %v1865 = vunpack.c.l.b16 %v1581
      %v1866 = vunpack.c.l.b16 %v1593
      %v1867 = vunpack.c.l.b16 %v1605
      %v1868 = vunpack.c.l.b16 %v1617
      %v1869 = vunpack.c.l.b16 %v1629
      %v1870 = vunpack.c.l.b16 %v1641
      %v1871 = vunpack.c.l.b16 %v1653
      %v1872 = vunpack.c.l.b16 %v1665
      %v1873 = vunpack.c.l.b16 %v1677
      %v1874 = vunpack.c.l.b16 %v1689
      %v1875 = vunpack.c.l.b16 %v1701
      %v1876 = vunpack.c.l.b16 %v1713
      %v1877 = vunpack.c.l.b16 %v1725
      %v1878 = vunpack.c.l.b16 %v1737
      %v1879 = vunpack.c.l.b16 %v1749
      %v1880 = vunpack.c.l.b16 %v1761
      %v1881 = vunpack.c.l.b16 %v1773
      %v1882 = vunpack.c.l.b16 %v1785
      %v1883 = vunpack.c.l.b16 %v1797
      %v1884 = vunpack.c.l.b16 %v1809
      %v1885 = vunpack.c.l.b16 %v1821
      %v1886 = vpack.c.b16 %v1855, %v1854
      %v1887 = vpack.c.b16 %v1857, %v1856
      %v1888 = vpack.c.b16 %v1859, %v1858
      %v1889 = vpack.c.b16 %v1861, %v1860
      %v1890 = vpack.c.b16 %v1863, %v1862
      %v1891 = vpack.c.b16 %v1865, %v1864
      %v1892 = vpack.c.b16 %v1867, %v1866
      %v1893 = vpack.c.b16 %v1869, %v1868
      %v1894 = vpack.c.b16 %v1871, %v1870
      %v1895 = vpack.c.b16 %v1873, %v1872
      %v1896 = vpack.c.b16 %v1875, %v1874
      %v1897 = vpack.c.b16 %v1877, %v1876
      %v1898 = vpack.c.b16 %v1879, %v1878
      %v1899 = vpack.c.b16 %v1881, %v1880
      %v1900 = vpack.c.b16 %v1883, %v1882
      %v1901 = vpack.c.b16 %v1885, %v1884
      %v1918 = vmul.bf16 %v862, %v1886
      %v1919 = vmul.bf16 %v863, %v1887
      %v1920 = vmul.bf16 %v864, %v1888
      %v1921 = vmul.bf16 %v865, %v1889
      %v1922 = vmul.bf16 %v866, %v1890
      %v1923 = vmul.bf16 %v867, %v1891
      %v1924 = vmul.bf16 %v868, %v1892
      %v1925 = vmul.bf16 %v869, %v1893
      %v1926 = vmul.bf16 %v870, %v1894
      %v1927 = vmul.bf16 %v871, %v1895
      %v1928 = vmul.bf16 %v872, %v1896
      %v1929 = vmul.bf16 %v873, %v1897
      %v1930 = vmul.bf16 %v874, %v1898
      %v1931 = vmul.bf16 %v875, %v1899
      %v1932 = vmul.bf16 %v876, %v1900
      %v1933 = vmul.bf16 %v877, %v1901
      %1934 = vst [vmem:[#allocation2] sm:$0xf] 0
      %1935 = vst [vmem:[#allocation2 + $0x4] sm:$0xf] 0
      %1936 = vst [vmem:[#allocation2 + $0x8] sm:$0xf] 0
      %vm1937 = vcmask 1040384
      %vm1938 = vsmask.f32 256
      %vm1939 = vmand %vm1937, %vm1938
      %v1940 = vld [vmem:[#allocation2 + $0xc] sm:$0x1]
      %v1941 = vsel %vm1939, 0, %v1940
      %1942 = vst [vmem:[#allocation2 + $0xc] sm:$0x1] %v1941
      %vm1943 = vcmask 1043456
      %vm1944 = vsmask.f32 7938
      %vm1945 = vmand %vm1943, %vm1944
      %v1946 = vld [vmem:[#allocation2 + $0x8c] sm:$0xf]
      %v1947 = vsel %vm1945, 0, %v1946
      %1948 = vst [vmem:[#allocation2 + $0x8c] sm:$0xf] %v1947
      %1949 = vst [vmem:[#allocation2 + $0x90] sm:$0xf] 0
      %1950 = vst [vmem:[#allocation2 + $0x94] sm:$0xf] 0
      %v1967 = vunpack.c.l.b16 %v1390
      %v1968 = vunpack.c.h.b16 %v1390
      %v1969 = vunpack.c.l.b16 %v1391
      %v1970 = vunpack.c.h.b16 %v1391
      %v1971 = vunpack.c.l.b16 %v1392
      %v1972 = vunpack.c.h.b16 %v1392
      %v1973 = vunpack.c.l.b16 %v1393
      %v1974 = vunpack.c.h.b16 %v1393
      %v1975 = vunpack.c.l.b16 %v1394
      %v1976 = vunpack.c.h.b16 %v1394
      %v1977 = vunpack.c.l.b16 %v1395
      %v1978 = vunpack.c.h.b16 %v1395
      %v1979 = vunpack.c.l.b16 %v1396
      %v1980 = vunpack.c.h.b16 %v1396
      %v1981 = vunpack.c.l.b16 %v1397
      %v1982 = vunpack.c.h.b16 %v1397
      %v1983 = vunpack.c.l.b16 %v1398
      %v1984 = vunpack.c.h.b16 %v1398
      %v1985 = vunpack.c.l.b16 %v1399
      %v1986 = vunpack.c.h.b16 %v1399
      %v1987 = vunpack.c.l.b16 %v1400
      %v1988 = vunpack.c.h.b16 %v1400
      %v1989 = vunpack.c.l.b16 %v1401
      %v1990 = vunpack.c.h.b16 %v1401
      %v1991 = vunpack.c.l.b16 %v1402
      %v1992 = vunpack.c.h.b16 %v1402
      %v1993 = vunpack.c.l.b16 %v1403
      %v1994 = vunpack.c.h.b16 %v1403
      %v1995 = vunpack.c.l.b16 %v1404
      %v1996 = vunpack.c.h.b16 %v1404
      %v1997 = vunpack.c.l.b16 %v1405
      %v1998 = vunpack.c.h.b16 %v1405
      %v1999 = vpack.c.b16 %v1967, %v1967
      %v2000 = vpack.c.b16 %v1968, %v1968
      %v2001 = vpack.c.b16 %v1969, %v1969
      %v2002 = vpack.c.b16 %v1970, %v1970
      %v2003 = vpack.c.b16 %v1971, %v1971
      %v2004 = vpack.c.b16 %v1972, %v1972
      %v2005 = vpack.c.b16 %v1973, %v1973
      %v2006 = vpack.c.b16 %v1974, %v1974
      %v2007 = vpack.c.b16 %v1975, %v1975
      %v2008 = vpack.c.b16 %v1976, %v1976
      %v2009 = vpack.c.b16 %v1977, %v1977
      %v2010 = vpack.c.b16 %v1978, %v1978
      %v2011 = vpack.c.b16 %v1979, %v1979
      %v2012 = vpack.c.b16 %v1980, %v1980
      %v2013 = vpack.c.b16 %v1981, %v1981
      %v2014 = vpack.c.b16 %v1982, %v1982
      %v2015 = vpack.c.b16 %v1983, %v1983
      %v2016 = vpack.c.b16 %v1984, %v1984
      %v2017 = vpack.c.b16 %v1985, %v1985
      %v2018 = vpack.c.b16 %v1986, %v1986
      %v2019 = vpack.c.b16 %v1987, %v1987
      %v2020 = vpack.c.b16 %v1988, %v1988
      %v2021 = vpack.c.b16 %v1989, %v1989
      %v2022 = vpack.c.b16 %v1990, %v1990
      %v2023 = vpack.c.b16 %v1991, %v1991
      %v2024 = vpack.c.b16 %v1992, %v1992
      %v2025 = vpack.c.b16 %v1993, %v1993
      %v2026 = vpack.c.b16 %v1994, %v1994
      %v2027 = vpack.c.b16 %v1995, %v1995
      %v2028 = vpack.c.b16 %v1996, %v1996
      %v2029 = vpack.c.b16 %v1997, %v1997
      %v2030 = vpack.c.b16 %v1998, %v1998
      %vm2031 = vsmask.f32 4368
      %vm2032 = vmor %vm1938, %vm2031
      %v2034 = vshrl.u32 %v1999, 16
      %v2036 = vrot.slane %v2034, 7
      %v2037 = vshll.u32 %v1999, 16
      %v2039 = vor.u32 %v2036, %v2037
      %v2040 = vrot.slane %v2036, 4
      %v2042 = vshrl.u32 %v2000, 16
      %v2044 = vrot.slane %v2042, 7
      %v2045 = vshll.u32 %v2000, 16
      %v2047 = vor.u32 %v2044, %v2045
      %v2048 = vsel %vm2032, %v2040, %v2047
      %v2049 = vrot.slane %v2044, 4
      %v2051 = vshrl.u32 %v2001, 16
      %v2053 = vrot.slane %v2051, 7
      %v2054 = vshll.u32 %v2001, 16
      %v2056 = vor.u32 %v2053, %v2054
      %v2057 = vsel %vm2032, %v2049, %v2056
      %v2058 = vrot.slane %v2053, 4
      %v2060 = vshrl.u32 %v2002, 16
      %v2062 = vrot.slane %v2060, 7
      %v2063 = vshll.u32 %v2002, 16
      %v2065 = vor.u32 %v2062, %v2063
      %v2066 = vsel %vm2032, %v2058, %v2065
      %v2067 = vrot.slane %v2062, 4
      %v2069 = vshrl.u32 %v2003, 16
      %v2071 = vrot.slane %v2069, 7
      %v2072 = vshll.u32 %v2003, 16
      %v2074 = vor.u32 %v2071, %v2072
      %v2075 = vsel %vm2032, %v2067, %v2074
      %v2076 = vrot.slane %v2071, 4
      %v2078 = vshrl.u32 %v2004, 16
      %v2080 = vrot.slane %v2078, 7
      %v2081 = vshll.u32 %v2004, 16
      %v2083 = vor.u32 %v2080, %v2081
      %v2084 = vsel %vm2032, %v2076, %v2083
      %v2085 = vrot.slane %v2080, 4
      %v2087 = vshrl.u32 %v2005, 16
      %v2089 = vrot.slane %v2087, 7
      %v2090 = vshll.u32 %v2005, 16
      %v2092 = vor.u32 %v2089, %v2090
      %v2093 = vsel %vm2032, %v2085, %v2092
      %v2094 = vrot.slane %v2089, 4
      %v2096 = vshrl.u32 %v2006, 16
      %v2098 = vrot.slane %v2096, 7
      %v2099 = vshll.u32 %v2006, 16
      %v2101 = vor.u32 %v2098, %v2099
      %v2102 = vsel %vm2032, %v2094, %v2101
      %v2103 = vrot.slane %v2098, 4
      %v2105 = vshrl.u32 %v2007, 16
      %v2107 = vrot.slane %v2105, 7
      %v2108 = vshll.u32 %v2007, 16
      %v2110 = vor.u32 %v2107, %v2108
      %v2111 = vsel %vm2032, %v2103, %v2110
      %v2112 = vrot.slane %v2107, 4
      %v2114 = vshrl.u32 %v2008, 16
      %v2116 = vrot.slane %v2114, 7
      %v2117 = vshll.u32 %v2008, 16
      %v2119 = vor.u32 %v2116, %v2117
      %v2120 = vsel %vm2032, %v2112, %v2119
      %v2121 = vrot.slane %v2116, 4
      %v2123 = vshrl.u32 %v2009, 16
      %v2125 = vrot.slane %v2123, 7
      %v2126 = vshll.u32 %v2009, 16
      %v2128 = vor.u32 %v2125, %v2126
      %v2129 = vsel %vm2032, %v2121, %v2128
      %v2130 = vrot.slane %v2125, 4
      %v2132 = vshrl.u32 %v2010, 16
      %v2134 = vrot.slane %v2132, 7
      %v2135 = vshll.u32 %v2010, 16
      %v2137 = vor.u32 %v2134, %v2135
      %v2138 = vsel %vm2032, %v2130, %v2137
      %v2139 = vrot.slane %v2134, 4
      %v2141 = vshrl.u32 %v2011, 16
      %v2143 = vrot.slane %v2141, 7
      %v2144 = vshll.u32 %v2011, 16
      %v2146 = vor.u32 %v2143, %v2144
      %v2147 = vsel %vm2032, %v2139, %v2146
      %v2148 = vrot.slane %v2143, 4
      %v2150 = vshrl.u32 %v2012, 16
      %v2152 = vrot.slane %v2150, 7
      %v2153 = vshll.u32 %v2012, 16
      %v2155 = vor.u32 %v2152, %v2153
      %v2156 = vsel %vm2032, %v2148, %v2155
      %v2157 = vrot.slane %v2152, 4
      %v2159 = vshrl.u32 %v2013, 16
      %v2161 = vrot.slane %v2159, 7
      %v2162 = vshll.u32 %v2013, 16
      %v2164 = vor.u32 %v2161, %v2162
      %v2165 = vsel %vm2032, %v2157, %v2164
      %v2166 = vrot.slane %v2161, 4
      %v2168 = vshrl.u32 %v2014, 16
      %v2170 = vrot.slane %v2168, 7
      %v2171 = vshll.u32 %v2014, 16
      %v2173 = vor.u32 %v2170, %v2171
      %v2174 = vsel %vm2032, %v2166, %v2173
      %v2175 = vrot.slane %v2170, 4
      %v2177 = vshrl.u32 %v2015, 16
      %v2179 = vrot.slane %v2177, 7
      %v2180 = vshll.u32 %v2015, 16
      %v2182 = vor.u32 %v2179, %v2180
      %v2183 = vsel %vm2032, %v2175, %v2182
      %v2184 = vrot.slane %v2179, 4
      %v2186 = vshrl.u32 %v2016, 16
      %v2188 = vrot.slane %v2186, 7
      %v2189 = vshll.u32 %v2016, 16
      %v2191 = vor.u32 %v2188, %v2189
      %v2192 = vsel %vm2032, %v2184, %v2191
      %v2193 = vrot.slane %v2188, 4
      %v2195 = vshrl.u32 %v2017, 16
      %v2197 = vrot.slane %v2195, 7
      %v2198 = vshll.u32 %v2017, 16
      %v2200 = vor.u32 %v2197, %v2198
      %v2201 = vsel %vm2032, %v2193, %v2200
      %v2202 = vrot.slane %v2197, 4
      %v2204 = vshrl.u32 %v2018, 16
      %v2206 = vrot.slane %v2204, 7
      %v2207 = vshll.u32 %v2018, 16
      %v2209 = vor.u32 %v2206, %v2207
      %v2210 = vsel %vm2032, %v2202, %v2209
      %v2211 = vrot.slane %v2206, 4
      %v2213 = vshrl.u32 %v2019, 16
      %v2215 = vrot.slane %v2213, 7
      %v2216 = vshll.u32 %v2019, 16
      %v2218 = vor.u32 %v2215, %v2216
      %v2219 = vsel %vm2032, %v2211, %v2218
      %v2220 = vrot.slane %v2215, 4
      %v2222 = vshrl.u32 %v2020, 16
      %v2224 = vrot.slane %v2222, 7
      %v2225 = vshll.u32 %v2020, 16
      %v2227 = vor.u32 %v2224, %v2225
      %v2228 = vsel %vm2032, %v2220, %v2227
      %v2229 = vrot.slane %v2224, 4
      %v2231 = vshrl.u32 %v2021, 16
      %v2233 = vrot.slane %v2231, 7
      %v2234 = vshll.u32 %v2021, 16
      %v2236 = vor.u32 %v2233, %v2234
      %v2237 = vsel %vm2032, %v2229, %v2236
      %v2238 = vrot.slane %v2233, 4
      %v2240 = vshrl.u32 %v2022, 16
      %v2242 = vrot.slane %v2240, 7
      %v2243 = vshll.u32 %v2022, 16
      %v2245 = vor.u32 %v2242, %v2243
      %v2246 = vsel %vm2032, %v2238, %v2245
      %v2247 = vrot.slane %v2242, 4
      %v2249 = vshrl.u32 %v2023, 16
      %v2251 = vrot.slane %v2249, 7
      %v2252 = vshll.u32 %v2023, 16
      %v2254 = vor.u32 %v2251, %v2252
      %v2255 = vsel %vm2032, %v2247, %v2254
      %v2256 = vrot.slane %v2251, 4
      %v2258 = vshrl.u32 %v2024, 16
      %v2260 = vrot.slane %v2258, 7
      %v2261 = vshll.u32 %v2024, 16
      %v2263 = vor.u32 %v2260, %v2261
      %v2264 = vsel %vm2032, %v2256, %v2263
      %v2265 = vrot.slane %v2260, 4
      %v2267 = vshrl.u32 %v2025, 16
      %v2269 = vrot.slane %v2267, 7
      %v2270 = vshll.u32 %v2025, 16
      %v2272 = vor.u32 %v2269, %v2270
      %v2273 = vsel %vm2032, %v2265, %v2272
      %v2274 = vrot.slane %v2269, 4
      %v2276 = vshrl.u32 %v2026, 16
      %v2278 = vrot.slane %v2276, 7
      %v2279 = vshll.u32 %v2026, 16
      %v2281 = vor.u32 %v2278, %v2279
      %v2282 = vsel %vm2032, %v2274, %v2281
      %v2283 = vrot.slane %v2278, 4
      %v2285 = vshrl.u32 %v2027, 16
      %v2287 = vrot.slane %v2285, 7
      %v2288 = vshll.u32 %v2027, 16
      %v2290 = vor.u32 %v2287, %v2288
      %v2291 = vsel %vm2032, %v2283, %v2290
      %v2292 = vrot.slane %v2287, 4
      %v2294 = vshrl.u32 %v2028, 16
      %v2296 = vrot.slane %v2294, 7
      %v2297 = vshll.u32 %v2028, 16
      %v2299 = vor.u32 %v2296, %v2297
      %v2300 = vsel %vm2032, %v2292, %v2299
      %v2301 = vrot.slane %v2296, 4
      %v2303 = vshrl.u32 %v2029, 16
      %v2305 = vrot.slane %v2303, 7
      %v2306 = vshll.u32 %v2029, 16
      %v2308 = vor.u32 %v2305, %v2306
      %v2309 = vsel %vm2032, %v2301, %v2308
      %v2310 = vrot.slane %v2305, 4
      %v2312 = vshrl.u32 %v2030, 16
      %v2314 = vrot.slane %v2312, 7
      %v2315 = vshll.u32 %v2030, 16
      %v2317 = vor.u32 %v2314, %v2315
      %v2318 = vsel %vm2032, %v2310, %v2317
      %v2319 = vrot.slane %v2314, 4
      %v2353 = vld [vmem:[#allocation2 + $0xc] sm:$0xf]
      %v2354 = vsel %vm1945, %v2039, %v2353
      %2355 = vst [vmem:[#allocation2 + $0xc] sm:$0xf] %v2354
      %2356 = vst [vmem:[#allocation2 + $0x10] sm:$0xf] %v2048
      %2357 = vst [vmem:[#allocation2 + $0x14] sm:$0xf] %v2057
      %2358 = vst [vmem:[#allocation2 + $0x18] sm:$0xf] %v2066
      %2359 = vst [vmem:[#allocation2 + $0x1c] sm:$0xf] %v2075
      %2360 = vst [vmem:[#allocation2 + $0x20] sm:$0xf] %v2084
      %2361 = vst [vmem:[#allocation2 + $0x24] sm:$0xf] %v2093
      %2362 = vst [vmem:[#allocation2 + $0x28] sm:$0xf] %v2102
      %2363 = vst [vmem:[#allocation2 + $0x2c] sm:$0xf] %v2111
      %2364 = vst [vmem:[#allocation2 + $0x30] sm:$0xf] %v2120
      %2365 = vst [vmem:[#allocation2 + $0x34] sm:$0xf] %v2129
      %2366 = vst [vmem:[#allocation2 + $0x38] sm:$0xf] %v2138
      %2367 = vst [vmem:[#allocation2 + $0x3c] sm:$0xf] %v2147
      %2368 = vst [vmem:[#allocation2 + $0x40] sm:$0xf] %v2156
      %2369 = vst [vmem:[#allocation2 + $0x44] sm:$0xf] %v2165
      %2370 = vst [vmem:[#allocation2 + $0x48] sm:$0xf] %v2174
      %2371 = vst [vmem:[#allocation2 + $0x4c] sm:$0xf] %v2183
      %2372 = vst [vmem:[#allocation2 + $0x50] sm:$0xf] %v2192
      %2373 = vst [vmem:[#allocation2 + $0x54] sm:$0xf] %v2201
      %2374 = vst [vmem:[#allocation2 + $0x58] sm:$0xf] %v2210
      %2375 = vst [vmem:[#allocation2 + $0x5c] sm:$0xf] %v2219
      %2376 = vst [vmem:[#allocation2 + $0x60] sm:$0xf] %v2228
      %2377 = vst [vmem:[#allocation2 + $0x64] sm:$0xf] %v2237
      %2378 = vst [vmem:[#allocation2 + $0x68] sm:$0xf] %v2246
      %2379 = vst [vmem:[#allocation2 + $0x6c] sm:$0xf] %v2255
      %2380 = vst [vmem:[#allocation2 + $0x70] sm:$0xf] %v2264
      %2381 = vst [vmem:[#allocation2 + $0x74] sm:$0xf] %v2273
      %2382 = vst [vmem:[#allocation2 + $0x78] sm:$0xf] %v2282
      %2383 = vst [vmem:[#allocation2 + $0x7c] sm:$0xf] %v2291
      %2384 = vst [vmem:[#allocation2 + $0x80] sm:$0xf] %v2300
      %2385 = vst [vmem:[#allocation2 + $0x84] sm:$0xf] %v2309
      %2386 = vst [vmem:[#allocation2 + $0x88] sm:$0xf] %v2318
      %v2387 = vld [vmem:[#allocation2 + $0x8c] sm:$0x1]
      %v2388 = vsel %vm1939, %v2319, %v2387
      %2389 = vst [vmem:[#allocation2 + $0x8c] sm:$0x1] %v2388
      %2390 = vst [vmem:[#allocation3] sm:$0xf] 0
      %2391 = vst [vmem:[#allocation3 + $0x4] sm:$0xf] 0
      %2392 = vst [vmem:[#allocation3 + $0x8] sm:$0xf] 0
      %2393 = vst [vmem:[#allocation3 + $0x8c] sm:$0xf] 0
      %2394 = vst [vmem:[#allocation3 + $0x90] sm:$0xf] 0
      %2395 = vst [vmem:[#allocation3 + $0x94] sm:$0xf] 0
      %v2412 = vunpack.c.l.b16 %v862
      %v2413 = vunpack.c.h.b16 %v862
      %v2414 = vunpack.c.l.b16 %v863
      %v2415 = vunpack.c.h.b16 %v863
      %v2416 = vunpack.c.l.b16 %v864
      %v2417 = vunpack.c.h.b16 %v864
      %v2418 = vunpack.c.l.b16 %v865
      %v2419 = vunpack.c.h.b16 %v865
      %v2420 = vunpack.c.l.b16 %v866
      %v2421 = vunpack.c.h.b16 %v866
      %v2422 = vunpack.c.l.b16 %v867
      %v2423 = vunpack.c.h.b16 %v867
      %v2424 = vunpack.c.l.b16 %v868
      %v2425 = vunpack.c.h.b16 %v868
      %v2426 = vunpack.c.l.b16 %v869
      %v2427 = vunpack.c.h.b16 %v869
      %v2428 = vunpack.c.l.b16 %v870
      %v2429 = vunpack.c.h.b16 %v870
      %v2430 = vunpack.c.l.b16 %v871
      %v2431 = vunpack.c.h.b16 %v871
      %v2432 = vunpack.c.l.b16 %v872
      %v2433 = vunpack.c.h.b16 %v872
      %v2434 = vunpack.c.l.b16 %v873
      %v2435 = vunpack.c.h.b16 %v873
      %v2436 = vunpack.c.l.b16 %v874
      %v2437 = vunpack.c.h.b16 %v874
      %v2438 = vunpack.c.l.b16 %v875
      %v2439 = vunpack.c.h.b16 %v875
      %v2440 = vunpack.c.l.b16 %v876
      %v2441 = vunpack.c.h.b16 %v876
      %v2442 = vunpack.c.l.b16 %v877
      %v2443 = vunpack.c.h.b16 %v877
      %v2444 = vpack.c.b16 %v2412, %v2412
      %v2445 = vpack.c.b16 %v2413, %v2413
      %v2446 = vpack.c.b16 %v2414, %v2414
      %v2447 = vpack.c.b16 %v2415, %v2415
      %v2448 = vpack.c.b16 %v2416, %v2416
      %v2449 = vpack.c.b16 %v2417, %v2417
      %v2450 = vpack.c.b16 %v2418, %v2418
      %v2451 = vpack.c.b16 %v2419, %v2419
      %v2452 = vpack.c.b16 %v2420, %v2420
      %v2453 = vpack.c.b16 %v2421, %v2421
      %v2454 = vpack.c.b16 %v2422, %v2422
      %v2455 = vpack.c.b16 %v2423, %v2423
      %v2456 = vpack.c.b16 %v2424, %v2424
      %v2457 = vpack.c.b16 %v2425, %v2425
      %v2458 = vpack.c.b16 %v2426, %v2426
      %v2459 = vpack.c.b16 %v2427, %v2427
      %v2460 = vpack.c.b16 %v2428, %v2428
      %v2461 = vpack.c.b16 %v2429, %v2429
      %v2462 = vpack.c.b16 %v2430, %v2430
      %v2463 = vpack.c.b16 %v2431, %v2431
      %v2464 = vpack.c.b16 %v2432, %v2432
      %v2465 = vpack.c.b16 %v2433, %v2433
      %v2466 = vpack.c.b16 %v2434, %v2434
      %v2467 = vpack.c.b16 %v2435, %v2435
      %v2468 = vpack.c.b16 %v2436, %v2436
      %v2469 = vpack.c.b16 %v2437, %v2437
      %v2470 = vpack.c.b16 %v2438, %v2438
      %v2471 = vpack.c.b16 %v2439, %v2439
      %v2472 = vpack.c.b16 %v2440, %v2440
      %v2473 = vpack.c.b16 %v2441, %v2441
      %v2474 = vpack.c.b16 %v2442, %v2442
      %v2475 = vpack.c.b16 %v2443, %v2443
      %2508 = vst [vmem:[#allocation3 + $0xc] sm:$0xf] %v2444
      %2509 = vst [vmem:[#allocation3 + $0x10] sm:$0xf] %v2445
      %2510 = vst [vmem:[#allocation3 + $0x14] sm:$0xf] %v2446
      %2511 = vst [vmem:[#allocation3 + $0x18] sm:$0xf] %v2447
      %2512 = vst [vmem:[#allocation3 + $0x1c] sm:$0xf] %v2448
      %2513 = vst [vmem:[#allocation3 + $0x20] sm:$0xf] %v2449
      %2514 = vst [vmem:[#allocation3 + $0x24] sm:$0xf] %v2450
      %2515 = vst [vmem:[#allocation3 + $0x28] sm:$0xf] %v2451
      %2516 = vst [vmem:[#allocation3 + $0x2c] sm:$0xf] %v2452
      %2517 = vst [vmem:[#allocation3 + $0x30] sm:$0xf] %v2453
      %2518 = vst [vmem:[#allocation3 + $0x34] sm:$0xf] %v2454
      %2519 = vst [vmem:[#allocation3 + $0x38] sm:$0xf] %v2455
      %2520 = vst [vmem:[#allocation3 + $0x3c] sm:$0xf] %v2456
      %2521 = vst [vmem:[#allocation3 + $0x40] sm:$0xf] %v2457
      %2522 = vst [vmem:[#allocation3 + $0x44] sm:$0xf] %v2458
      %2523 = vst [vmem:[#allocation3 + $0x48] sm:$0xf] %v2459
      %2524 = vst [vmem:[#allocation3 + $0x4c] sm:$0xf] %v2460
      %2525 = vst [vmem:[#allocation3 + $0x50] sm:$0xf] %v2461
      %2526 = vst [vmem:[#allocation3 + $0x54] sm:$0xf] %v2462
      %2527 = vst [vmem:[#allocation3 + $0x58] sm:$0xf] %v2463
      %2528 = vst [vmem:[#allocation3 + $0x5c] sm:$0xf] %v2464
      %2529 = vst [vmem:[#allocation3 + $0x60] sm:$0xf] %v2465
      %2530 = vst [vmem:[#allocation3 + $0x64] sm:$0xf] %v2466
      %2531 = vst [vmem:[#allocation3 + $0x68] sm:$0xf] %v2467
      %2532 = vst [vmem:[#allocation3 + $0x6c] sm:$0xf] %v2468
      %2533 = vst [vmem:[#allocation3 + $0x70] sm:$0xf] %v2469
      %2534 = vst [vmem:[#allocation3 + $0x74] sm:$0xf] %v2470
      %2535 = vst [vmem:[#allocation3 + $0x78] sm:$0xf] %v2471
      %2536 = vst [vmem:[#allocation3 + $0x7c] sm:$0xf] %v2472
      %2537 = vst [vmem:[#allocation3 + $0x80] sm:$0xf] %v2473
      %2538 = vst [vmem:[#allocation3 + $0x84] sm:$0xf] %v2474
      %2539 = vst [vmem:[#allocation3 + $0x88] sm:$0xf] %v2475
      %2540 = vst [vmem:[#allocation4] sm:$0xf] 0
      %2541 = vst [vmem:[#allocation4 + $0x4] sm:$0xf] 0
      %vm2542 = vsmask.f32 3328
      %vm2543 = vmand %vm1943, %vm2542
      %v2544 = vld [vmem:[#allocation4 + $0x8] sm:$0xf]
      %v2545 = vsel %vm2543, 0, %v2544
      %2546 = vst [vmem:[#allocation4 + $0x8] sm:$0xf] %v2545
      %vm2547 = vcmask 1043459
      %vm2548 = vsmask.f32 7950
      %vm2549 = vmand %vm2547, %vm2548
      %v2550 = vld [vmem:[#allocation4 + $0x88] sm:$0x8]
      %v2551 = vsel %vm2549, 0, %v2550
      %2552 = vst [vmem:[#allocation4 + $0x88] sm:$0x8] %v2551
      %2553 = vst [vmem:[#allocation4 + $0x8c] sm:$0xf] 0
      %2554 = vst [vmem:[#allocation4 + $0x90] sm:$0xf] 0
      %2555 = vst [vmem:[#allocation4 + $0x94] sm:$0xf] 0
      %v2572 = vunpack.c.l.b16 %v1918
      %v2573 = vunpack.c.h.b16 %v1918
      %v2574 = vunpack.c.l.b16 %v1919
      %v2575 = vunpack.c.h.b16 %v1919
      %v2576 = vunpack.c.l.b16 %v1920
      %v2577 = vunpack.c.h.b16 %v1920
      %v2578 = vunpack.c.l.b16 %v1921
      %v2579 = vunpack.c.h.b16 %v1921
      %v2580 = vunpack.c.l.b16 %v1922
      %v2581 = vunpack.c.h.b16 %v1922
      %v2582 = vunpack.c.l.b16 %v1923
      %v2583 = vunpack.c.h.b16 %v1923
      %v2584 = vunpack.c.l.b16 %v1924
      %v2585 = vunpack.c.h.b16 %v1924
      %v2586 = vunpack.c.l.b16 %v1925
      %v2587 = vunpack.c.h.b16 %v1925
      %v2588 = vunpack.c.l.b16 %v1926
      %v2589 = vunpack.c.h.b16 %v1926
      %v2590 = vunpack.c.l.b16 %v1927
      %v2591 = vunpack.c.h.b16 %v1927
      %v2592 = vunpack.c.l.b16 %v1928
      %v2593 = vunpack.c.h.b16 %v1928
      %v2594 = vunpack.c.l.b16 %v1929
      %v2595 = vunpack.c.h.b16 %v1929
      %v2596 = vunpack.c.l.b16 %v1930
      %v2597 = vunpack.c.h.b16 %v1930
      %v2598 = vunpack.c.l.b16 %v1931
      %v2599 = vunpack.c.h.b16 %v1931
      %v2600 = vunpack.c.l.b16 %v1932
      %v2601 = vunpack.c.h.b16 %v1932
      %v2602 = vunpack.c.l.b16 %v1933
      %v2603 = vunpack.c.h.b16 %v1933
      %v2604 = vpack.c.b16 %v2572, %v2572
      %v2605 = vpack.c.b16 %v2573, %v2573
      %v2606 = vpack.c.b16 %v2574, %v2574
      %v2607 = vpack.c.b16 %v2575, %v2575
      %v2608 = vpack.c.b16 %v2576, %v2576
      %v2609 = vpack.c.b16 %v2577, %v2577
      %v2610 = vpack.c.b16 %v2578, %v2578
      %v2611 = vpack.c.b16 %v2579, %v2579
      %v2612 = vpack.c.b16 %v2580, %v2580
      %v2613 = vpack.c.b16 %v2581, %v2581
      %v2614 = vpack.c.b16 %v2582, %v2582
      %v2615 = vpack.c.b16 %v2583, %v2583
      %v2616 = vpack.c.b16 %v2584, %v2584
      %v2617 = vpack.c.b16 %v2585, %v2585
      %v2618 = vpack.c.b16 %v2586, %v2586
      %v2619 = vpack.c.b16 %v2587, %v2587
      %v2620 = vpack.c.b16 %v2588, %v2588
      %v2621 = vpack.c.b16 %v2589, %v2589
      %v2622 = vpack.c.b16 %v2590, %v2590
      %v2623 = vpack.c.b16 %v2591, %v2591
      %v2624 = vpack.c.b16 %v2592, %v2592
      %v2625 = vpack.c.b16 %v2593, %v2593
      %v2626 = vpack.c.b16 %v2594, %v2594
      %v2627 = vpack.c.b16 %v2595, %v2595
      %v2628 = vpack.c.b16 %v2596, %v2596
      %v2629 = vpack.c.b16 %v2597, %v2597
      %v2630 = vpack.c.b16 %v2598, %v2598
      %v2631 = vpack.c.b16 %v2599, %v2599
      %v2632 = vpack.c.b16 %v2600, %v2600
      %v2633 = vpack.c.b16 %v2601, %v2601
      %v2634 = vpack.c.b16 %v2602, %v2602
      %v2635 = vpack.c.b16 %v2603, %v2603
      %vm2636 = vsmask.f32 7440
      %vm2637 = vmor %vm2542, %vm2636
      %v2639 = vshll.u32 %v2604, 16
      %v2641 = vrot.slane %v2639, 5
      %v2642 = vshrl.u32 %v2604, 16
      %v2644 = vrot.slane %v2642, 4
      %v2645 = vor.u32 %v2644, %v2641
      %v2646 = vrot.slane %v2645, 4
      %v2648 = vshll.u32 %v2605, 16
      %v2650 = vrot.slane %v2648, 5
      %v2651 = vsel %vm2637, %v2646, %v2650
      %v2652 = vshrl.u32 %v2605, 16
      %v2654 = vrot.slane %v2652, 4
      %v2655 = vor.u32 %v2654, %v2650
      %v2656 = vrot.slane %v2655, 4
      %v2658 = vshll.u32 %v2606, 16
      %v2660 = vrot.slane %v2658, 5
      %v2661 = vsel %vm2637, %v2656, %v2660
      %v2662 = vshrl.u32 %v2606, 16
      %v2664 = vrot.slane %v2662, 4
      %v2665 = vor.u32 %v2664, %v2660
      %v2666 = vrot.slane %v2665, 4
      %v2668 = vshll.u32 %v2607, 16
      %v2670 = vrot.slane %v2668, 5
      %v2671 = vsel %vm2637, %v2666, %v2670
      %v2672 = vshrl.u32 %v2607, 16
      %v2674 = vrot.slane %v2672, 4
      %v2675 = vor.u32 %v2674, %v2670
      %v2676 = vrot.slane %v2675, 4
      %v2678 = vshll.u32 %v2608, 16
      %v2680 = vrot.slane %v2678, 5
      %v2681 = vsel %vm2637, %v2676, %v2680
      %v2682 = vshrl.u32 %v2608, 16
      %v2684 = vrot.slane %v2682, 4
      %v2685 = vor.u32 %v2684, %v2680
      %v2686 = vrot.slane %v2685, 4
      %v2688 = vshll.u32 %v2609, 16
      %v2690 = vrot.slane %v2688, 5
      %v2691 = vsel %vm2637, %v2686, %v2690
      %v2692 = vshrl.u32 %v2609, 16
      %v2694 = vrot.slane %v2692, 4
      %v2695 = vor.u32 %v2694, %v2690
      %v2696 = vrot.slane %v2695, 4
      %v2698 = vshll.u32 %v2610, 16
      %v2700 = vrot.slane %v2698, 5
      %v2701 = vsel %vm2637, %v2696, %v2700
      %v2702 = vshrl.u32 %v2610, 16
      %v2704 = vrot.slane %v2702, 4
      %v2705 = vor.u32 %v2704, %v2700
      %v2706 = vrot.slane %v2705, 4
      %v2708 = vshll.u32 %v2611, 16
      %v2710 = vrot.slane %v2708, 5
      %v2711 = vsel %vm2637, %v2706, %v2710
      %v2712 = vshrl.u32 %v2611, 16
      %v2714 = vrot.slane %v2712, 4
      %v2715 = vor.u32 %v2714, %v2710
      %v2716 = vrot.slane %v2715, 4
      %v2718 = vshll.u32 %v2612, 16
      %v2720 = vrot.slane %v2718, 5
      %v2721 = vsel %vm2637, %v2716, %v2720
      %v2722 = vshrl.u32 %v2612, 16
      %v2724 = vrot.slane %v2722, 4
      %v2725 = vor.u32 %v2724, %v2720
      %v2726 = vrot.slane %v2725, 4
      %v2728 = vshll.u32 %v2613, 16
      %v2730 = vrot.slane %v2728, 5
      %v2731 = vsel %vm2637, %v2726, %v2730
      %v2732 = vshrl.u32 %v2613, 16
      %v2734 = vrot.slane %v2732, 4
      %v2735 = vor.u32 %v2734, %v2730
      %v2736 = vrot.slane %v2735, 4
      %v2738 = vshll.u32 %v2614, 16
      %v2740 = vrot.slane %v2738, 5
      %v2741 = vsel %vm2637, %v2736, %v2740
      %v2742 = vshrl.u32 %v2614, 16
      %v2744 = vrot.slane %v2742, 4
      %v2745 = vor.u32 %v2744, %v2740
      %v2746 = vrot.slane %v2745, 4
      %v2748 = vshll.u32 %v2615, 16
      %v2750 = vrot.slane %v2748, 5
      %v2751 = vsel %vm2637, %v2746, %v2750
      %v2752 = vshrl.u32 %v2615, 16
      %v2754 = vrot.slane %v2752, 4
      %v2755 = vor.u32 %v2754, %v2750
      %v2756 = vrot.slane %v2755, 4
      %v2758 = vshll.u32 %v2616, 16
      %v2760 = vrot.slane %v2758, 5
      %v2761 = vsel %vm2637, %v2756, %v2760
      %v2762 = vshrl.u32 %v2616, 16
      %v2764 = vrot.slane %v2762, 4
      %v2765 = vor.u32 %v2764, %v2760
      %v2766 = vrot.slane %v2765, 4
      %v2768 = vshll.u32 %v2617, 16
      %v2770 = vrot.slane %v2768, 5
      %v2771 = vsel %vm2637, %v2766, %v2770
      %v2772 = vshrl.u32 %v2617, 16
      %v2774 = vrot.slane %v2772, 4
      %v2775 = vor.u32 %v2774, %v2770
      %v2776 = vrot.slane %v2775, 4
      %v2778 = vshll.u32 %v2618, 16
      %v2780 = vrot.slane %v2778, 5
      %v2781 = vsel %vm2637, %v2776, %v2780
      %v2782 = vshrl.u32 %v2618, 16
      %v2784 = vrot.slane %v2782, 4
      %v2785 = vor.u32 %v2784, %v2780
      %v2786 = vrot.slane %v2785, 4
      %v2788 = vshll.u32 %v2619, 16
      %v2790 = vrot.slane %v2788, 5
      %v2791 = vsel %vm2637, %v2786, %v2790
      %v2792 = vshrl.u32 %v2619, 16
      %v2794 = vrot.slane %v2792, 4
      %v2795 = vor.u32 %v2794, %v2790
      %v2796 = vrot.slane %v2795, 4
      %v2798 = vshll.u32 %v2620, 16
      %v2800 = vrot.slane %v2798, 5
      %v2801 = vsel %vm2637, %v2796, %v2800
      %v2802 = vshrl.u32 %v2620, 16
      %v2804 = vrot.slane %v2802, 4
      %v2805 = vor.u32 %v2804, %v2800
      %v2806 = vrot.slane %v2805, 4
      %v2808 = vshll.u32 %v2621, 16
      %v2810 = vrot.slane %v2808, 5
      %v2811 = vsel %vm2637, %v2806, %v2810
      %v2812 = vshrl.u32 %v2621, 16
      %v2814 = vrot.slane %v2812, 4
      %v2815 = vor.u32 %v2814, %v2810
      %v2816 = vrot.slane %v2815, 4
      %v2818 = vshll.u32 %v2622, 16
      %v2820 = vrot.slane %v2818, 5
      %v2821 = vsel %vm2637, %v2816, %v2820
      %v2822 = vshrl.u32 %v2622, 16
      %v2824 = vrot.slane %v2822, 4
      %v2825 = vor.u32 %v2824, %v2820
      %v2826 = vrot.slane %v2825, 4
      %v2828 = vshll.u32 %v2623, 16
      %v2830 = vrot.slane %v2828, 5
      %v2831 = vsel %vm2637, %v2826, %v2830
      %v2832 = vshrl.u32 %v2623, 16
      %v2834 = vrot.slane %v2832, 4
      %v2835 = vor.u32 %v2834, %v2830
      %v2836 = vrot.slane %v2835, 4
      %v2838 = vshll.u32 %v2624, 16
      %v2840 = vrot.slane %v2838, 5
      %v2841 = vsel %vm2637, %v2836, %v2840
      %v2842 = vshrl.u32 %v2624, 16
      %v2844 = vrot.slane %v2842, 4
      %v2845 = vor.u32 %v2844, %v2840
      %v2846 = vrot.slane %v2845, 4
      %v2848 = vshll.u32 %v2625, 16
      %v2850 = vrot.slane %v2848, 5
      %v2851 = vsel %vm2637, %v2846, %v2850
      %v2852 = vshrl.u32 %v2625, 16
      %v2854 = vrot.slane %v2852, 4
      %v2855 = vor.u32 %v2854, %v2850
      %v2856 = vrot.slane %v2855, 4
      %v2858 = vshll.u32 %v2626, 16
      %v2860 = vrot.slane %v2858, 5
      %v2861 = vsel %vm2637, %v2856, %v2860
      %v2862 = vshrl.u32 %v2626, 16
      %v2864 = vrot.slane %v2862, 4
      %v2865 = vor.u32 %v2864, %v2860
      %v2866 = vrot.slane %v2865, 4
      %v2868 = vshll.u32 %v2627, 16
      %v2870 = vrot.slane %v2868, 5
      %v2871 = vsel %vm2637, %v2866, %v2870
      %v2872 = vshrl.u32 %v2627, 16
      %v2874 = vrot.slane %v2872, 4
      %v2875 = vor.u32 %v2874, %v2870
      %v2876 = vrot.slane %v2875, 4
      %v2878 = vshll.u32 %v2628, 16
      %v2880 = vrot.slane %v2878, 5
      %v2881 = vsel %vm2637, %v2876, %v2880
      %v2882 = vshrl.u32 %v2628, 16
      %v2884 = vrot.slane %v2882, 4
      %v2885 = vor.u32 %v2884, %v2880
      %v2886 = vrot.slane %v2885, 4
      %v2888 = vshll.u32 %v2629, 16
      %v2890 = vrot.slane %v2888, 5
      %v2891 = vsel %vm2637, %v2886, %v2890
      %v2892 = vshrl.u32 %v2629, 16
      %v2894 = vrot.slane %v2892, 4
      %v2895 = vor.u32 %v2894, %v2890
      %v2896 = vrot.slane %v2895, 4
      %v2898 = vshll.u32 %v2630, 16
      %v2900 = vrot.slane %v2898, 5
      %v2901 = vsel %vm2637, %v2896, %v2900
      %v2902 = vshrl.u32 %v2630, 16
      %v2904 = vrot.slane %v2902, 4
      %v2905 = vor.u32 %v2904, %v2900
      %v2906 = vrot.slane %v2905, 4
      %v2908 = vshll.u32 %v2631, 16
      %v2910 = vrot.slane %v2908, 5
      %v2911 = vsel %vm2637, %v2906, %v2910
      %v2912 = vshrl.u32 %v2631, 16
      %v2914 = vrot.slane %v2912, 4
      %v2915 = vor.u32 %v2914, %v2910
      %v2916 = vrot.slane %v2915, 4
      %v2918 = vshll.u32 %v2632, 16
      %v2920 = vrot.slane %v2918, 5
      %v2921 = vsel %vm2637, %v2916, %v2920
      %v2922 = vshrl.u32 %v2632, 16
      %v2924 = vrot.slane %v2922, 4
      %v2925 = vor.u32 %v2924, %v2920
      %v2926 = vrot.slane %v2925, 4
      %v2928 = vshll.u32 %v2633, 16
      %v2930 = vrot.slane %v2928, 5
      %v2931 = vsel %vm2637, %v2926, %v2930
      %v2932 = vshrl.u32 %v2633, 16
      %v2934 = vrot.slane %v2932, 4
      %v2935 = vor.u32 %v2934, %v2930
      %v2936 = vrot.slane %v2935, 4
      %v2938 = vshll.u32 %v2634, 16
      %v2940 = vrot.slane %v2938, 5
      %v2941 = vsel %vm2637, %v2936, %v2940
      %v2942 = vshrl.u32 %v2634, 16
      %v2944 = vrot.slane %v2942, 4
      %v2945 = vor.u32 %v2944, %v2940
      %v2946 = vrot.slane %v2945, 4
      %v2948 = vshll.u32 %v2635, 16
      %v2950 = vrot.slane %v2948, 5
      %v2951 = vsel %vm2637, %v2946, %v2950
      %v2952 = vshrl.u32 %v2635, 16
      %v2954 = vrot.slane %v2952, 4
      %v2955 = vor.u32 %v2954, %v2950
      %v2956 = vrot.slane %v2955, 4
      %v2990 = vld [vmem:[#allocation4 + $0x8] sm:$0x8]
      %v2991 = vsel %vm2549, %v2641, %v2990
      %2992 = vst [vmem:[#allocation4 + $0x8] sm:$0x8] %v2991
      %2993 = vst [vmem:[#allocation4 + $0xc] sm:$0xf] %v2651
      %2994 = vst [vmem:[#allocation4 + $0x10] sm:$0xf] %v2661
      %2995 = vst [vmem:[#allocation4 + $0x14] sm:$0xf] %v2671
      %2996 = vst [vmem:[#allocation4 + $0x18] sm:$0xf] %v2681
      %2997 = vst [vmem:[#allocation4 + $0x1c] sm:$0xf] %v2691
      %2998 = vst [vmem:[#allocation4 + $0x20] sm:$0xf] %v2701
      %2999 = vst [vmem:[#allocation4 + $0x24] sm:$0xf] %v2711
      %3000 = vst [vmem:[#allocation4 + $0x28] sm:$0xf] %v2721
      %3001 = vst [vmem:[#allocation4 + $0x2c] sm:$0xf] %v2731
      %3002 = vst [vmem:[#allocation4 + $0x30] sm:$0xf] %v2741
      %3003 = vst [vmem:[#allocation4 + $0x34] sm:$0xf] %v2751
      %3004 = vst [vmem:[#allocation4 + $0x38] sm:$0xf] %v2761
      %3005 = vst [vmem:[#allocation4 + $0x3c] sm:$0xf] %v2771
      %3006 = vst [vmem:[#allocation4 + $0x40] sm:$0xf] %v2781
      %3007 = vst [vmem:[#allocation4 + $0x44] sm:$0xf] %v2791
      %3008 = vst [vmem:[#allocation4 + $0x48] sm:$0xf] %v2801
      %3009 = vst [vmem:[#allocation4 + $0x4c] sm:$0xf] %v2811
      %3010 = vst [vmem:[#allocation4 + $0x50] sm:$0xf] %v2821
      %3011 = vst [vmem:[#allocation4 + $0x54] sm:$0xf] %v2831
      %3012 = vst [vmem:[#allocation4 + $0x58] sm:$0xf] %v2841
      %3013 = vst [vmem:[#allocation4 + $0x5c] sm:$0xf] %v2851
      %3014 = vst [vmem:[#allocation4 + $0x60] sm:$0xf] %v2861
      %3015 = vst [vmem:[#allocation4 + $0x64] sm:$0xf] %v2871
      %3016 = vst [vmem:[#allocation4 + $0x68] sm:$0xf] %v2881
      %3017 = vst [vmem:[#allocation4 + $0x6c] sm:$0xf] %v2891
      %3018 = vst [vmem:[#allocation4 + $0x70] sm:$0xf] %v2901
      %3019 = vst [vmem:[#allocation4 + $0x74] sm:$0xf] %v2911
      %3020 = vst [vmem:[#allocation4 + $0x78] sm:$0xf] %v2921
      %3021 = vst [vmem:[#allocation4 + $0x7c] sm:$0xf] %v2931
      %3022 = vst [vmem:[#allocation4 + $0x80] sm:$0xf] %v2941
      %3023 = vst [vmem:[#allocation4 + $0x84] sm:$0xf] %v2951
      %v3024 = vld [vmem:[#allocation4 + $0x88] sm:$0xf]
      %v3025 = vsel %vm2543, %v2956, %v3024
      %3026 = vst [vmem:[#allocation4 + $0x88] sm:$0xf] %v3025
      %v3027 = vld [vmem:[#allocation2 + $0x4] sm:$0xf]
      %v3028 = vld [vmem:[#allocation2 + $0x8] sm:$0xf]
      %v3029 = vld [vmem:[#allocation2 + $0xc] sm:$0xf]
      %v3030 = vld [vmem:[#allocation2 + $0x10] sm:$0xf]
      %v3031 = vld [vmem:[#allocation2 + $0x14] sm:$0xf]
      %v3032 = vld [vmem:[#allocation2 + $0x18] sm:$0xf]
      %v3033 = vld [vmem:[#allocation2 + $0x1c] sm:$0xf]
      %v3034 = vld [vmem:[#allocation2 + $0x20] sm:$0xf]
      %v3035 = vld [vmem:[#allocation2 + $0x24] sm:$0xf]
      %v3036 = vld [vmem:[#allocation2 + $0x28] sm:$0xf]
      %v3037 = vld [vmem:[#allocation2 + $0x2c] sm:$0xf]
      %v3038 = vld [vmem:[#allocation2 + $0x30] sm:$0xf]
      %v3039 = vld [vmem:[#allocation2 + $0x34] sm:$0xf]
      %v3040 = vld [vmem:[#allocation2 + $0x38] sm:$0xf]
      %v3041 = vld [vmem:[#allocation2 + $0x3c] sm:$0xf]
      %v3042 = vld [vmem:[#allocation2 + $0x40] sm:$0xf]
      %v3043 = vld [vmem:[#allocation2 + $0x44] sm:$0xf]
      %v3044 = vld [vmem:[#allocation2 + $0x48] sm:$0xf]
      %v3045 = vld [vmem:[#allocation2 + $0x4c] sm:$0xf]
      %v3046 = vld [vmem:[#allocation2 + $0x50] sm:$0xf]
      %v3047 = vld [vmem:[#allocation2 + $0x54] sm:$0xf]
      %v3048 = vld [vmem:[#allocation2 + $0x58] sm:$0xf]
      %v3049 = vld [vmem:[#allocation2 + $0x5c] sm:$0xf]
      %v3050 = vld [vmem:[#allocation2 + $0x60] sm:$0xf]
      %v3051 = vld [vmem:[#allocation2 + $0x64] sm:$0xf]
      %v3052 = vld [vmem:[#allocation2 + $0x68] sm:$0xf]
      %v3053 = vld [vmem:[#allocation2 + $0x6c] sm:$0xf]
      %v3054 = vld [vmem:[#allocation2 + $0x70] sm:$0xf]
      %v3055 = vld [vmem:[#allocation2 + $0x74] sm:$0xf]
      %v3056 = vld [vmem:[#allocation2 + $0x78] sm:$0xf]
      %v3057 = vld [vmem:[#allocation2 + $0x7c] sm:$0xf]
      %v3058 = vld [vmem:[#allocation2 + $0x80] sm:$0xf]
      %3059 = vst [vmem:[#allocation5] sm:$0xf] %v3027
      %3060 = vst [vmem:[#allocation5 + $0x24] sm:$0xf] %v3028
      %3061 = vst [vmem:[#allocation5 + $0x48] sm:$0xf] %v3029
      %3062 = vst [vmem:[#allocation5 + $0x6c] sm:$0xf] %v3030
      %3063 = vst [vmem:[#allocation5 + $0x90] sm:$0xf] %v3031
      %3064 = vst [vmem:[#allocation5 + $0xb4] sm:$0xf] %v3032
      %3065 = vst [vmem:[#allocation5 + $0xd8] sm:$0xf] %v3033
      %3066 = vst [vmem:[#allocation5 + $0xfc] sm:$0xf] %v3034
      %3067 = vst [vmem:[#allocation5 + $0x120] sm:$0xf] %v3035
      %3068 = vst [vmem:[#allocation5 + $0x144] sm:$0xf] %v3036
      %3069 = vst [vmem:[#allocation5 + $0x168] sm:$0xf] %v3037
      %3070 = vst [vmem:[#allocation5 + $0x18c] sm:$0xf] %v3038
      %3071 = vst [vmem:[#allocation5 + $0x1b0] sm:$0xf] %v3039
      %3072 = vst [vmem:[#allocation5 + $0x1d4] sm:$0xf] %v3040
      %3073 = vst [vmem:[#allocation5 + $0x1f8] sm:$0xf] %v3041
      %3074 = vst [vmem:[#allocation5 + $0x21c] sm:$0xf] %v3042
      %3075 = vst [vmem:[#allocation5 + $0x240] sm:$0xf] %v3043
      %3076 = vst [vmem:[#allocation5 + $0x264] sm:$0xf] %v3044
      %3077 = vst [vmem:[#allocation5 + $0x288] sm:$0xf] %v3045
      %3078 = vst [vmem:[#allocation5 + $0x2ac] sm:$0xf] %v3046
      %3079 = vst [vmem:[#allocation5 + $0x2d0] sm:$0xf] %v3047
      %3080 = vst [vmem:[#allocation5 + $0x2f4] sm:$0xf] %v3048
      %3081 = vst [vmem:[#allocation5 + $0x318] sm:$0xf] %v3049
      %3082 = vst [vmem:[#allocation5 + $0x33c] sm:$0xf] %v3050
      %3083 = vst [vmem:[#allocation5 + $0x360] sm:$0xf] %v3051
      %3084 = vst [vmem:[#allocation5 + $0x384] sm:$0xf] %v3052
      %3085 = vst [vmem:[#allocation5 + $0x3a8] sm:$0xf] %v3053
      %3086 = vst [vmem:[#allocation5 + $0x3cc] sm:$0xf] %v3054
      %3087 = vst [vmem:[#allocation5 + $0x3f0] sm:$0xf] %v3055
      %3088 = vst [vmem:[#allocation5 + $0x414] sm:$0xf] %v3056
      %3089 = vst [vmem:[#allocation5 + $0x438] sm:$0xf] %v3057
      %3090 = vst [vmem:[#allocation5 + $0x45c] sm:$0xf] %v3058
      %v3091 = vld [vmem:[#allocation3 + $0x4] sm:$0xf]
      %v3092 = vld [vmem:[#allocation3 + $0x8] sm:$0xf]
      %v3093 = vld [vmem:[#allocation3 + $0xc] sm:$0xf]
      %v3094 = vld [vmem:[#allocation3 + $0x10] sm:$0xf]
      %v3095 = vld [vmem:[#allocation3 + $0x14] sm:$0xf]
      %v3096 = vld [vmem:[#allocation3 + $0x18] sm:$0xf]
      %v3097 = vld [vmem:[#allocation3 + $0x1c] sm:$0xf]
      %v3098 = vld [vmem:[#allocation3 + $0x20] sm:$0xf]
      %v3099 = vld [vmem:[#allocation3 + $0x24] sm:$0xf]
      %v3100 = vld [vmem:[#allocation3 + $0x28] sm:$0xf]
      %v3101 = vld [vmem:[#allocation3 + $0x2c] sm:$0xf]
      %v3102 = vld [vmem:[#allocation3 + $0x30] sm:$0xf]
      %v3103 = vld [vmem:[#allocation3 + $0x34] sm:$0xf]
      %v3104 = vld [vmem:[#allocation3 + $0x38] sm:$0xf]
      %v3105 = vld [vmem:[#allocation3 + $0x3c] sm:$0xf]
      %v3106 = vld [vmem:[#allocation3 + $0x40] sm:$0xf]
      %v3107 = vld [vmem:[#allocation3 + $0x44] sm:$0xf]
      %v3108 = vld [vmem:[#allocation3 + $0x48] sm:$0xf]
      %v3109 = vld [vmem:[#allocation3 + $0x4c] sm:$0xf]
      %v3110 = vld [vmem:[#allocation3 + $0x50] sm:$0xf]
      %v3111 = vld [vmem:[#allocation3 + $0x54] sm:$0xf]
      %v3112 = vld [vmem:[#allocation3 + $0x58] sm:$0xf]
      %v3113 = vld [vmem:[#allocation3 + $0x5c] sm:$0xf]
      %v3114 = vld [vmem:[#allocation3 + $0x60] sm:$0xf]
      %v3115 = vld [vmem:[#allocation3 + $0x64] sm:$0xf]
      %v3116 = vld [vmem:[#allocation3 + $0x68] sm:$0xf]
      %v3117 = vld [vmem:[#allocation3 + $0x6c] sm:$0xf]
      %v3118 = vld [vmem:[#allocation3 + $0x70] sm:$0xf]
      %v3119 = vld [vmem:[#allocation3 + $0x74] sm:$0xf]
      %v3120 = vld [vmem:[#allocation3 + $0x78] sm:$0xf]
      %v3121 = vld [vmem:[#allocation3 + $0x7c] sm:$0xf]
      %v3122 = vld [vmem:[#allocation3 + $0x80] sm:$0xf]
      %3123 = vst [vmem:[#allocation5 + $0x4] sm:$0xf] %v3091
      %3124 = vst [vmem:[#allocation5 + $0x28] sm:$0xf] %v3092
      %3125 = vst [vmem:[#allocation5 + $0x4c] sm:$0xf] %v3093
      %3126 = vst [vmem:[#allocation5 + $0x70] sm:$0xf] %v3094
      %3127 = vst [vmem:[#allocation5 + $0x94] sm:$0xf] %v3095
      %3128 = vst [vmem:[#allocation5 + $0xb8] sm:$0xf] %v3096
      %3129 = vst [vmem:[#allocation5 + $0xdc] sm:$0xf] %v3097
      %3130 = vst [vmem:[#allocation5 + $0x100] sm:$0xf] %v3098
      %3131 = vst [vmem:[#allocation5 + $0x124] sm:$0xf] %v3099
      %3132 = vst [vmem:[#allocation5 + $0x148] sm:$0xf] %v3100
      %3133 = vst [vmem:[#allocation5 + $0x16c] sm:$0xf] %v3101
      %3134 = vst [vmem:[#allocation5 + $0x190] sm:$0xf] %v3102
      %3135 = vst [vmem:[#allocation5 + $0x1b4] sm:$0xf] %v3103
      %3136 = vst [vmem:[#allocation5 + $0x1d8] sm:$0xf] %v3104
      %3137 = vst [vmem:[#allocation5 + $0x1fc] sm:$0xf] %v3105
      %3138 = vst [vmem:[#allocation5 + $0x220] sm:$0xf] %v3106
      %3139 = vst [vmem:[#allocation5 + $0x244] sm:$0xf] %v3107
      %3140 = vst [vmem:[#allocation5 + $0x268] sm:$0xf] %v3108
      %3141 = vst [vmem:[#allocation5 + $0x28c] sm:$0xf] %v3109
      %3142 = vst [vmem:[#allocation5 + $0x2b0] sm:$0xf] %v3110
      %3143 = vst [vmem:[#allocation5 + $0x2d4] sm:$0xf] %v3111
      %3144 = vst [vmem:[#allocation5 + $0x2f8] sm:$0xf] %v3112
      %3145 = vst [vmem:[#allocation5 + $0x31c] sm:$0xf] %v3113
      %3146 = vst [vmem:[#allocation5 + $0x340] sm:$0xf] %v3114
      %3147 = vst [vmem:[#allocation5 + $0x364] sm:$0xf] %v3115
      %3148 = vst [vmem:[#allocation5 + $0x388] sm:$0xf] %v3116
      %3149 = vst [vmem:[#allocation5 + $0x3ac] sm:$0xf] %v3117
      %3150 = vst [vmem:[#allocation5 + $0x3d0] sm:$0xf] %v3118
      %3151 = vst [vmem:[#allocation5 + $0x3f4] sm:$0xf] %v3119
      %3152 = vst [vmem:[#allocation5 + $0x418] sm:$0xf] %v3120
      %3153 = vst [vmem:[#allocation5 + $0x43c] sm:$0xf] %v3121
      %3154 = vst [vmem:[#allocation5 + $0x460] sm:$0xf] %v3122
      %v3155 = vld [vmem:[#allocation4 + $0x4] sm:$0xf]
      %v3156 = vld [vmem:[#allocation4 + $0x8] sm:$0xf]
      %v3157 = vld [vmem:[#allocation4 + $0xc] sm:$0xf]
      %v3158 = vld [vmem:[#allocation4 + $0x10] sm:$0xf]
      %v3159 = vld [vmem:[#allocation4 + $0x14] sm:$0xf]
      %v3160 = vld [vmem:[#allocation4 + $0x18] sm:$0xf]
      %v3161 = vld [vmem:[#allocation4 + $0x1c] sm:$0xf]
      %v3162 = vld [vmem:[#allocation4 + $0x20] sm:$0xf]
      %v3163 = vld [vmem:[#allocation4 + $0x24] sm:$0xf]
      %v3164 = vld [vmem:[#allocation4 + $0x28] sm:$0xf]
      %v3165 = vld [vmem:[#allocation4 + $0x2c] sm:$0xf]
      %v3166 = vld [vmem:[#allocation4 + $0x30] sm:$0xf]
      %v3167 = vld [vmem:[#allocation4 + $0x34] sm:$0xf]
      %v3168 = vld [vmem:[#allocation4 + $0x38] sm:$0xf]
      %v3169 = vld [vmem:[#allocation4 + $0x3c] sm:$0xf]
      %v3170 = vld [vmem:[#allocation4 + $0x40] sm:$0xf]
      %v3171 = vld [vmem:[#allocation4 + $0x44] sm:$0xf]
      %v3172 = vld [vmem:[#allocation4 + $0x48] sm:$0xf]
      %v3173 = vld [vmem:[#allocation4 + $0x4c] sm:$0xf]
      %v3174 = vld [vmem:[#allocation4 + $0x50] sm:$0xf]
      %v3175 = vld [vmem:[#allocation4 + $0x54] sm:$0xf]
      %v3176 = vld [vmem:[#allocation4 + $0x58] sm:$0xf]
      %v3177 = vld [vmem:[#allocation4 + $0x5c] sm:$0xf]
      %v3178 = vld [vmem:[#allocation4 + $0x60] sm:$0xf]
      %v3179 = vld [vmem:[#allocation4 + $0x64] sm:$0xf]
      %v3180 = vld [vmem:[#allocation4 + $0x68] sm:$0xf]
      %v3181 = vld [vmem:[#allocation4 + $0x6c] sm:$0xf]
      %v3182 = vld [vmem:[#allocation4 + $0x70] sm:$0xf]
      %v3183 = vld [vmem:[#allocation4 + $0x74] sm:$0xf]
      %v3184 = vld [vmem:[#allocation4 + $0x78] sm:$0xf]
      %v3185 = vld [vmem:[#allocation4 + $0x7c] sm:$0xf]
      %v3186 = vld [vmem:[#allocation4 + $0x80] sm:$0xf]
      %3187 = vst [vmem:[#allocation5 + $0x8] sm:$0xf] %v3155
      %3188 = vst [vmem:[#allocation5 + $0x2c] sm:$0xf] %v3156
      %3189 = vst [vmem:[#allocation5 + $0x50] sm:$0xf] %v3157
      %3190 = vst [vmem:[#allocation5 + $0x74] sm:$0xf] %v3158
      %3191 = vst [vmem:[#allocation5 + $0x98] sm:$0xf] %v3159
      %3192 = vst [vmem:[#allocation5 + $0xbc] sm:$0xf] %v3160
      %3193 = vst [vmem:[#allocation5 + $0xe0] sm:$0xf] %v3161
      %3194 = vst [vmem:[#allocation5 + $0x104] sm:$0xf] %v3162
      %3195 = vst [vmem:[#allocation5 + $0x128] sm:$0xf] %v3163
      %3196 = vst [vmem:[#allocation5 + $0x14c] sm:$0xf] %v3164
      %3197 = vst [vmem:[#allocation5 + $0x170] sm:$0xf] %v3165
      %3198 = vst [vmem:[#allocation5 + $0x194] sm:$0xf] %v3166
      %3199 = vst [vmem:[#allocation5 + $0x1b8] sm:$0xf] %v3167
      %3200 = vst [vmem:[#allocation5 + $0x1dc] sm:$0xf] %v3168
      %3201 = vst [vmem:[#allocation5 + $0x200] sm:$0xf] %v3169
      %3202 = vst [vmem:[#allocation5 + $0x224] sm:$0xf] %v3170
      %3203 = vst [vmem:[#allocation5 + $0x248] sm:$0xf] %v3171
      %3204 = vst [vmem:[#allocation5 + $0x26c] sm:$0xf] %v3172
      %3205 = vst [vmem:[#allocation5 + $0x290] sm:$0xf] %v3173
      %3206 = vst [vmem:[#allocation5 + $0x2b4] sm:$0xf] %v3174
      %3207 = vst [vmem:[#allocation5 + $0x2d8] sm:$0xf] %v3175
      %3208 = vst [vmem:[#allocation5 + $0x2fc] sm:$0xf] %v3176
      %3209 = vst [vmem:[#allocation5 + $0x320] sm:$0xf] %v3177
      %3210 = vst [vmem:[#allocation5 + $0x344] sm:$0xf] %v3178
      %3211 = vst [vmem:[#allocation5 + $0x368] sm:$0xf] %v3179
      %3212 = vst [vmem:[#allocation5 + $0x38c] sm:$0xf] %v3180
      %3213 = vst [vmem:[#allocation5 + $0x3b0] sm:$0xf] %v3181
      %3214 = vst [vmem:[#allocation5 + $0x3d4] sm:$0xf] %v3182
      %3215 = vst [vmem:[#allocation5 + $0x3f8] sm:$0xf] %v3183
      %3216 = vst [vmem:[#allocation5 + $0x41c] sm:$0xf] %v3184
      %3217 = vst [vmem:[#allocation5 + $0x440] sm:$0xf] %v3185
      %3218 = vst [vmem:[#allocation5 + $0x464] sm:$0xf] %v3186
      %v3219 = vld [vmem:[#allocation2 + $0xc] sm:$0xf]
      %v3220 = vld [vmem:[#allocation2 + $0x10] sm:$0xf]
      %v3221 = vld [vmem:[#allocation2 + $0x14] sm:$0xf]
      %v3222 = vld [vmem:[#allocation2 + $0x18] sm:$0xf]
      %v3223 = vld [vmem:[#allocation2 + $0x1c] sm:$0xf]
      %v3224 = vld [vmem:[#allocation2 + $0x20] sm:$0xf]
      %v3225 = vld [vmem:[#allocation2 + $0x24] sm:$0xf]
      %v3226 = vld [vmem:[#allocation2 + $0x28] sm:$0xf]
      %v3227 = vld [vmem:[#allocation2 + $0x2c] sm:$0xf]
      %v3228 = vld [vmem:[#allocation2 + $0x30] sm:$0xf]
      %v3229 = vld [vmem:[#allocation2 + $0x34] sm:$0xf]
      %v3230 = vld [vmem:[#allocation2 + $0x38] sm:$0xf]
      %v3231 = vld [vmem:[#allocation2 + $0x3c] sm:$0xf]
      %v3232 = vld [vmem:[#allocation2 + $0x40] sm:$0xf]
      %v3233 = vld [vmem:[#allocation2 + $0x44] sm:$0xf]
      %v3234 = vld [vmem:[#allocation2 + $0x48] sm:$0xf]
      %v3235 = vld [vmem:[#allocation2 + $0x4c] sm:$0xf]
      %v3236 = vld [vmem:[#allocation2 + $0x50] sm:$0xf]
      %v3237 = vld [vmem:[#allocation2 + $0x54] sm:$0xf]
      %v3238 = vld [vmem:[#allocation2 + $0x58] sm:$0xf]
      %v3239 = vld [vmem:[#allocation2 + $0x5c] sm:$0xf]
      %v3240 = vld [vmem:[#allocation2 + $0x60] sm:$0xf]
      %v3241 = vld [vmem:[#allocation2 + $0x64] sm:$0xf]
      %v3242 = vld [vmem:[#allocation2 + $0x68] sm:$0xf]
      %v3243 = vld [vmem:[#allocation2 + $0x6c] sm:$0xf]
      %v3244 = vld [vmem:[#allocation2 + $0x70] sm:$0xf]
      %v3245 = vld [vmem:[#allocation2 + $0x74] sm:$0xf]
      %v3246 = vld [vmem:[#allocation2 + $0x78] sm:$0xf]
      %v3247 = vld [vmem:[#allocation2 + $0x7c] sm:$0xf]
      %v3248 = vld [vmem:[#allocation2 + $0x80] sm:$0xf]
      %v3249 = vld [vmem:[#allocation2 + $0x84] sm:$0xf]
      %v3250 = vld [vmem:[#allocation2 + $0x88] sm:$0xf]
      %3251 = vst [vmem:[#allocation5 + $0xc] sm:$0xf] %v3219
      %3252 = vst [vmem:[#allocation5 + $0x30] sm:$0xf] %v3220
      %3253 = vst [vmem:[#allocation5 + $0x54] sm:$0xf] %v3221
      %3254 = vst [vmem:[#allocation5 + $0x78] sm:$0xf] %v3222
      %3255 = vst [vmem:[#allocation5 + $0x9c] sm:$0xf] %v3223
      %3256 = vst [vmem:[#allocation5 + $0xc0] sm:$0xf] %v3224
      %3257 = vst [vmem:[#allocation5 + $0xe4] sm:$0xf] %v3225
      %3258 = vst [vmem:[#allocation5 + $0x108] sm:$0xf] %v3226
      %3259 = vst [vmem:[#allocation5 + $0x12c] sm:$0xf] %v3227
      %3260 = vst [vmem:[#allocation5 + $0x150] sm:$0xf] %v3228
      %3261 = vst [vmem:[#allocation5 + $0x174] sm:$0xf] %v3229
      %3262 = vst [vmem:[#allocation5 + $0x198] sm:$0xf] %v3230
      %3263 = vst [vmem:[#allocation5 + $0x1bc] sm:$0xf] %v3231
      %3264 = vst [vmem:[#allocation5 + $0x1e0] sm:$0xf] %v3232
      %3265 = vst [vmem:[#allocation5 + $0x204] sm:$0xf] %v3233
      %3266 = vst [vmem:[#allocation5 + $0x228] sm:$0xf] %v3234
      %3267 = vst [vmem:[#allocation5 + $0x24c] sm:$0xf] %v3235
      %3268 = vst [vmem:[#allocation5 + $0x270] sm:$0xf] %v3236
      %3269 = vst [vmem:[#allocation5 + $0x294] sm:$0xf] %v3237
      %3270 = vst [vmem:[#allocation5 + $0x2b8] sm:$0xf] %v3238
      %3271 = vst [vmem:[#allocation5 + $0x2dc] sm:$0xf] %v3239
      %3272 = vst [vmem:[#allocation5 + $0x300] sm:$0xf] %v3240
      %3273 = vst [vmem:[#allocation5 + $0x324] sm:$0xf] %v3241
      %3274 = vst [vmem:[#allocation5 + $0x348] sm:$0xf] %v3242
      %3275 = vst [vmem:[#allocation5 + $0x36c] sm:$0xf] %v3243
      %3276 = vst [vmem:[#allocation5 + $0x390] sm:$0xf] %v3244
      %3277 = vst [vmem:[#allocation5 + $0x3b4] sm:$0xf] %v3245
      %3278 = vst [vmem:[#allocation5 + $0x3d8] sm:$0xf] %v3246
      %3279 = vst [vmem:[#allocation5 + $0x3fc] sm:$0xf] %v3247
      %3280 = vst [vmem:[#allocation5 + $0x420] sm:$0xf] %v3248
      %3281 = vst [vmem:[#allocation5 + $0x444] sm:$0xf] %v3249
      %3282 = vst [vmem:[#allocation5 + $0x468] sm:$0xf] %v3250
      %v3283 = vld [vmem:[#allocation3 + $0xc] sm:$0xf]
      %v3284 = vld [vmem:[#allocation3 + $0x10] sm:$0xf]
      %v3285 = vld [vmem:[#allocation3 + $0x14] sm:$0xf]
      %v3286 = vld [vmem:[#allocation3 + $0x18] sm:$0xf]
      %v3287 = vld [vmem:[#allocation3 + $0x1c] sm:$0xf]
      %v3288 = vld [vmem:[#allocation3 + $0x20] sm:$0xf]
      %v3289 = vld [vmem:[#allocation3 + $0x24] sm:$0xf]
      %v3290 = vld [vmem:[#allocation3 + $0x28] sm:$0xf]
      %v3291 = vld [vmem:[#allocation3 + $0x2c] sm:$0xf]
      %v3292 = vld [vmem:[#allocation3 + $0x30] sm:$0xf]
      %v3293 = vld [vmem:[#allocation3 + $0x34] sm:$0xf]
      %v3294 = vld [vmem:[#allocation3 + $0x38] sm:$0xf]
      %v3295 = vld [vmem:[#allocation3 + $0x3c] sm:$0xf]
      %v3296 = vld [vmem:[#allocation3 + $0x40] sm:$0xf]
      %v3297 = vld [vmem:[#allocation3 + $0x44] sm:$0xf]
      %v3298 = vld [vmem:[#allocation3 + $0x48] sm:$0xf]
      %v3299 = vld [vmem:[#allocation3 + $0x4c] sm:$0xf]
      %v3300 = vld [vmem:[#allocation3 + $0x50] sm:$0xf]
      %v3301 = vld [vmem:[#allocation3 + $0x54] sm:$0xf]
      %v3302 = vld [vmem:[#allocation3 + $0x58] sm:$0xf]
      %v3303 = vld [vmem:[#allocation3 + $0x5c] sm:$0xf]
      %v3304 = vld [vmem:[#allocation3 + $0x60] sm:$0xf]
      %v3305 = vld [vmem:[#allocation3 + $0x64] sm:$0xf]
      %v3306 = vld [vmem:[#allocation3 + $0x68] sm:$0xf]
      %v3307 = vld [vmem:[#allocation3 + $0x6c] sm:$0xf]
      %v3308 = vld [vmem:[#allocation3 + $0x70] sm:$0xf]
      %v3309 = vld [vmem:[#allocation3 + $0x74] sm:$0xf]
      %v3310 = vld [vmem:[#allocation3 + $0x78] sm:$0xf]
      %v3311 = vld [vmem:[#allocation3 + $0x7c] sm:$0xf]
      %v3312 = vld [vmem:[#allocation3 + $0x80] sm:$0xf]
      %v3313 = vld [vmem:[#allocation3 + $0x84] sm:$0xf]
      %v3314 = vld [vmem:[#allocation3 + $0x88] sm:$0xf]
      %3315 = vst [vmem:[#allocation5 + $0x10] sm:$0xf] %v3283
      %3316 = vst [vmem:[#allocation5 + $0x34] sm:$0xf] %v3284
      %3317 = vst [vmem:[#allocation5 + $0x58] sm:$0xf] %v3285
      %3318 = vst [vmem:[#allocation5 + $0x7c] sm:$0xf] %v3286
      %3319 = vst [vmem:[#allocation5 + $0xa0] sm:$0xf] %v3287
      %3320 = vst [vmem:[#allocation5 + $0xc4] sm:$0xf] %v3288
      %3321 = vst [vmem:[#allocation5 + $0xe8] sm:$0xf] %v3289
      %3322 = vst [vmem:[#allocation5 + $0x10c] sm:$0xf] %v3290
      %3323 = vst [vmem:[#allocation5 + $0x130] sm:$0xf] %v3291
      %3324 = vst [vmem:[#allocation5 + $0x154] sm:$0xf] %v3292
      %3325 = vst [vmem:[#allocation5 + $0x178] sm:$0xf] %v3293
      %3326 = vst [vmem:[#allocation5 + $0x19c] sm:$0xf] %v3294
      %3327 = vst [vmem:[#allocation5 + $0x1c0] sm:$0xf] %v3295
      %3328 = vst [vmem:[#allocation5 + $0x1e4] sm:$0xf] %v3296
      %3329 = vst [vmem:[#allocation5 + $0x208] sm:$0xf] %v3297
      %3330 = vst [vmem:[#allocation5 + $0x22c] sm:$0xf] %v3298
      %3331 = vst [vmem:[#allocation5 + $0x250] sm:$0xf] %v3299
      %3332 = vst [vmem:[#allocation5 + $0x274] sm:$0xf] %v3300
      %3333 = vst [vmem:[#allocation5 + $0x298] sm:$0xf] %v3301
      %3334 = vst [vmem:[#allocation5 + $0x2bc] sm:$0xf] %v3302
      %3335 = vst [vmem:[#allocation5 + $0x2e0] sm:$0xf] %v3303
      %3336 = vst [vmem:[#allocation5 + $0x304] sm:$0xf] %v3304
      %3337 = vst [vmem:[#allocation5 + $0x328] sm:$0xf] %v3305
      %3338 = vst [vmem:[#allocation5 + $0x34c] sm:$0xf] %v3306
      %3339 = vst [vmem:[#allocation5 + $0x370] sm:$0xf] %v3307
      %3340 = vst [vmem:[#allocation5 + $0x394] sm:$0xf] %v3308
      %3341 = vst [vmem:[#allocation5 + $0x3b8] sm:$0xf] %v3309
      %3342 = vst [vmem:[#allocation5 + $0x3dc] sm:$0xf] %v3310
      %3343 = vst [vmem:[#allocation5 + $0x400] sm:$0xf] %v3311
      %3344 = vst [vmem:[#allocation5 + $0x424] sm:$0xf] %v3312
      %3345 = vst [vmem:[#allocation5 + $0x448] sm:$0xf] %v3313
      %3346 = vst [vmem:[#allocation5 + $0x46c] sm:$0xf] %v3314
      %v3347 = vld [vmem:[#allocation4 + $0xc] sm:$0xf]
      %v3348 = vld [vmem:[#allocation4 + $0x10] sm:$0xf]
      %v3349 = vld [vmem:[#allocation4 + $0x14] sm:$0xf]
      %v3350 = vld [vmem:[#allocation4 + $0x18] sm:$0xf]
      %v3351 = vld [vmem:[#allocation4 + $0x1c] sm:$0xf]
      %v3352 = vld [vmem:[#allocation4 + $0x20] sm:$0xf]
      %v3353 = vld [vmem:[#allocation4 + $0x24] sm:$0xf]
      %v3354 = vld [vmem:[#allocation4 + $0x28] sm:$0xf]
      %v3355 = vld [vmem:[#allocation4 + $0x2c] sm:$0xf]
      %v3356 = vld [vmem:[#allocation4 + $0x30] sm:$0xf]
      %v3357 = vld [vmem:[#allocation4 + $0x34] sm:$0xf]
      %v3358 = vld [vmem:[#allocation4 + $0x38] sm:$0xf]
      %v3359 = vld [vmem:[#allocation4 + $0x3c] sm:$0xf]
      %v3360 = vld [vmem:[#allocation4 + $0x40] sm:$0xf]
      %v3361 = vld [vmem:[#allocation4 + $0x44] sm:$0xf]
      %v3362 = vld [vmem:[#allocation4 + $0x48] sm:$0xf]
      %v3363 = vld [vmem:[#allocation4 + $0x4c] sm:$0xf]
      %v3364 = vld [vmem:[#allocation4 + $0x50] sm:$0xf]
      %v3365 = vld [vmem:[#allocation4 + $0x54] sm:$0xf]
      %v3366 = vld [vmem:[#allocation4 + $0x58] sm:$0xf]
      %v3367 = vld [vmem:[#allocation4 + $0x5c] sm:$0xf]
      %v3368 = vld [vmem:[#allocation4 + $0x60] sm:$0xf]
      %v3369 = vld [vmem:[#allocation4 + $0x64] sm:$0xf]
      %v3370 = vld [vmem:[#allocation4 + $0x68] sm:$0xf]
      %v3371 = vld [vmem:[#allocation4 + $0x6c] sm:$0xf]
      %v3372 = vld [vmem:[#allocation4 + $0x70] sm:$0xf]
      %v3373 = vld [vmem:[#allocation4 + $0x74] sm:$0xf]
      %v3374 = vld [vmem:[#allocation4 + $0x78] sm:$0xf]
      %v3375 = vld [vmem:[#allocation4 + $0x7c] sm:$0xf]
      %v3376 = vld [vmem:[#allocation4 + $0x80] sm:$0xf]
      %v3377 = vld [vmem:[#allocation4 + $0x84] sm:$0xf]
      %v3378 = vld [vmem:[#allocation4 + $0x88] sm:$0xf]
      %3379 = vst [vmem:[#allocation5 + $0x14] sm:$0xf] %v3347
      %3380 = vst [vmem:[#allocation5 + $0x38] sm:$0xf] %v3348
      %3381 = vst [vmem:[#allocation5 + $0x5c] sm:$0xf] %v3349
      %3382 = vst [vmem:[#allocation5 + $0x80] sm:$0xf] %v3350
      %3383 = vst [vmem:[#allocation5 + $0xa4] sm:$0xf] %v3351
      %3384 = vst [vmem:[#allocation5 + $0xc8] sm:$0xf] %v3352
      %3385 = vst [vmem:[#allocation5 + $0xec] sm:$0xf] %v3353
      %3386 = vst [vmem:[#allocation5 + $0x110] sm:$0xf] %v3354
      %3387 = vst [vmem:[#allocation5 + $0x134] sm:$0xf] %v3355
      %3388 = vst [vmem:[#allocation5 + $0x158] sm:$0xf] %v3356
      %3389 = vst [vmem:[#allocation5 + $0x17c] sm:$0xf] %v3357
      %3390 = vst [vmem:[#allocation5 + $0x1a0] sm:$0xf] %v3358
      %3391 = vst [vmem:[#allocation5 + $0x1c4] sm:$0xf] %v3359
      %3392 = vst [vmem:[#allocation5 + $0x1e8] sm:$0xf] %v3360
      %3393 = vst [vmem:[#allocation5 + $0x20c] sm:$0xf] %v3361
      %3394 = vst [vmem:[#allocation5 + $0x230] sm:$0xf] %v3362
      %3395 = vst [vmem:[#allocation5 + $0x254] sm:$0xf] %v3363
      %3396 = vst [vmem:[#allocation5 + $0x278] sm:$0xf] %v3364
      %3397 = vst [vmem:[#allocation5 + $0x29c] sm:$0xf] %v3365
      %3398 = vst [vmem:[#allocation5 + $0x2c0] sm:$0xf] %v3366
      %3399 = vst [vmem:[#allocation5 + $0x2e4] sm:$0xf] %v3367
      %3400 = vst [vmem:[#allocation5 + $0x308] sm:$0xf] %v3368
      %3401 = vst [vmem:[#allocation5 + $0x32c] sm:$0xf] %v3369
      %3402 = vst [vmem:[#allocation5 + $0x350] sm:$0xf] %v3370
      %3403 = vst [vmem:[#allocation5 + $0x374] sm:$0xf] %v3371
      %3404 = vst [vmem:[#allocation5 + $0x398] sm:$0xf] %v3372
      %3405 = vst [vmem:[#allocation5 + $0x3bc] sm:$0xf] %v3373
      %3406 = vst [vmem:[#allocation5 + $0x3e0] sm:$0xf] %v3374
      %3407 = vst [vmem:[#allocation5 + $0x404] sm:$0xf] %v3375
      %3408 = vst [vmem:[#allocation5 + $0x428] sm:$0xf] %v3376
      %3409 = vst [vmem:[#allocation5 + $0x44c] sm:$0xf] %v3377
      %3410 = vst [vmem:[#allocation5 + $0x470] sm:$0xf] %v3378
      %v3411 = vld [vmem:[#allocation2 + $0x14] sm:$0xf]
      %v3412 = vld [vmem:[#allocation2 + $0x18] sm:$0xf]
      %v3413 = vld [vmem:[#allocation2 + $0x1c] sm:$0xf]
      %v3414 = vld [vmem:[#allocation2 + $0x20] sm:$0xf]
      %v3415 = vld [vmem:[#allocation2 + $0x24] sm:$0xf]
      %v3416 = vld [vmem:[#allocation2 + $0x28] sm:$0xf]
      %v3417 = vld [vmem:[#allocation2 + $0x2c] sm:$0xf]
      %v3418 = vld [vmem:[#allocation2 + $0x30] sm:$0xf]
      %v3419 = vld [vmem:[#allocation2 + $0x34] sm:$0xf]
      %v3420 = vld [vmem:[#allocation2 + $0x38] sm:$0xf]
      %v3421 = vld [vmem:[#allocation2 + $0x3c] sm:$0xf]
      %v3422 = vld [vmem:[#allocation2 + $0x40] sm:$0xf]
      %v3423 = vld [vmem:[#allocation2 + $0x44] sm:$0xf]
      %v3424 = vld [vmem:[#allocation2 + $0x48] sm:$0xf]
      %v3425 = vld [vmem:[#allocation2 + $0x4c] sm:$0xf]
      %v3426 = vld [vmem:[#allocation2 + $0x50] sm:$0xf]
      %v3427 = vld [vmem:[#allocation2 + $0x54] sm:$0xf]
      %v3428 = vld [vmem:[#allocation2 + $0x58] sm:$0xf]
      %v3429 = vld [vmem:[#allocation2 + $0x5c] sm:$0xf]
      %v3430 = vld [vmem:[#allocation2 + $0x60] sm:$0xf]
      %v3431 = vld [vmem:[#allocation2 + $0x64] sm:$0xf]
      %v3432 = vld [vmem:[#allocation2 + $0x68] sm:$0xf]
      %v3433 = vld [vmem:[#allocation2 + $0x6c] sm:$0xf]
      %v3434 = vld [vmem:[#allocation2 + $0x70] sm:$0xf]
      %v3435 = vld [vmem:[#allocation2 + $0x74] sm:$0xf]
      %v3436 = vld [vmem:[#allocation2 + $0x78] sm:$0xf]
      %v3437 = vld [vmem:[#allocation2 + $0x7c] sm:$0xf]
      %v3438 = vld [vmem:[#allocation2 + $0x80] sm:$0xf]
      %v3439 = vld [vmem:[#allocation2 + $0x84] sm:$0xf]
      %v3440 = vld [vmem:[#allocation2 + $0x88] sm:$0xf]
      %v3441 = vld [vmem:[#allocation2 + $0x8c] sm:$0xf]
      %v3442 = vld [vmem:[#allocation2 + $0x90] sm:$0xf]
      %3443 = vst [vmem:[#allocation5 + $0x18] sm:$0xf] %v3411
      %3444 = vst [vmem:[#allocation5 + $0x3c] sm:$0xf] %v3412
      %3445 = vst [vmem:[#allocation5 + $0x60] sm:$0xf] %v3413
      %3446 = vst [vmem:[#allocation5 + $0x84] sm:$0xf] %v3414
      %3447 = vst [vmem:[#allocation5 + $0xa8] sm:$0xf] %v3415
      %3448 = vst [vmem:[#allocation5 + $0xcc] sm:$0xf] %v3416
      %3449 = vst [vmem:[#allocation5 + $0xf0] sm:$0xf] %v3417
      %3450 = vst [vmem:[#allocation5 + $0x114] sm:$0xf] %v3418
      %3451 = vst [vmem:[#allocation5 + $0x138] sm:$0xf] %v3419
      %3452 = vst [vmem:[#allocation5 + $0x15c] sm:$0xf] %v3420
      %3453 = vst [vmem:[#allocation5 + $0x180] sm:$0xf] %v3421
      %3454 = vst [vmem:[#allocation5 + $0x1a4] sm:$0xf] %v3422
      %3455 = vst [vmem:[#allocation5 + $0x1c8] sm:$0xf] %v3423
      %3456 = vst [vmem:[#allocation5 + $0x1ec] sm:$0xf] %v3424
      %3457 = vst [vmem:[#allocation5 + $0x210] sm:$0xf] %v3425
      %3458 = vst [vmem:[#allocation5 + $0x234] sm:$0xf] %v3426
      %3459 = vst [vmem:[#allocation5 + $0x258] sm:$0xf] %v3427
      %3460 = vst [vmem:[#allocation5 + $0x27c] sm:$0xf] %v3428
      %3461 = vst [vmem:[#allocation5 + $0x2a0] sm:$0xf] %v3429
      %3462 = vst [vmem:[#allocation5 + $0x2c4] sm:$0xf] %v3430
      %3463 = vst [vmem:[#allocation5 + $0x2e8] sm:$0xf] %v3431
      %3464 = vst [vmem:[#allocation5 + $0x30c] sm:$0xf] %v3432
      %3465 = vst [vmem:[#allocation5 + $0x330] sm:$0xf] %v3433
      %3466 = vst [vmem:[#allocation5 + $0x354] sm:$0xf] %v3434
      %3467 = vst [vmem:[#allocation5 + $0x378] sm:$0xf] %v3435
      %3468 = vst [vmem:[#allocation5 + $0x39c] sm:$0xf] %v3436
      %3469 = vst [vmem:[#allocation5 + $0x3c0] sm:$0xf] %v3437
      %3470 = vst [vmem:[#allocation5 + $0x3e4] sm:$0xf] %v3438
      %3471 = vst [vmem:[#allocation5 + $0x408] sm:$0xf] %v3439
      %3472 = vst [vmem:[#allocation5 + $0x42c] sm:$0xf] %v3440
      %3473 = vst [vmem:[#allocation5 + $0x450] sm:$0xf] %v3441
      %3474 = vst [vmem:[#allocation5 + $0x474] sm:$0xf] %v3442
      %v3475 = vld [vmem:[#allocation3 + $0x14] sm:$0xf]
      %v3476 = vld [vmem:[#allocation3 + $0x18] sm:$0xf]
      %v3477 = vld [vmem:[#allocation3 + $0x1c] sm:$0xf]
      %v3478 = vld [vmem:[#allocation3 + $0x20] sm:$0xf]
      %v3479 = vld [vmem:[#allocation3 + $0x24] sm:$0xf]
      %v3480 = vld [vmem:[#allocation3 + $0x28] sm:$0xf]
      %v3481 = vld [vmem:[#allocation3 + $0x2c] sm:$0xf]
      %v3482 = vld [vmem:[#allocation3 + $0x30] sm:$0xf]
      %v3483 = vld [vmem:[#allocation3 + $0x34] sm:$0xf]
      %v3484 = vld [vmem:[#allocation3 + $0x38] sm:$0xf]
      %v3485 = vld [vmem:[#allocation3 + $0x3c] sm:$0xf]
      %v3486 = vld [vmem:[#allocation3 + $0x40] sm:$0xf]
      %v3487 = vld [vmem:[#allocation3 + $0x44] sm:$0xf]
      %v3488 = vld [vmem:[#allocation3 + $0x48] sm:$0xf]
      %v3489 = vld [vmem:[#allocation3 + $0x4c] sm:$0xf]
      %v3490 = vld [vmem:[#allocation3 + $0x50] sm:$0xf]
      %v3491 = vld [vmem:[#allocation3 + $0x54] sm:$0xf]
      %v3492 = vld [vmem:[#allocation3 + $0x58] sm:$0xf]
      %v3493 = vld [vmem:[#allocation3 + $0x5c] sm:$0xf]
      %v3494 = vld [vmem:[#allocation3 + $0x60] sm:$0xf]
      %v3495 = vld [vmem:[#allocation3 + $0x64] sm:$0xf]
      %v3496 = vld [vmem:[#allocation3 + $0x68] sm:$0xf]
      %v3497 = vld [vmem:[#allocation3 + $0x6c] sm:$0xf]
      %v3498 = vld [vmem:[#allocation3 + $0x70] sm:$0xf]
      %v3499 = vld [vmem:[#allocation3 + $0x74] sm:$0xf]
      %v3500 = vld [vmem:[#allocation3 + $0x78] sm:$0xf]
      %v3501 = vld [vmem:[#allocation3 + $0x7c] sm:$0xf]
      %v3502 = vld [vmem:[#allocation3 + $0x80] sm:$0xf]
      %v3503 = vld [vmem:[#allocation3 + $0x84] sm:$0xf]
      %v3504 = vld [vmem:[#allocation3 + $0x88] sm:$0xf]
      %v3505 = vld [vmem:[#allocation3 + $0x8c] sm:$0xf]
      %v3506 = vld [vmem:[#allocation3 + $0x90] sm:$0xf]
      %3507 = vst [vmem:[#allocation5 + $0x1c] sm:$0xf] %v3475
      %3508 = vst [vmem:[#allocation5 + $0x40] sm:$0xf] %v3476
      %3509 = vst [vmem:[#allocation5 + $0x64] sm:$0xf] %v3477
      %3510 = vst [vmem:[#allocation5 + $0x88] sm:$0xf] %v3478
      %3511 = vst [vmem:[#allocation5 + $0xac] sm:$0xf] %v3479
      %3512 = vst [vmem:[#allocation5 + $0xd0] sm:$0xf] %v3480
      %3513 = vst [vmem:[#allocation5 + $0xf4] sm:$0xf] %v3481
      %3514 = vst [vmem:[#allocation5 + $0x118] sm:$0xf] %v3482
      %3515 = vst [vmem:[#allocation5 + $0x13c] sm:$0xf] %v3483
      %3516 = vst [vmem:[#allocation5 + $0x160] sm:$0xf] %v3484
      %3517 = vst [vmem:[#allocation5 + $0x184] sm:$0xf] %v3485
      %3518 = vst [vmem:[#allocation5 + $0x1a8] sm:$0xf] %v3486
      %3519 = vst [vmem:[#allocation5 + $0x1cc] sm:$0xf] %v3487
      %3520 = vst [vmem:[#allocation5 + $0x1f0] sm:$0xf] %v3488
      %3521 = vst [vmem:[#allocation5 + $0x214] sm:$0xf] %v3489
      %3522 = vst [vmem:[#allocation5 + $0x238] sm:$0xf] %v3490
      %3523 = vst [vmem:[#allocation5 + $0x25c] sm:$0xf] %v3491
      %3524 = vst [vmem:[#allocation5 + $0x280] sm:$0xf] %v3492
      %3525 = vst [vmem:[#allocation5 + $0x2a4] sm:$0xf] %v3493
      %3526 = vst [vmem:[#allocation5 + $0x2c8] sm:$0xf] %v3494
      %3527 = vst [vmem:[#allocation5 + $0x2ec] sm:$0xf] %v3495
      %3528 = vst [vmem:[#allocation5 + $0x310] sm:$0xf] %v3496
      %3529 = vst [vmem:[#allocation5 + $0x334] sm:$0xf] %v3497
      %3530 = vst [vmem:[#allocation5 + $0x358] sm:$0xf] %v3498
      %3531 = vst [vmem:[#allocation5 + $0x37c] sm:$0xf] %v3499
      %3532 = vst [vmem:[#allocation5 + $0x3a0] sm:$0xf] %v3500
      %3533 = vst [vmem:[#allocation5 + $0x3c4] sm:$0xf] %v3501
      %3534 = vst [vmem:[#allocation5 + $0x3e8] sm:$0xf] %v3502
      %3535 = vst [vmem:[#allocation5 + $0x40c] sm:$0xf] %v3503
      %3536 = vst [vmem:[#allocation5 + $0x430] sm:$0xf] %v3504
      %3537 = vst [vmem:[#allocation5 + $0x454] sm:$0xf] %v3505
      %3538 = vst [vmem:[#allocation5 + $0x478] sm:$0xf] %v3506
      %v3539 = vld [vmem:[#allocation4 + $0x14] sm:$0xf]
      %v3540 = vld [vmem:[#allocation4 + $0x18] sm:$0xf]
      %v3541 = vld [vmem:[#allocation4 + $0x1c] sm:$0xf]
      %v3542 = vld [vmem:[#allocation4 + $0x20] sm:$0xf]
      %v3543 = vld [vmem:[#allocation4 + $0x24] sm:$0xf]
      %v3544 = vld [vmem:[#allocation4 + $0x28] sm:$0xf]
      %v3545 = vld [vmem:[#allocation4 + $0x2c] sm:$0xf]
      %v3546 = vld [vmem:[#allocation4 + $0x30] sm:$0xf]
      %v3547 = vld [vmem:[#allocation4 + $0x34] sm:$0xf]
      %v3548 = vld [vmem:[#allocation4 + $0x38] sm:$0xf]
      %v3549 = vld [vmem:[#allocation4 + $0x3c] sm:$0xf]
      %v3550 = vld [vmem:[#allocation4 + $0x40] sm:$0xf]
      %v3551 = vld [vmem:[#allocation4 + $0x44] sm:$0xf]
      %v3552 = vld [vmem:[#allocation4 + $0x48] sm:$0xf]
      %v3553 = vld [vmem:[#allocation4 + $0x4c] sm:$0xf]
      %v3554 = vld [vmem:[#allocation4 + $0x50] sm:$0xf]
      %v3555 = vld [vmem:[#allocation4 + $0x54] sm:$0xf]
      %v3556 = vld [vmem:[#allocation4 + $0x58] sm:$0xf]
      %v3557 = vld [vmem:[#allocation4 + $0x5c] sm:$0xf]
      %v3558 = vld [vmem:[#allocation4 + $0x60] sm:$0xf]
      %v3559 = vld [vmem:[#allocation4 + $0x64] sm:$0xf]
      %v3560 = vld [vmem:[#allocation4 + $0x68] sm:$0xf]
      %v3561 = vld [vmem:[#allocation4 + $0x6c] sm:$0xf]
      %v3562 = vld [vmem:[#allocation4 + $0x70] sm:$0xf]
      %v3563 = vld [vmem:[#allocation4 + $0x74] sm:$0xf]
      %v3564 = vld [vmem:[#allocation4 + $0x78] sm:$0xf]
      %v3565 = vld [vmem:[#allocation4 + $0x7c] sm:$0xf]
      %v3566 = vld [vmem:[#allocation4 + $0x80] sm:$0xf]
      %v3567 = vld [vmem:[#allocation4 + $0x84] sm:$0xf]
      %v3568 = vld [vmem:[#allocation4 + $0x88] sm:$0xf]
      %v3569 = vld [vmem:[#allocation4 + $0x8c] sm:$0xf]
      %v3570 = vld [vmem:[#allocation4 + $0x90] sm:$0xf]
      %3571 = vst [vmem:[#allocation5 + $0x20] sm:$0xf] %v3539
      %3572 = vst [vmem:[#allocation5 + $0x44] sm:$0xf] %v3540
      %3573 = vst [vmem:[#allocation5 + $0x68] sm:$0xf] %v3541
      %3574 = vst [vmem:[#allocation5 + $0x8c] sm:$0xf] %v3542
      %3575 = vst [vmem:[#allocation5 + $0xb0] sm:$0xf] %v3543
      %3576 = vst [vmem:[#allocation5 + $0xd4] sm:$0xf] %v3544
      %3577 = vst [vmem:[#allocation5 + $0xf8] sm:$0xf] %v3545
      %3578 = vst [vmem:[#allocation5 + $0x11c] sm:$0xf] %v3546
      %3579 = vst [vmem:[#allocation5 + $0x140] sm:$0xf] %v3547
      %3580 = vst [vmem:[#allocation5 + $0x164] sm:$0xf] %v3548
      %3581 = vst [vmem:[#allocation5 + $0x188] sm:$0xf] %v3549
      %3582 = vst [vmem:[#allocation5 + $0x1ac] sm:$0xf] %v3550
      %3583 = vst [vmem:[#allocation5 + $0x1d0] sm:$0xf] %v3551
      %3584 = vst [vmem:[#allocation5 + $0x1f4] sm:$0xf] %v3552
      %3585 = vst [vmem:[#allocation5 + $0x218] sm:$0xf] %v3553
      %3586 = vst [vmem:[#allocation5 + $0x23c] sm:$0xf] %v3554
      %3587 = vst [vmem:[#allocation5 + $0x260] sm:$0xf] %v3555
      %3588 = vst [vmem:[#allocation5 + $0x284] sm:$0xf] %v3556
      %3589 = vst [vmem:[#allocation5 + $0x2a8] sm:$0xf] %v3557
      %3590 = vst [vmem:[#allocation5 + $0x2cc] sm:$0xf] %v3558
      %3591 = vst [vmem:[#allocation5 + $0x2f0] sm:$0xf] %v3559
      %3592 = vst [vmem:[#allocation5 + $0x314] sm:$0xf] %v3560
      %3593 = vst [vmem:[#allocation5 + $0x338] sm:$0xf] %v3561
      %3594 = vst [vmem:[#allocation5 + $0x35c] sm:$0xf] %v3562
      %3595 = vst [vmem:[#allocation5 + $0x380] sm:$0xf] %v3563
      %3596 = vst [vmem:[#allocation5 + $0x3a4] sm:$0xf] %v3564
      %3597 = vst [vmem:[#allocation5 + $0x3c8] sm:$0xf] %v3565
      %3598 = vst [vmem:[#allocation5 + $0x3ec] sm:$0xf] %v3566
      %3599 = vst [vmem:[#allocation5 + $0x410] sm:$0xf] %v3567
      %3600 = vst [vmem:[#allocation5 + $0x434] sm:$0xf] %v3568
      %3601 = vst [vmem:[#allocation5 + $0x458] sm:$0xf] %v3569
      %3602 = vst [vmem:[#allocation5 + $0x47c] sm:$0xf] %v3570
      %v3603 = vld [vmem:[#allocation5] sm:$0xff]
      %v3604 = vld [vmem:[#allocation5 + $0x8] sm:$0xff]
      %v3605 = vld [vmem:[#allocation5 + $0x10] sm:$0xff]
      %v3606 = vld [vmem:[#allocation5 + $0x18] sm:$0xff]
      %v3607 = vld [vmem:[#allocation5 + $0x20] sm:$0xf]
      %v3608 = vld [vmem:[#allocation5 + $0x24] sm:$0xff]
      %v3609 = vld [vmem:[#allocation5 + $0x2c] sm:$0xff]
      %v3610 = vld [vmem:[#allocation5 + $0x34] sm:$0xff]
      %v3611 = vld [vmem:[#allocation5 + $0x3c] sm:$0xff]
      %v3612 = vld [vmem:[#allocation5 + $0x44] sm:$0xf]
      %v3613 = vld [vmem:[#allocation5 + $0x48] sm:$0xff]
      %v3614 = vld [vmem:[#allocation5 + $0x50] sm:$0xff]
      %v3615 = vld [vmem:[#allocation5 + $0x58] sm:$0xff]
      %v3616 = vld [vmem:[#allocation5 + $0x60] sm:$0xff]
      %v3617 = vld [vmem:[#allocation5 + $0x68] sm:$0xf]
      %v3618 = vld [vmem:[#allocation5 + $0x6c] sm:$0xff]
      %v3619 = vld [vmem:[#allocation5 + $0x74] sm:$0xff]
      %v3620 = vld [vmem:[#allocation5 + $0x7c] sm:$0xff]
      %v3621 = vld [vmem:[#allocation5 + $0x84] sm:$0xff]
      %v3622 = vld [vmem:[#allocation5 + $0x8c] sm:$0xf]
      %v3623 = vld [vmem:[#allocation5 + $0x90] sm:$0xff]
      %v3624 = vld [vmem:[#allocation5 + $0x98] sm:$0xff]
      %v3625 = vld [vmem:[#allocation5 + $0xa0] sm:$0xff]
      %v3626 = vld [vmem:[#allocation5 + $0xa8] sm:$0xff]
      %v3627 = vld [vmem:[#allocation5 + $0xb0] sm:$0xf]
      %v3628 = vld [vmem:[#allocation5 + $0xb4] sm:$0xff]
      %v3629 = vld [vmem:[#allocation5 + $0xbc] sm:$0xff]
      %v3630 = vld [vmem:[#allocation5 + $0xc4] sm:$0xff]
      %v3631 = vld [vmem:[#allocation5 + $0xcc] sm:$0xff]
      %v3632 = vld [vmem:[#allocation5 + $0xd4] sm:$0xf]
      %v3633 = vld [vmem:[#allocation5 + $0xd8] sm:$0xff]
      %v3634 = vld [vmem:[#allocation5 + $0xe0] sm:$0xff]
      %v3635 = vld [vmem:[#allocation5 + $0xe8] sm:$0xff]
      %v3636 = vld [vmem:[#allocation5 + $0xf0] sm:$0xff]
      %v3637 = vld [vmem:[#allocation5 + $0xf8] sm:$0xf]
      %v3638 = vld [vmem:[#allocation5 + $0xfc] sm:$0xff]
      %v3639 = vld [vmem:[#allocation5 + $0x104] sm:$0xff]
      %v3640 = vld [vmem:[#allocation5 + $0x10c] sm:$0xff]
      %v3641 = vld [vmem:[#allocation5 + $0x114] sm:$0xff]
      %v3642 = vld [vmem:[#allocation5 + $0x11c] sm:$0xf]
      %v3643 = vld [vmem:[#allocation5 + $0x120] sm:$0xff]
      %v3644 = vld [vmem:[#allocation5 + $0x128] sm:$0xff]
      %v3645 = vld [vmem:[#allocation5 + $0x130] sm:$0xff]
      %v3646 = vld [vmem:[#allocation5 + $0x138] sm:$0xff]
      %v3647 = vld [vmem:[#allocation5 + $0x140] sm:$0xf]
      %v3648 = vld [vmem:[#allocation5 + $0x144] sm:$0xff]
      %v3649 = vld [vmem:[#allocation5 + $0x14c] sm:$0xff]
      %v3650 = vld [vmem:[#allocation5 + $0x154] sm:$0xff]
      %v3651 = vld [vmem:[#allocation5 + $0x15c] sm:$0xff]
      %v3652 = vld [vmem:[#allocation5 + $0x164] sm:$0xf]
      %v3653 = vld [vmem:[#allocation5 + $0x168] sm:$0xff]
      %v3654 = vld [vmem:[#allocation5 + $0x170] sm:$0xff]
      %v3655 = vld [vmem:[#allocation5 + $0x178] sm:$0xff]
      %v3656 = vld [vmem:[#allocation5 + $0x180] sm:$0xff]
      %v3657 = vld [vmem:[#allocation5 + $0x188] sm:$0xf]
      %v3658 = vld [vmem:[#allocation5 + $0x18c] sm:$0xff]
      %v3659 = vld [vmem:[#allocation5 + $0x194] sm:$0xff]
      %v3660 = vld [vmem:[#allocation5 + $0x19c] sm:$0xff]
      %v3661 = vld [vmem:[#allocation5 + $0x1a4] sm:$0xff]
      %v3662 = vld [vmem:[#allocation5 + $0x1ac] sm:$0xf]
      %v3663 = vld [vmem:[#allocation5 + $0x1b0] sm:$0xff]
      %v3664 = vld [vmem:[#allocation5 + $0x1b8] sm:$0xff]
      %v3665 = vld [vmem:[#allocation5 + $0x1c0] sm:$0xff]
      %v3666 = vld [vmem:[#allocation5 + $0x1c8] sm:$0xff]
      %v3667 = vld [vmem:[#allocation5 + $0x1d0] sm:$0xf]
      %v3668 = vld [vmem:[#allocation5 + $0x1d4] sm:$0xff]
      %v3669 = vld [vmem:[#allocation5 + $0x1dc] sm:$0xff]
      %v3670 = vld [vmem:[#allocation5 + $0x1e4] sm:$0xff]
      %v3671 = vld [vmem:[#allocation5 + $0x1ec] sm:$0xff]
      %v3672 = vld [vmem:[#allocation5 + $0x1f4] sm:$0xf]
      %v3673 = vld [vmem:[#allocation5 + $0x1f8] sm:$0xff]
      %v3674 = vld [vmem:[#allocation5 + $0x200] sm:$0xff]
      %v3675 = vld [vmem:[#allocation5 + $0x208] sm:$0xff]
      %v3676 = vld [vmem:[#allocation5 + $0x210] sm:$0xff]
      %v3677 = vld [vmem:[#allocation5 + $0x218] sm:$0xf]
      %v3678 = vld [vmem:[#allocation5 + $0x21c] sm:$0xff]
      %v3679 = vld [vmem:[#allocation5 + $0x224] sm:$0xff]
      %v3680 = vld [vmem:[#allocation5 + $0x22c] sm:$0xff]
      %v3681 = vld [vmem:[#allocation5 + $0x234] sm:$0xff]
      %v3682 = vld [vmem:[#allocation5 + $0x23c] sm:$0xf]
      %v3683 = vld [vmem:[#allocation5 + $0x240] sm:$0xff]
      %v3684 = vld [vmem:[#allocation5 + $0x248] sm:$0xff]
      %v3685 = vld [vmem:[#allocation5 + $0x250] sm:$0xff]
      %v3686 = vld [vmem:[#allocation5 + $0x258] sm:$0xff]
      %v3687 = vld [vmem:[#allocation5 + $0x260] sm:$0xf]
      %v3688 = vld [vmem:[#allocation5 + $0x264] sm:$0xff]
      %v3689 = vld [vmem:[#allocation5 + $0x26c] sm:$0xff]
      %v3690 = vld [vmem:[#allocation5 + $0x274] sm:$0xff]
      %v3691 = vld [vmem:[#allocation5 + $0x27c] sm:$0xff]
      %v3692 = vld [vmem:[#allocation5 + $0x284] sm:$0xf]
      %v3693 = vld [vmem:[#allocation5 + $0x288] sm:$0xff]
      %v3694 = vld [vmem:[#allocation5 + $0x290] sm:$0xff]
      %v3695 = vld [vmem:[#allocation5 + $0x298] sm:$0xff]
      %v3696 = vld [vmem:[#allocation5 + $0x2a0] sm:$0xff]
      %v3697 = vld [vmem:[#allocation5 + $0x2a8] sm:$0xf]
      %v3698 = vld [vmem:[#allocation5 + $0x2ac] sm:$0xff]
      %v3699 = vld [vmem:[#allocation5 + $0x2b4] sm:$0xff]
      %v3700 = vld [vmem:[#allocation5 + $0x2bc] sm:$0xff]
      %v3701 = vld [vmem:[#allocation5 + $0x2c4] sm:$0xff]
      %v3702 = vld [vmem:[#allocation5 + $0x2cc] sm:$0xf]
      %v3703 = vld [vmem:[#allocation5 + $0x2d0] sm:$0xff]
      %v3704 = vld [vmem:[#allocation5 + $0x2d8] sm:$0xff]
      %v3705 = vld [vmem:[#allocation5 + $0x2e0] sm:$0xff]
      %v3706 = vld [vmem:[#allocation5 + $0x2e8] sm:$0xff]
      %v3707 = vld [vmem:[#allocation5 + $0x2f0] sm:$0xf]
      %v3708 = vld [vmem:[#allocation5 + $0x2f4] sm:$0xff]
      %v3709 = vld [vmem:[#allocation5 + $0x2fc] sm:$0xff]
      %v3710 = vld [vmem:[#allocation5 + $0x304] sm:$0xff]
      %v3711 = vld [vmem:[#allocation5 + $0x30c] sm:$0xff]
      %v3712 = vld [vmem:[#allocation5 + $0x314] sm:$0xf]
      %v3713 = vld [vmem:[#allocation5 + $0x318] sm:$0xff]
      %v3714 = vld [vmem:[#allocation5 + $0x320] sm:$0xff]
      %v3715 = vld [vmem:[#allocation5 + $0x328] sm:$0xff]
      %v3716 = vld [vmem:[#allocation5 + $0x330] sm:$0xff]
      %v3717 = vld [vmem:[#allocation5 + $0x338] sm:$0xf]
      %v3718 = vld [vmem:[#allocation5 + $0x33c] sm:$0xff]
      %v3719 = vld [vmem:[#allocation5 + $0x344] sm:$0xff]
      %v3720 = vld [vmem:[#allocation5 + $0x34c] sm:$0xff]
      %v3721 = vld [vmem:[#allocation5 + $0x354] sm:$0xff]
      %v3722 = vld [vmem:[#allocation5 + $0x35c] sm:$0xf]
      %v3723 = vld [vmem:[#allocation5 + $0x360] sm:$0xff]
      %v3724 = vld [vmem:[#allocation5 + $0x368] sm:$0xff]
      %v3725 = vld [vmem:[#allocation5 + $0x370] sm:$0xff]
      %v3726 = vld [vmem:[#allocation5 + $0x378] sm:$0xff]
      %v3727 = vld [vmem:[#allocation5 + $0x380] sm:$0xf]
      %v3728 = vld [vmem:[#allocation5 + $0x384] sm:$0xff]
      %v3729 = vld [vmem:[#allocation5 + $0x38c] sm:$0xff]
      %v3730 = vld [vmem:[#allocation5 + $0x394] sm:$0xff]
      %v3731 = vld [vmem:[#allocation5 + $0x39c] sm:$0xff]
      %v3732 = vld [vmem:[#allocation5 + $0x3a4] sm:$0xf]
      %v3733 = vld [vmem:[#allocation5 + $0x3a8] sm:$0xff]
      %v3734 = vld [vmem:[#allocation5 + $0x3b0] sm:$0xff]
      %v3735 = vld [vmem:[#allocation5 + $0x3b8] sm:$0xff]
      %v3736 = vld [vmem:[#allocation5 + $0x3c0] sm:$0xff]
      %v3737 = vld [vmem:[#allocation5 + $0x3c8] sm:$0xf]
      %v3738 = vld [vmem:[#allocation5 + $0x3cc] sm:$0xff]
      %v3739 = vld [vmem:[#allocation5 + $0x3d4] sm:$0xff]
      %v3740 = vld [vmem:[#allocation5 + $0x3dc] sm:$0xff]
      %v3741 = vld [vmem:[#allocation5 + $0x3e4] sm:$0xff]
      %v3742 = vld [vmem:[#allocation5 + $0x3ec] sm:$0xf]
      %v3743 = vld [vmem:[#allocation5 + $0x3f0] sm:$0xff]
      %v3744 = vld [vmem:[#allocation5 + $0x3f8] sm:$0xff]
      %v3745 = vld [vmem:[#allocation5 + $0x400] sm:$0xff]
      %v3746 = vld [vmem:[#allocation5 + $0x408] sm:$0xff]
      %v3747 = vld [vmem:[#allocation5 + $0x410] sm:$0xf]
      %v3748 = vld [vmem:[#allocation5 + $0x414] sm:$0xff]
      %v3749 = vld [vmem:[#allocation5 + $0x41c] sm:$0xff]
      %v3750 = vld [vmem:[#allocation5 + $0x424] sm:$0xff]
      %v3751 = vld [vmem:[#allocation5 + $0x42c] sm:$0xff]
      %v3752 = vld [vmem:[#allocation5 + $0x434] sm:$0xf]
      %v3753 = vld [vmem:[#allocation5 + $0x438] sm:$0xff]
      %v3754 = vld [vmem:[#allocation5 + $0x440] sm:$0xff]
      %v3755 = vld [vmem:[#allocation5 + $0x448] sm:$0xff]
      %v3756 = vld [vmem:[#allocation5 + $0x450] sm:$0xff]
      %v3757 = vld [vmem:[#allocation5 + $0x458] sm:$0xf]
      %v3758 = vld [vmem:[#allocation5 + $0x45c] sm:$0xff]
      %v3759 = vld [vmem:[#allocation5 + $0x464] sm:$0xff]
      %v3760 = vld [vmem:[#allocation5 + $0x46c] sm:$0xff]
      %v3761 = vld [vmem:[#allocation5 + $0x474] sm:$0xff]
      %v3762 = vld [vmem:[#allocation5 + $0x47c] sm:$0xf]
      %v3763 = vld [vmem:[%s6] sm:$0xf]
      %v3764 = vld [vmem:[%s6 + $0x4] sm:$0xf]
      %v3765 = vld [vmem:[%s6 + $0x8] sm:$0xf]
      %v3766 = vld [vmem:[%s6 + $0xc] sm:$0xf]
      %v3767 = vld [vmem:[%s6 + $0x10] sm:$0xf]
      %v3768 = vld [vmem:[%s6 + $0x14] sm:$0xf]
      %v3769 = vld [vmem:[%s6 + $0x18] sm:$0xf]
      %v3770 = vld [vmem:[%s6 + $0x1c] sm:$0xf]
      %v3771 = vld [vmem:[%s6 + $0x20] sm:$0xf]
      %v3772 = vld [vmem:[%s6 + $0x24] sm:$0xf]
      %v3773 = vld [vmem:[%s6 + $0x28] sm:$0xf]
      %v3774 = vld [vmem:[%s6 + $0x2c] sm:$0xf]
      %v3775 = vld [vmem:[%s6 + $0x30] sm:$0xf]
      %v3776 = vld [vmem:[%s6 + $0x34] sm:$0xf]
      %v3777 = vld [vmem:[%s6 + $0x38] sm:$0xf]
      %v3778 = vld [vmem:[%s6 + $0x3c] sm:$0xf]
      %v3779 = vld [vmem:[%s6 + $0x40] sm:$0xf]
      %v3780 = vld [vmem:[%s6 + $0x44] sm:$0xf]
      %v3781 = vld [vmem:[%s6 + $0x48] sm:$0xf]
      %v3782 = vld [vmem:[%s6 + $0x4c] sm:$0xf]
      %v3783 = vld [vmem:[%s6 + $0x50] sm:$0xf]
      %v3784 = vld [vmem:[%s6 + $0x54] sm:$0xf]
      %v3785 = vld [vmem:[%s6 + $0x58] sm:$0xf]
      %v3786 = vld [vmem:[%s6 + $0x5c] sm:$0xf]
      %v3787 = vld [vmem:[%s6 + $0x60] sm:$0xf]
      %v3788 = vld [vmem:[%s6 + $0x64] sm:$0xf]
      %v3789 = vld [vmem:[%s6 + $0x68] sm:$0xf]
      %v3790 = vld [vmem:[%s6 + $0x6c] sm:$0xf]
      %v3791 = vld [vmem:[%s6 + $0x70] sm:$0xf]
      %v3792 = vld [vmem:[%s6 + $0x74] sm:$0xf]
      %v3793 = vld [vmem:[%s6 + $0x78] sm:$0xf]
      %v3794 = vld [vmem:[%s6 + $0x7c] sm:$0xf]
      %v3795 = vld [vmem:[%s6 + $0x80] sm:$0xf]
      %v3796 = vld [vmem:[%s6 + $0x84] sm:$0xf]
      %v3797 = vld [vmem:[%s6 + $0x88] sm:$0xf]
      %v3798 = vld [vmem:[%s6 + $0x8c] sm:$0xf]
      %v3799 = vld [vmem:[%s6 + $0x90] sm:$0xf]
      %v3800 = vld [vmem:[%s6 + $0x94] sm:$0xf]
      %v3801 = vld [vmem:[%s6 + $0x98] sm:$0xf]
      %v3802 = vld [vmem:[%s6 + $0x9c] sm:$0xf]
      %v3803 = vld [vmem:[%s6 + $0xa0] sm:$0xf]
      %v3804 = vld [vmem:[%s6 + $0xa4] sm:$0xf]
      %v3805 = vld [vmem:[%s6 + $0xa8] sm:$0xf]
      %v3806 = vld [vmem:[%s6 + $0xac] sm:$0xf]
      %v3807 = vld [vmem:[%s6 + $0xb0] sm:$0xf]
      %v3808 = vld [vmem:[%s6 + $0xb4] sm:$0xf]
      %v3809 = vld [vmem:[%s6 + $0xb8] sm:$0xf]
      %v3810 = vld [vmem:[%s6 + $0xbc] sm:$0xf]
      %v3811 = vld [vmem:[%s6 + $0xc0] sm:$0xf]
      %v3812 = vld [vmem:[%s6 + $0xc4] sm:$0xf]
      %v3813 = vld [vmem:[%s6 + $0xc8] sm:$0xf]
      %v3814 = vld [vmem:[%s6 + $0xcc] sm:$0xf]
      %v3815 = vld [vmem:[%s6 + $0xd0] sm:$0xf]
      %v3816 = vld [vmem:[%s6 + $0xd4] sm:$0xf]
      %v3817 = vld [vmem:[%s6 + $0xd8] sm:$0xf]
      %v3818 = vld [vmem:[%s6 + $0xdc] sm:$0xf]
      %v3819 = vld [vmem:[%s6 + $0xe0] sm:$0xf]
      %v3820 = vld [vmem:[%s6 + $0xe4] sm:$0xf]
      %v3821 = vld [vmem:[%s6 + $0xe8] sm:$0xf]
      %v3822 = vld [vmem:[%s6 + $0xec] sm:$0xf]
      %v3823 = vld [vmem:[%s6 + $0xf0] sm:$0xf]
      %v3824 = vld [vmem:[%s6 + $0xf4] sm:$0xf]
      %v3825 = vld [vmem:[%s6 + $0xf8] sm:$0xf]
      %v3826 = vld [vmem:[%s6 + $0xfc] sm:$0xf]
      %v3827 = vld [vmem:[%s6 + $0x100] sm:$0xf]
      %v3828 = vld [vmem:[%s6 + $0x104] sm:$0xf]
      %v3829 = vld [vmem:[%s6 + $0x108] sm:$0xf]
      %v3830 = vld [vmem:[%s6 + $0x10c] sm:$0xf]
      %v3831 = vld [vmem:[%s6 + $0x110] sm:$0xf]
      %v3832 = vld [vmem:[%s6 + $0x114] sm:$0xf]
      %v3833 = vld [vmem:[%s6 + $0x118] sm:$0xf]
      %v3834 = vld [vmem:[%s6 + $0x11c] sm:$0xf]
      %v3835 = vld [vmem:[%s6 + $0x120] sm:$0xf]
      %v3836 = vld [vmem:[%s6 + $0x124] sm:$0xf]
      %v3837 = vld [vmem:[%s6 + $0x128] sm:$0xf]
      %v3838 = vld [vmem:[%s6 + $0x12c] sm:$0xf]
      %v3839 = vld [vmem:[%s6 + $0x130] sm:$0xf]
      %v3840 = vld [vmem:[%s6 + $0x134] sm:$0xf]
      %v3841 = vld [vmem:[%s6 + $0x138] sm:$0xf]
      %v3842 = vld [vmem:[%s6 + $0x13c] sm:$0xf]
      %v3843 = vld [vmem:[%s6 + $0x140] sm:$0xf]
      %v3844 = vld [vmem:[%s6 + $0x144] sm:$0xf]
      %v3845 = vld [vmem:[%s6 + $0x148] sm:$0xf]
      %v3846 = vld [vmem:[%s6 + $0x14c] sm:$0xf]
      %v3847 = vld [vmem:[%s6 + $0x150] sm:$0xf]
      %v3848 = vld [vmem:[%s6 + $0x154] sm:$0xf]
      %v3849 = vld [vmem:[%s6 + $0x158] sm:$0xf]
      %v3850 = vld [vmem:[%s6 + $0x15c] sm:$0xf]
      %v3851 = vld [vmem:[%s6 + $0x160] sm:$0xf]
      %v3852 = vld [vmem:[%s6 + $0x164] sm:$0xf]
      %v3853 = vld [vmem:[%s6 + $0x168] sm:$0xf]
      %v3854 = vld [vmem:[%s6 + $0x16c] sm:$0xf]
      %v3855 = vld [vmem:[%s6 + $0x170] sm:$0xf]
      %v3856 = vld [vmem:[%s6 + $0x174] sm:$0xf]
      %v3857 = vld [vmem:[%s6 + $0x178] sm:$0xf]
      %v3858 = vld [vmem:[%s6 + $0x17c] sm:$0xf]
      %v3859 = vld [vmem:[%s6 + $0x180] sm:$0xf]
      %v3860 = vld [vmem:[%s6 + $0x184] sm:$0xf]
      %v3861 = vld [vmem:[%s6 + $0x188] sm:$0xf]
      %v3862 = vld [vmem:[%s6 + $0x18c] sm:$0xf]
      %v3863 = vld [vmem:[%s6 + $0x190] sm:$0xf]
      %v3864 = vld [vmem:[%s6 + $0x194] sm:$0xf]
      %v3865 = vld [vmem:[%s6 + $0x198] sm:$0xf]
      %v3866 = vld [vmem:[%s6 + $0x19c] sm:$0xf]
      %v3867 = vld [vmem:[%s6 + $0x1a0] sm:$0xf]
      %v3868 = vld [vmem:[%s6 + $0x1a4] sm:$0xf]
      %v3869 = vld [vmem:[%s6 + $0x1a8] sm:$0xf]
      %v3870 = vld [vmem:[%s6 + $0x1ac] sm:$0xf]
      %v3871 = vld [vmem:[%s6 + $0x1b0] sm:$0xf]
      %v3872 = vld [vmem:[%s6 + $0x1b4] sm:$0xf]
      %v3873 = vld [vmem:[%s6 + $0x1b8] sm:$0xf]
      %v3874 = vld [vmem:[%s6 + $0x1bc] sm:$0xf]
      %v3875 = vld [vmem:[%s6 + $0x1c0] sm:$0xf]
      %v3876 = vld [vmem:[%s6 + $0x1c4] sm:$0xf]
      %v3877 = vld [vmem:[%s6 + $0x1c8] sm:$0xf]
      %v3878 = vld [vmem:[%s6 + $0x1cc] sm:$0xf]
      %v3879 = vld [vmem:[%s6 + $0x1d0] sm:$0xf]
      %v3880 = vld [vmem:[%s6 + $0x1d4] sm:$0xf]
      %v3881 = vld [vmem:[%s6 + $0x1d8] sm:$0xf]
      %v3882 = vld [vmem:[%s6 + $0x1dc] sm:$0xf]
      %v3883 = vld [vmem:[%s6 + $0x1e0] sm:$0xf]
      %v3884 = vld [vmem:[%s6 + $0x1e4] sm:$0xf]
      %v3885 = vld [vmem:[%s6 + $0x1e8] sm:$0xf]
      %v3886 = vld [vmem:[%s6 + $0x1ec] sm:$0xf]
      %v3887 = vld [vmem:[%s6 + $0x1f0] sm:$0xf]
      %v3888 = vld [vmem:[%s6 + $0x1f4] sm:$0xf]
      %v3889 = vld [vmem:[%s6 + $0x1f8] sm:$0xf]
      %v3890 = vld [vmem:[%s6 + $0x1fc] sm:$0xf]
      %v3891 = vld [vmem:[%s6 + $0x200] sm:$0xf]
      %v3892 = vld [vmem:[%s6 + $0x204] sm:$0xf]
      %v3893 = vld [vmem:[%s6 + $0x208] sm:$0xf]
      %v3894 = vld [vmem:[%s6 + $0x20c] sm:$0xf]
      %v3895 = vld [vmem:[%s6 + $0x210] sm:$0xf]
      %v3896 = vld [vmem:[%s6 + $0x214] sm:$0xf]
      %v3897 = vld [vmem:[%s6 + $0x218] sm:$0xf]
      %v3898 = vld [vmem:[%s6 + $0x21c] sm:$0xf]
      %v3899 = vld [vmem:[%s6 + $0x220] sm:$0xf]
      %v3900 = vld [vmem:[%s6 + $0x224] sm:$0xf]
      %v3901 = vld [vmem:[%s6 + $0x228] sm:$0xf]
      %v3902 = vld [vmem:[%s6 + $0x22c] sm:$0xf]
      %v3903 = vld [vmem:[%s6 + $0x230] sm:$0xf]
      %v3904 = vld [vmem:[%s6 + $0x234] sm:$0xf]
      %v3905 = vld [vmem:[%s6 + $0x238] sm:$0xf]
      %v3906 = vld [vmem:[%s6 + $0x23c] sm:$0xf]
      %v4067 = vunpack.c.l.b16 %v3603
      %v4068 = vunpack.c.h.b16 %v3603
      %v4069 = vunpack.c.l.b16 %v3604
      %v4070 = vunpack.c.h.b16 %v3604
      %v4071 = vunpack.c.l.b16 %v3605
      %v4072 = vunpack.c.h.b16 %v3605
      %v4073 = vunpack.c.l.b16 %v3606
      %v4074 = vunpack.c.h.b16 %v3606
      %v4075 = vunpack.c.l.b16 %v3607
      %v4076 = vunpack.c.l.b16 %v3608
      %v4077 = vunpack.c.h.b16 %v3608
      %v4078 = vunpack.c.l.b16 %v3609
      %v4079 = vunpack.c.h.b16 %v3609
      %v4080 = vunpack.c.l.b16 %v3610
      %v4081 = vunpack.c.h.b16 %v3610
      %v4082 = vunpack.c.l.b16 %v3611
      %v4083 = vunpack.c.h.b16 %v3611
      %v4084 = vunpack.c.l.b16 %v3612
      %v4085 = vunpack.c.l.b16 %v3613
      %v4086 = vunpack.c.h.b16 %v3613
      %v4087 = vunpack.c.l.b16 %v3614
      %v4088 = vunpack.c.h.b16 %v3614
      %v4089 = vunpack.c.l.b16 %v3615
      %v4090 = vunpack.c.h.b16 %v3615
      %v4091 = vunpack.c.l.b16 %v3616
      %v4092 = vunpack.c.h.b16 %v3616
      %v4093 = vunpack.c.l.b16 %v3617
      %v4094 = vunpack.c.l.b16 %v3618
      %v4095 = vunpack.c.h.b16 %v3618
      %v4096 = vunpack.c.l.b16 %v3619
      %v4097 = vunpack.c.h.b16 %v3619
      %v4098 = vunpack.c.l.b16 %v3620
      %v4099 = vunpack.c.h.b16 %v3620
      %v4100 = vunpack.c.l.b16 %v3621
      %v4101 = vunpack.c.h.b16 %v3621
      %v4102 = vunpack.c.l.b16 %v3622
      %v4103 = vunpack.c.l.b16 %v3623
      %v4104 = vunpack.c.h.b16 %v3623
      %v4105 = vunpack.c.l.b16 %v3624
      %v4106 = vunpack.c.h.b16 %v3624
      %v4107 = vunpack.c.l.b16 %v3625
      %v4108 = vunpack.c.h.b16 %v3625
      %v4109 = vunpack.c.l.b16 %v3626
      %v4110 = vunpack.c.h.b16 %v3626
      %v4111 = vunpack.c.l.b16 %v3627
      %v4112 = vunpack.c.l.b16 %v3628
      %v4113 = vunpack.c.h.b16 %v3628
      %v4114 = vunpack.c.l.b16 %v3629
      %v4115 = vunpack.c.h.b16 %v3629
      %v4116 = vunpack.c.l.b16 %v3630
      %v4117 = vunpack.c.h.b16 %v3630
      %v4118 = vunpack.c.l.b16 %v3631
      %v4119 = vunpack.c.h.b16 %v3631
      %v4120 = vunpack.c.l.b16 %v3632
      %v4121 = vunpack.c.l.b16 %v3633
      %v4122 = vunpack.c.h.b16 %v3633
      %v4123 = vunpack.c.l.b16 %v3634
      %v4124 = vunpack.c.h.b16 %v3634
      %v4125 = vunpack.c.l.b16 %v3635
      %v4126 = vunpack.c.h.b16 %v3635
      %v4127 = vunpack.c.l.b16 %v3636
      %v4128 = vunpack.c.h.b16 %v3636
      %v4129 = vunpack.c.l.b16 %v3637
      %v4130 = vunpack.c.l.b16 %v3638
      %v4131 = vunpack.c.h.b16 %v3638
      %v4132 = vunpack.c.l.b16 %v3639
      %v4133 = vunpack.c.h.b16 %v3639
      %v4134 = vunpack.c.l.b16 %v3640
      %v4135 = vunpack.c.h.b16 %v3640
      %v4136 = vunpack.c.l.b16 %v3641
      %v4137 = vunpack.c.h.b16 %v3641
      %v4138 = vunpack.c.l.b16 %v3642
      %v4139 = vunpack.c.l.b16 %v3643
      %v4140 = vunpack.c.h.b16 %v3643
      %v4141 = vunpack.c.l.b16 %v3644
      %v4142 = vunpack.c.h.b16 %v3644
      %v4143 = vunpack.c.l.b16 %v3645
      %v4144 = vunpack.c.h.b16 %v3645
      %v4145 = vunpack.c.l.b16 %v3646
      %v4146 = vunpack.c.h.b16 %v3646
      %v4147 = vunpack.c.l.b16 %v3647
      %v4148 = vunpack.c.l.b16 %v3648
      %v4149 = vunpack.c.h.b16 %v3648
      %v4150 = vunpack.c.l.b16 %v3649
      %v4151 = vunpack.c.h.b16 %v3649
      %v4152 = vunpack.c.l.b16 %v3650
      %v4153 = vunpack.c.h.b16 %v3650
      %v4154 = vunpack.c.l.b16 %v3651
      %v4155 = vunpack.c.h.b16 %v3651
      %v4156 = vunpack.c.l.b16 %v3652
      %v4157 = vunpack.c.l.b16 %v3653
      %v4158 = vunpack.c.h.b16 %v3653
      %v4159 = vunpack.c.l.b16 %v3654
      %v4160 = vunpack.c.h.b16 %v3654
      %v4161 = vunpack.c.l.b16 %v3655
      %v4162 = vunpack.c.h.b16 %v3655
      %v4163 = vunpack.c.l.b16 %v3656
      %v4164 = vunpack.c.h.b16 %v3656
      %v4165 = vunpack.c.l.b16 %v3657
      %v4166 = vunpack.c.l.b16 %v3658
      %v4167 = vunpack.c.h.b16 %v3658
      %v4168 = vunpack.c.l.b16 %v3659
      %v4169 = vunpack.c.h.b16 %v3659
      %v4170 = vunpack.c.l.b16 %v3660
      %v4171 = vunpack.c.h.b16 %v3660
      %v4172 = vunpack.c.l.b16 %v3661
      %v4173 = vunpack.c.h.b16 %v3661
      %v4174 = vunpack.c.l.b16 %v3662
      %v4175 = vunpack.c.l.b16 %v3663
      %v4176 = vunpack.c.h.b16 %v3663
      %v4177 = vunpack.c.l.b16 %v3664
      %v4178 = vunpack.c.h.b16 %v3664
      %v4179 = vunpack.c.l.b16 %v3665
      %v4180 = vunpack.c.h.b16 %v3665
      %v4181 = vunpack.c.l.b16 %v3666
      %v4182 = vunpack.c.h.b16 %v3666
      %v4183 = vunpack.c.l.b16 %v3667
      %v4184 = vunpack.c.l.b16 %v3668
      %v4185 = vunpack.c.h.b16 %v3668
      %v4186 = vunpack.c.l.b16 %v3669
      %v4187 = vunpack.c.h.b16 %v3669
      %v4188 = vunpack.c.l.b16 %v3670
      %v4189 = vunpack.c.h.b16 %v3670
      %v4190 = vunpack.c.l.b16 %v3671
      %v4191 = vunpack.c.h.b16 %v3671
      %v4192 = vunpack.c.l.b16 %v3672
      %v4193 = vunpack.c.l.b16 %v3673
      %v4194 = vunpack.c.h.b16 %v3673
      %v4195 = vunpack.c.l.b16 %v3674
      %v4196 = vunpack.c.h.b16 %v3674
      %v4197 = vunpack.c.l.b16 %v3675
      %v4198 = vunpack.c.h.b16 %v3675
      %v4199 = vunpack.c.l.b16 %v3676
      %v4200 = vunpack.c.h.b16 %v3676
      %v4201 = vunpack.c.l.b16 %v3677
      %v4202 = vunpack.c.l.b16 %v3678
      %v4203 = vunpack.c.h.b16 %v3678
      %v4204 = vunpack.c.l.b16 %v3679
      %v4205 = vunpack.c.h.b16 %v3679
      %v4206 = vunpack.c.l.b16 %v3680
      %v4207 = vunpack.c.h.b16 %v3680
      %v4208 = vunpack.c.l.b16 %v3681
      %v4209 = vunpack.c.h.b16 %v3681
      %v4210 = vunpack.c.l.b16 %v3682
      %v4211 = vunpack.c.l.b16 %v3683
      %v4212 = vunpack.c.h.b16 %v3683
      %v4213 = vunpack.c.l.b16 %v3684
      %v4214 = vunpack.c.h.b16 %v3684
      %v4215 = vunpack.c.l.b16 %v3685
      %v4216 = vunpack.c.h.b16 %v3685
      %v4217 = vunpack.c.l.b16 %v3686
      %v4218 = vunpack.c.h.b16 %v3686
      %v4219 = vunpack.c.l.b16 %v3687
      %v4220 = vunpack.c.l.b16 %v3688
      %v4221 = vunpack.c.h.b16 %v3688
      %v4222 = vunpack.c.l.b16 %v3689
      %v4223 = vunpack.c.h.b16 %v3689
      %v4224 = vunpack.c.l.b16 %v3690
      %v4225 = vunpack.c.h.b16 %v3690
      %v4226 = vunpack.c.l.b16 %v3691
      %v4227 = vunpack.c.h.b16 %v3691
      %v4228 = vunpack.c.l.b16 %v3692
      %v4229 = vunpack.c.l.b16 %v3693
      %v4230 = vunpack.c.h.b16 %v3693
      %v4231 = vunpack.c.l.b16 %v3694
      %v4232 = vunpack.c.h.b16 %v3694
      %v4233 = vunpack.c.l.b16 %v3695
      %v4234 = vunpack.c.h.b16 %v3695
      %v4235 = vunpack.c.l.b16 %v3696
      %v4236 = vunpack.c.h.b16 %v3696
      %v4237 = vunpack.c.l.b16 %v3697
      %v4238 = vunpack.c.l.b16 %v3698
      %v4239 = vunpack.c.h.b16 %v3698
      %v4240 = vunpack.c.l.b16 %v3699
      %v4241 = vunpack.c.h.b16 %v3699
      %v4242 = vunpack.c.l.b16 %v3700
      %v4243 = vunpack.c.h.b16 %v3700
      %v4244 = vunpack.c.l.b16 %v3701
      %v4245 = vunpack.c.h.b16 %v3701
      %v4246 = vunpack.c.l.b16 %v3702
      %v4247 = vunpack.c.l.b16 %v3703
      %v4248 = vunpack.c.h.b16 %v3703
      %v4249 = vunpack.c.l.b16 %v3704
      %v4250 = vunpack.c.h.b16 %v3704
      %v4251 = vunpack.c.l.b16 %v3705
      %v4252 = vunpack.c.h.b16 %v3705
      %v4253 = vunpack.c.l.b16 %v3706
      %v4254 = vunpack.c.h.b16 %v3706
      %v4255 = vunpack.c.l.b16 %v3707
      %v4256 = vunpack.c.l.b16 %v3708
      %v4257 = vunpack.c.h.b16 %v3708
      %v4258 = vunpack.c.l.b16 %v3709
      %v4259 = vunpack.c.h.b16 %v3709
      %v4260 = vunpack.c.l.b16 %v3710
      %v4261 = vunpack.c.h.b16 %v3710
      %v4262 = vunpack.c.l.b16 %v3711
      %v4263 = vunpack.c.h.b16 %v3711
      %v4264 = vunpack.c.l.b16 %v3712
      %v4265 = vunpack.c.l.b16 %v3713
      %v4266 = vunpack.c.h.b16 %v3713
      %v4267 = vunpack.c.l.b16 %v3714
      %v4268 = vunpack.c.h.b16 %v3714
      %v4269 = vunpack.c.l.b16 %v3715
      %v4270 = vunpack.c.h.b16 %v3715
      %v4271 = vunpack.c.l.b16 %v3716
      %v4272 = vunpack.c.h.b16 %v3716
      %v4273 = vunpack.c.l.b16 %v3717
      %v4274 = vunpack.c.l.b16 %v3718
      %v4275 = vunpack.c.h.b16 %v3718
      %v4276 = vunpack.c.l.b16 %v3719
      %v4277 = vunpack.c.h.b16 %v3719
      %v4278 = vunpack.c.l.b16 %v3720
      %v4279 = vunpack.c.h.b16 %v3720
      %v4280 = vunpack.c.l.b16 %v3721
      %v4281 = vunpack.c.h.b16 %v3721
      %v4282 = vunpack.c.l.b16 %v3722
      %v4283 = vunpack.c.l.b16 %v3723
      %v4284 = vunpack.c.h.b16 %v3723
      %v4285 = vunpack.c.l.b16 %v3724
      %v4286 = vunpack.c.h.b16 %v3724
      %v4287 = vunpack.c.l.b16 %v3725
      %v4288 = vunpack.c.h.b16 %v3725
      %v4289 = vunpack.c.l.b16 %v3726
      %v4290 = vunpack.c.h.b16 %v3726
      %v4291 = vunpack.c.l.b16 %v3727
      %v4292 = vunpack.c.l.b16 %v3728
      %v4293 = vunpack.c.h.b16 %v3728
      %v4294 = vunpack.c.l.b16 %v3729
      %v4295 = vunpack.c.h.b16 %v3729
      %v4296 = vunpack.c.l.b16 %v3730
      %v4297 = vunpack.c.h.b16 %v3730
      %v4298 = vunpack.c.l.b16 %v3731
      %v4299 = vunpack.c.h.b16 %v3731
      %v4300 = vunpack.c.l.b16 %v3732
      %v4301 = vunpack.c.l.b16 %v3733
      %v4302 = vunpack.c.h.b16 %v3733
      %v4303 = vunpack.c.l.b16 %v3734
      %v4304 = vunpack.c.h.b16 %v3734
      %v4305 = vunpack.c.l.b16 %v3735
      %v4306 = vunpack.c.h.b16 %v3735
      %v4307 = vunpack.c.l.b16 %v3736
      %v4308 = vunpack.c.h.b16 %v3736
      %v4309 = vunpack.c.l.b16 %v3737
      %v4310 = vunpack.c.l.b16 %v3738
      %v4311 = vunpack.c.h.b16 %v3738
      %v4312 = vunpack.c.l.b16 %v3739
      %v4313 = vunpack.c.h.b16 %v3739
      %v4314 = vunpack.c.l.b16 %v3740
      %v4315 = vunpack.c.h.b16 %v3740
      %v4316 = vunpack.c.l.b16 %v3741
      %v4317 = vunpack.c.h.b16 %v3741
      %v4318 = vunpack.c.l.b16 %v3742
      %v4319 = vunpack.c.l.b16 %v3743
      %v4320 = vunpack.c.h.b16 %v3743
      %v4321 = vunpack.c.l.b16 %v3744
      %v4322 = vunpack.c.h.b16 %v3744
      %v4323 = vunpack.c.l.b16 %v3745
      %v4324 = vunpack.c.h.b16 %v3745
      %v4325 = vunpack.c.l.b16 %v3746
      %v4326 = vunpack.c.h.b16 %v3746
      %v4327 = vunpack.c.l.b16 %v3747
      %v4328 = vunpack.c.l.b16 %v3748
      %v4329 = vunpack.c.h.b16 %v3748
      %v4330 = vunpack.c.l.b16 %v3749
      %v4331 = vunpack.c.h.b16 %v3749
      %v4332 = vunpack.c.l.b16 %v3750
      %v4333 = vunpack.c.h.b16 %v3750
      %v4334 = vunpack.c.l.b16 %v3751
      %v4335 = vunpack.c.h.b16 %v3751
      %v4336 = vunpack.c.l.b16 %v3752
      %v4337 = vunpack.c.l.b16 %v3753
      %v4338 = vunpack.c.h.b16 %v3753
      %v4339 = vunpack.c.l.b16 %v3754
      %v4340 = vunpack.c.h.b16 %v3754
      %v4341 = vunpack.c.l.b16 %v3755
      %v4342 = vunpack.c.h.b16 %v3755
      %v4343 = vunpack.c.l.b16 %v3756
      %v4344 = vunpack.c.h.b16 %v3756
      %v4345 = vunpack.c.l.b16 %v3757
      %v4346 = vunpack.c.l.b16 %v3758
      %v4347 = vunpack.c.h.b16 %v3758
      %v4348 = vunpack.c.l.b16 %v3759
      %v4349 = vunpack.c.h.b16 %v3759
      %v4350 = vunpack.c.l.b16 %v3760
      %v4351 = vunpack.c.h.b16 %v3760
      %v4352 = vunpack.c.l.b16 %v3761
      %v4353 = vunpack.c.h.b16 %v3761
      %v4354 = vunpack.c.l.b16 %v3762
      %v4355 = vpack.c.b16 %v4076, %v4067
      %v4356 = vpack.c.b16 %v4077, %v4068
      %v4357 = vpack.c.b16 %v4078, %v4069
      %v4358 = vpack.c.b16 %v4079, %v4070
      %v4359 = vpack.c.b16 %v4080, %v4071
      %v4360 = vpack.c.b16 %v4081, %v4072
      %v4361 = vpack.c.b16 %v4082, %v4073
      %v4362 = vpack.c.b16 %v4083, %v4074
      %v4363 = vpack.c.b16 %v4084, %v4075
      %v4364 = vpack.c.b16 %v4094, %v4085
      %v4365 = vpack.c.b16 %v4095, %v4086
      %v4366 = vpack.c.b16 %v4096, %v4087
      %v4367 = vpack.c.b16 %v4097, %v4088
      %v4368 = vpack.c.b16 %v4098, %v4089
      %v4369 = vpack.c.b16 %v4099, %v4090
      %v4370 = vpack.c.b16 %v4100, %v4091
      %v4371 = vpack.c.b16 %v4101, %v4092
      %v4372 = vpack.c.b16 %v4102, %v4093
      %v4373 = vpack.c.b16 %v4112, %v4103
      %v4374 = vpack.c.b16 %v4113, %v4104
      %v4375 = vpack.c.b16 %v4114, %v4105
      %v4376 = vpack.c.b16 %v4115, %v4106
      %v4377 = vpack.c.b16 %v4116, %v4107
      %v4378 = vpack.c.b16 %v4117, %v4108
      %v4379 = vpack.c.b16 %v4118, %v4109
      %v4380 = vpack.c.b16 %v4119, %v4110
      %v4381 = vpack.c.b16 %v4120, %v4111
      %v4382 = vpack.c.b16 %v4130, %v4121
      %v4383 = vpack.c.b16 %v4131, %v4122
      %v4384 = vpack.c.b16 %v4132, %v4123
      %v4385 = vpack.c.b16 %v4133, %v4124
      %v4386 = vpack.c.b16 %v4134, %v4125
      %v4387 = vpack.c.b16 %v4135, %v4126
      %v4388 = vpack.c.b16 %v4136, %v4127
      %v4389 = vpack.c.b16 %v4137, %v4128
      %v4390 = vpack.c.b16 %v4138, %v4129
      %v4391 = vpack.c.b16 %v4148, %v4139
      %v4392 = vpack.c.b16 %v4149, %v4140
      %v4393 = vpack.c.b16 %v4150, %v4141
      %v4394 = vpack.c.b16 %v4151, %v4142
      %v4395 = vpack.c.b16 %v4152, %v4143
      %v4396 = vpack.c.b16 %v4153, %v4144
      %v4397 = vpack.c.b16 %v4154, %v4145
      %v4398 = vpack.c.b16 %v4155, %v4146
      %v4399 = vpack.c.b16 %v4156, %v4147
      %v4400 = vpack.c.b16 %v4166, %v4157
      %v4401 = vpack.c.b16 %v4167, %v4158
      %v4402 = vpack.c.b16 %v4168, %v4159
      %v4403 = vpack.c.b16 %v4169, %v4160
      %v4404 = vpack.c.b16 %v4170, %v4161
      %v4405 = vpack.c.b16 %v4171, %v4162
      %v4406 = vpack.c.b16 %v4172, %v4163
      %v4407 = vpack.c.b16 %v4173, %v4164
      %v4408 = vpack.c.b16 %v4174, %v4165
      %v4409 = vpack.c.b16 %v4184, %v4175
      %v4410 = vpack.c.b16 %v4185, %v4176
      %v4411 = vpack.c.b16 %v4186, %v4177
      %v4412 = vpack.c.b16 %v4187, %v4178
      %v4413 = vpack.c.b16 %v4188, %v4179
      %v4414 = vpack.c.b16 %v4189, %v4180
      %v4415 = vpack.c.b16 %v4190, %v4181
      %v4416 = vpack.c.b16 %v4191, %v4182
      %v4417 = vpack.c.b16 %v4192, %v4183
      %v4418 = vpack.c.b16 %v4202, %v4193
      %v4419 = vpack.c.b16 %v4203, %v4194
      %v4420 = vpack.c.b16 %v4204, %v4195
      %v4421 = vpack.c.b16 %v4205, %v4196
      %v4422 = vpack.c.b16 %v4206, %v4197
      %v4423 = vpack.c.b16 %v4207, %v4198
      %v4424 = vpack.c.b16 %v4208, %v4199
      %v4425 = vpack.c.b16 %v4209, %v4200
      %v4426 = vpack.c.b16 %v4210, %v4201
      %v4427 = vpack.c.b16 %v4220, %v4211
      %v4428 = vpack.c.b16 %v4221, %v4212
      %v4429 = vpack.c.b16 %v4222, %v4213
      %v4430 = vpack.c.b16 %v4223, %v4214
      %v4431 = vpack.c.b16 %v4224, %v4215
      %v4432 = vpack.c.b16 %v4225, %v4216
      %v4433 = vpack.c.b16 %v4226, %v4217
      %v4434 = vpack.c.b16 %v4227, %v4218
      %v4435 = vpack.c.b16 %v4228, %v4219
      %v4436 = vpack.c.b16 %v4238, %v4229
      %v4437 = vpack.c.b16 %v4239, %v4230
      %v4438 = vpack.c.b16 %v4240, %v4231
      %v4439 = vpack.c.b16 %v4241, %v4232
      %v4440 = vpack.c.b16 %v4242, %v4233
      %v4441 = vpack.c.b16 %v4243, %v4234
      %v4442 = vpack.c.b16 %v4244, %v4235
      %v4443 = vpack.c.b16 %v4245, %v4236
      %v4444 = vpack.c.b16 %v4246, %v4237
      %v4445 = vpack.c.b16 %v4256, %v4247
      %v4446 = vpack.c.b16 %v4257, %v4248
      %v4447 = vpack.c.b16 %v4258, %v4249
      %v4448 = vpack.c.b16 %v4259, %v4250
      %v4449 = vpack.c.b16 %v4260, %v4251
      %v4450 = vpack.c.b16 %v4261, %v4252
      %v4451 = vpack.c.b16 %v4262, %v4253
      %v4452 = vpack.c.b16 %v4263, %v4254
      %v4453 = vpack.c.b16 %v4264, %v4255
      %v4454 = vpack.c.b16 %v4274, %v4265
      %v4455 = vpack.c.b16 %v4275, %v4266
      %v4456 = vpack.c.b16 %v4276, %v4267
      %v4457 = vpack.c.b16 %v4277, %v4268
      %v4458 = vpack.c.b16 %v4278, %v4269
      %v4459 = vpack.c.b16 %v4279, %v4270
      %v4460 = vpack.c.b16 %v4280, %v4271
      %v4461 = vpack.c.b16 %v4281, %v4272
      %v4462 = vpack.c.b16 %v4282, %v4273
      %v4463 = vpack.c.b16 %v4292, %v4283
      %v4464 = vpack.c.b16 %v4293, %v4284
      %v4465 = vpack.c.b16 %v4294, %v4285
      %v4466 = vpack.c.b16 %v4295, %v4286
      %v4467 = vpack.c.b16 %v4296, %v4287
      %v4468 = vpack.c.b16 %v4297, %v4288
      %v4469 = vpack.c.b16 %v4298, %v4289
      %v4470 = vpack.c.b16 %v4299, %v4290
      %v4471 = vpack.c.b16 %v4300, %v4291
      %v4472 = vpack.c.b16 %v4310, %v4301
      %v4473 = vpack.c.b16 %v4311, %v4302
      %v4474 = vpack.c.b16 %v4312, %v4303
      %v4475 = vpack.c.b16 %v4313, %v4304
      %v4476 = vpack.c.b16 %v4314, %v4305
      %v4477 = vpack.c.b16 %v4315, %v4306
      %v4478 = vpack.c.b16 %v4316, %v4307
      %v4479 = vpack.c.b16 %v4317, %v4308
      %v4480 = vpack.c.b16 %v4318, %v4309
      %v4481 = vpack.c.b16 %v4328, %v4319
      %v4482 = vpack.c.b16 %v4329, %v4320
      %v4483 = vpack.c.b16 %v4330, %v4321
      %v4484 = vpack.c.b16 %v4331, %v4322
      %v4485 = vpack.c.b16 %v4332, %v4323
      %v4486 = vpack.c.b16 %v4333, %v4324
      %v4487 = vpack.c.b16 %v4334, %v4325
      %v4488 = vpack.c.b16 %v4335, %v4326
      %v4489 = vpack.c.b16 %v4336, %v4327
      %v4490 = vpack.c.b16 %v4346, %v4337
      %v4491 = vpack.c.b16 %v4347, %v4338
      %v4492 = vpack.c.b16 %v4348, %v4339
      %v4493 = vpack.c.b16 %v4349, %v4340
      %v4494 = vpack.c.b16 %v4350, %v4341
      %v4495 = vpack.c.b16 %v4351, %v4342
      %v4496 = vpack.c.b16 %v4352, %v4343
      %v4497 = vpack.c.b16 %v4353, %v4344
      %v4498 = vpack.c.b16 %v4354, %v4345
      %v4787 = vunpack.c.l.b16 %v3763
      %v4788 = vunpack.c.l.b16 %v3764
      %v4789 = vunpack.c.l.b16 %v3765
      %v4790 = vunpack.c.l.b16 %v3766
      %v4791 = vunpack.c.l.b16 %v3767
      %v4792 = vunpack.c.l.b16 %v3768
      %v4793 = vunpack.c.l.b16 %v3769
      %v4794 = vunpack.c.l.b16 %v3770
      %v4795 = vunpack.c.l.b16 %v3771
      %v4796 = vunpack.c.l.b16 %v3772
      %v4797 = vunpack.c.l.b16 %v3773
      %v4798 = vunpack.c.l.b16 %v3774
      %v4799 = vunpack.c.l.b16 %v3775
      %v4800 = vunpack.c.l.b16 %v3776
      %v4801 = vunpack.c.l.b16 %v3777
      %v4802 = vunpack.c.l.b16 %v3778
      %v4803 = vunpack.c.l.b16 %v3779
      %v4804 = vunpack.c.l.b16 %v3780
      %v4805 = vunpack.c.l.b16 %v3781
      %v4806 = vunpack.c.l.b16 %v3782
      %v4807 = vunpack.c.l.b16 %v3783
      %v4808 = vunpack.c.l.b16 %v3784
      %v4809 = vunpack.c.l.b16 %v3785
      %v4810 = vunpack.c.l.b16 %v3786
      %v4811 = vunpack.c.l.b16 %v3787
      %v4812 = vunpack.c.l.b16 %v3788
      %v4813 = vunpack.c.l.b16 %v3789
      %v4814 = vunpack.c.l.b16 %v3790
      %v4815 = vunpack.c.l.b16 %v3791
      %v4816 = vunpack.c.l.b16 %v3792
      %v4817 = vunpack.c.l.b16 %v3793
      %v4818 = vunpack.c.l.b16 %v3794
      %v4819 = vunpack.c.l.b16 %v3795
      %v4820 = vunpack.c.l.b16 %v3796
      %v4821 = vunpack.c.l.b16 %v3797
      %v4822 = vunpack.c.l.b16 %v3798
      %v4823 = vunpack.c.l.b16 %v3799
      %v4824 = vunpack.c.l.b16 %v3800
      %v4825 = vunpack.c.l.b16 %v3801
      %v4826 = vunpack.c.l.b16 %v3802
      %v4827 = vunpack.c.l.b16 %v3803
      %v4828 = vunpack.c.l.b16 %v3804
      %v4829 = vunpack.c.l.b16 %v3805
      %v4830 = vunpack.c.l.b16 %v3806
      %v4831 = vunpack.c.l.b16 %v3807
      %v4832 = vunpack.c.l.b16 %v3808
      %v4833 = vunpack.c.l.b16 %v3809
      %v4834 = vunpack.c.l.b16 %v3810
      %v4835 = vunpack.c.l.b16 %v3811
      %v4836 = vunpack.c.l.b16 %v3812
      %v4837 = vunpack.c.l.b16 %v3813
      %v4838 = vunpack.c.l.b16 %v3814
      %v4839 = vunpack.c.l.b16 %v3815
      %v4840 = vunpack.c.l.b16 %v3816
      %v4841 = vunpack.c.l.b16 %v3817
      %v4842 = vunpack.c.l.b16 %v3818
      %v4843 = vunpack.c.l.b16 %v3819
      %v4844 = vunpack.c.l.b16 %v3820
      %v4845 = vunpack.c.l.b16 %v3821
      %v4846 = vunpack.c.l.b16 %v3822
      %v4847 = vunpack.c.l.b16 %v3823
      %v4848 = vunpack.c.l.b16 %v3824
      %v4849 = vunpack.c.l.b16 %v3825
      %v4850 = vunpack.c.l.b16 %v3826
      %v4851 = vunpack.c.l.b16 %v3827
      %v4852 = vunpack.c.l.b16 %v3828
      %v4853 = vunpack.c.l.b16 %v3829
      %v4854 = vunpack.c.l.b16 %v3830
      %v4855 = vunpack.c.l.b16 %v3831
      %v4856 = vunpack.c.l.b16 %v3832
      %v4857 = vunpack.c.l.b16 %v3833
      %v4858 = vunpack.c.l.b16 %v3834
      %v4859 = vunpack.c.l.b16 %v3835
      %v4860 = vunpack.c.l.b16 %v3836
      %v4861 = vunpack.c.l.b16 %v3837
      %v4862 = vunpack.c.l.b16 %v3838
      %v4863 = vunpack.c.l.b16 %v3839
      %v4864 = vunpack.c.l.b16 %v3840
      %v4865 = vunpack.c.l.b16 %v3841
      %v4866 = vunpack.c.l.b16 %v3842
      %v4867 = vunpack.c.l.b16 %v3843
      %v4868 = vunpack.c.l.b16 %v3844
      %v4869 = vunpack.c.l.b16 %v3845
      %v4870 = vunpack.c.l.b16 %v3846
      %v4871 = vunpack.c.l.b16 %v3847
      %v4872 = vunpack.c.l.b16 %v3848
      %v4873 = vunpack.c.l.b16 %v3849
      %v4874 = vunpack.c.l.b16 %v3850
      %v4875 = vunpack.c.l.b16 %v3851
      %v4876 = vunpack.c.l.b16 %v3852
      %v4877 = vunpack.c.l.b16 %v3853
      %v4878 = vunpack.c.l.b16 %v3854
      %v4879 = vunpack.c.l.b16 %v3855
      %v4880 = vunpack.c.l.b16 %v3856
      %v4881 = vunpack.c.l.b16 %v3857
      %v4882 = vunpack.c.l.b16 %v3858
      %v4883 = vunpack.c.l.b16 %v3859
      %v4884 = vunpack.c.l.b16 %v3860
      %v4885 = vunpack.c.l.b16 %v3861
      %v4886 = vunpack.c.l.b16 %v3862
      %v4887 = vunpack.c.l.b16 %v3863
      %v4888 = vunpack.c.l.b16 %v3864
      %v4889 = vunpack.c.l.b16 %v3865
      %v4890 = vunpack.c.l.b16 %v3866
      %v4891 = vunpack.c.l.b16 %v3867
      %v4892 = vunpack.c.l.b16 %v3868
      %v4893 = vunpack.c.l.b16 %v3869
      %v4894 = vunpack.c.l.b16 %v3870
      %v4895 = vunpack.c.l.b16 %v3871
      %v4896 = vunpack.c.l.b16 %v3872
      %v4897 = vunpack.c.l.b16 %v3873
      %v4898 = vunpack.c.l.b16 %v3874
      %v4899 = vunpack.c.l.b16 %v3875
      %v4900 = vunpack.c.l.b16 %v3876
      %v4901 = vunpack.c.l.b16 %v3877
      %v4902 = vunpack.c.l.b16 %v3878
      %v4903 = vunpack.c.l.b16 %v3879
      %v4904 = vunpack.c.l.b16 %v3880
      %v4905 = vunpack.c.l.b16 %v3881
      %v4906 = vunpack.c.l.b16 %v3882
      %v4907 = vunpack.c.l.b16 %v3883
      %v4908 = vunpack.c.l.b16 %v3884
      %v4909 = vunpack.c.l.b16 %v3885
      %v4910 = vunpack.c.l.b16 %v3886
      %v4911 = vunpack.c.l.b16 %v3887
      %v4912 = vunpack.c.l.b16 %v3888
      %v4913 = vunpack.c.l.b16 %v3889
      %v4914 = vunpack.c.l.b16 %v3890
      %v4915 = vunpack.c.l.b16 %v3891
      %v4916 = vunpack.c.l.b16 %v3892
      %v4917 = vunpack.c.l.b16 %v3893
      %v4918 = vunpack.c.l.b16 %v3894
      %v4919 = vunpack.c.l.b16 %v3895
      %v4920 = vunpack.c.l.b16 %v3896
      %v4921 = vunpack.c.l.b16 %v3897
      %v4922 = vunpack.c.l.b16 %v3898
      %v4923 = vunpack.c.l.b16 %v3899
      %v4924 = vunpack.c.l.b16 %v3900
      %v4925 = vunpack.c.l.b16 %v3901
      %v4926 = vunpack.c.l.b16 %v3902
      %v4927 = vunpack.c.l.b16 %v3903
      %v4928 = vunpack.c.l.b16 %v3904
      %v4929 = vunpack.c.l.b16 %v3905
      %v4930 = vunpack.c.l.b16 %v3906
      %v4931 = vpack.c.b16 %v4788, %v4787
      %v4932 = vpack.c.b16 %v4790, %v4789
      %v4933 = vpack.c.b16 %v4792, %v4791
      %v4934 = vpack.c.b16 %v4794, %v4793
      %v4935 = vpack.c.b16 %v4796, %v4795
      %v4936 = vpack.c.b16 %v4798, %v4797
      %v4937 = vpack.c.b16 %v4800, %v4799
      %v4938 = vpack.c.b16 %v4802, %v4801
      %v4939 = vpack.c.b16 %v4804, %v4803
      %v4940 = vpack.c.b16 %v4806, %v4805
      %v4941 = vpack.c.b16 %v4808, %v4807
      %v4942 = vpack.c.b16 %v4810, %v4809
      %v4943 = vpack.c.b16 %v4812, %v4811
      %v4944 = vpack.c.b16 %v4814, %v4813
      %v4945 = vpack.c.b16 %v4816, %v4815
      %v4946 = vpack.c.b16 %v4818, %v4817
      %v4947 = vpack.c.b16 %v4820, %v4819
      %v4948 = vpack.c.b16 %v4822, %v4821
      %v4949 = vpack.c.b16 %v4824, %v4823
      %v4950 = vpack.c.b16 %v4826, %v4825
      %v4951 = vpack.c.b16 %v4828, %v4827
      %v4952 = vpack.c.b16 %v4830, %v4829
      %v4953 = vpack.c.b16 %v4832, %v4831
      %v4954 = vpack.c.b16 %v4834, %v4833
      %v4955 = vpack.c.b16 %v4836, %v4835
      %v4956 = vpack.c.b16 %v4838, %v4837
      %v4957 = vpack.c.b16 %v4840, %v4839
      %v4958 = vpack.c.b16 %v4842, %v4841
      %v4959 = vpack.c.b16 %v4844, %v4843
      %v4960 = vpack.c.b16 %v4846, %v4845
      %v4961 = vpack.c.b16 %v4848, %v4847
      %v4962 = vpack.c.b16 %v4850, %v4849
      %v4963 = vpack.c.b16 %v4852, %v4851
      %v4964 = vpack.c.b16 %v4854, %v4853
      %v4965 = vpack.c.b16 %v4856, %v4855
      %v4966 = vpack.c.b16 %v4858, %v4857
      %v4967 = vpack.c.b16 %v4860, %v4859
      %v4968 = vpack.c.b16 %v4862, %v4861
      %v4969 = vpack.c.b16 %v4864, %v4863
      %v4970 = vpack.c.b16 %v4866, %v4865
      %v4971 = vpack.c.b16 %v4868, %v4867
      %v4972 = vpack.c.b16 %v4870, %v4869
      %v4973 = vpack.c.b16 %v4872, %v4871
      %v4974 = vpack.c.b16 %v4874, %v4873
      %v4975 = vpack.c.b16 %v4876, %v4875
      %v4976 = vpack.c.b16 %v4878, %v4877
      %v4977 = vpack.c.b16 %v4880, %v4879
      %v4978 = vpack.c.b16 %v4882, %v4881
      %v4979 = vpack.c.b16 %v4884, %v4883
      %v4980 = vpack.c.b16 %v4886, %v4885
      %v4981 = vpack.c.b16 %v4888, %v4887
      %v4982 = vpack.c.b16 %v4890, %v4889
      %v4983 = vpack.c.b16 %v4892, %v4891
      %v4984 = vpack.c.b16 %v4894, %v4893
      %v4985 = vpack.c.b16 %v4896, %v4895
      %v4986 = vpack.c.b16 %v4898, %v4897
      %v4987 = vpack.c.b16 %v4900, %v4899
      %v4988 = vpack.c.b16 %v4902, %v4901
      %v4989 = vpack.c.b16 %v4904, %v4903
      %v4990 = vpack.c.b16 %v4906, %v4905
      %v4991 = vpack.c.b16 %v4908, %v4907
      %v4992 = vpack.c.b16 %v4910, %v4909
      %v4993 = vpack.c.b16 %v4912, %v4911
      %v4994 = vpack.c.b16 %v4914, %v4913
      %v4995 = vpack.c.b16 %v4916, %v4915
      %v4996 = vpack.c.b16 %v4918, %v4917
      %v4997 = vpack.c.b16 %v4920, %v4919
      %v4998 = vpack.c.b16 %v4922, %v4921
      %v4999 = vpack.c.b16 %v4924, %v4923
      %v5000 = vpack.c.b16 %v4926, %v4925
      %v5001 = vpack.c.b16 %v4928, %v4927
      %v5002 = vpack.c.b16 %v4930, %v4929
      %5075 = vmatprep.subr.bf16.mxu0 0
      %5076 = vmatpush1.bf16.msra.mxu0 %v4938
      %5077 = vmatprep.subr.bf16.mxu0 0
      %5078 = vmatpush1.bf16.msra.mxu0 %v4937
      %5079 = vmatprep.subr.bf16.mxu0 0
      %5080 = vmatpush1.bf16.msra.mxu0 %v4936
      %5081 = vmatprep.subr.bf16.mxu0 0
      %5082 = vmatpush1.bf16.msra.mxu0 %v4935
      %5083 = vmatprep.subr.bf16.mxu0 0
      %5084 = vmatpush1.bf16.msra.mxu0 %v4934
      %5085 = vmatprep.subr.bf16.mxu0 0
      %5086 = vmatpush1.bf16.msra.mxu0 %v4933
      %5087 = vmatprep.subr.bf16.mxu0 0
      %5088 = vmatpush1.bf16.msra.mxu0 %v4932
      %5089 = vmatprep.subr.bf16.mxu0 0
      %5090 = vmatpush1.bf16.msra.mxu0 %v4931
      %5091 = vmatprep.subr.bf16.mxu0 0
      %5092 = vmatpush2.bf16.msra.mxu0 %v4946
      %5093 = vmatprep.subr.bf16.mxu0 0
      %5094 = vmatpush2.bf16.msra.mxu0 %v4945
      %5095 = vmatprep.subr.bf16.mxu0 0
      %5096 = vmatpush2.bf16.msra.mxu0 %v4944
      %5097 = vmatprep.subr.bf16.mxu0 0
      %5098 = vmatpush2.bf16.msra.mxu0 %v4943
      %5099 = vmatprep.subr.bf16.mxu0 0
      %5100 = vmatpush2.bf16.msra.mxu0 %v4942
      %5101 = vmatprep.subr.bf16.mxu0 0
      %5102 = vmatpush2.bf16.msra.mxu0 %v4941
      %5103 = vmatprep.subr.bf16.mxu0 0
      %5104 = vmatpush2.bf16.msra.mxu0 %v4940
      %5105 = vmatprep.subr.bf16.mxu0 0
      %5106 = vmatpush2.bf16.msra.mxu0 %v4939
      %5107 = vmatprep.mubr.bf16.mxu0 %v4356
      %5108 = vmatmul.mubr.bf16.gmra.mxu0 %v4355
      %v5109 = vpop.f32.mrf.mxu0
      %v5110 = vadd.f32 0.0, %v5109
      %v5111 = vpop.f32.mrf.mxu0
      %v5112 = vpop.f32.mrf.mxu0
      %v5113 = vadd.f32 0.0, %v5112
      %v5114 = vpop.f32.mrf.mxu0
      %5115 = vmatprep.mubr.bf16.mxu0 %v4365
      %5116 = vmatmul.mubr.bf16.gmra.mxu0 %v4364
      %v5117 = vpop.f32.mrf.mxu0
      %v5118 = vadd.f32 0.0, %v5117
      %v5119 = vpop.f32.mrf.mxu0
      %v5120 = vpop.f32.mrf.mxu0
      %v5121 = vadd.f32 0.0, %v5120
      %v5122 = vpop.f32.mrf.mxu0
      %5123 = vmatprep.mubr.bf16.mxu0 %v4374
      %5124 = vmatmul.mubr.bf16.gmra.mxu0 %v4373
      %v5125 = vpop.f32.mrf.mxu0
      %v5126 = vadd.f32 0.0, %v5125
      %v5127 = vpop.f32.mrf.mxu0
      %v5128 = vpop.f32.mrf.mxu0
      %v5129 = vadd.f32 0.0, %v5128
      %v5130 = vpop.f32.mrf.mxu0
      %5131 = vmatprep.mubr.bf16.mxu0 %v4383
      %5132 = vmatmul.mubr.bf16.gmra.mxu0 %v4382
      %v5133 = vpop.f32.mrf.mxu0
      %v5134 = vadd.f32 0.0, %v5133
      %v5135 = vpop.f32.mrf.mxu0
      %v5136 = vpop.f32.mrf.mxu0
      %v5137 = vadd.f32 0.0, %v5136
      %v5138 = vpop.f32.mrf.mxu0
      %5139 = vmatprep.mubr.bf16.mxu0 %v4392
      %5140 = vmatmul.mubr.bf16.gmra.mxu0 %v4391
      %v5141 = vpop.f32.mrf.mxu0
      %v5142 = vadd.f32 0.0, %v5141
      %v5143 = vpop.f32.mrf.mxu0
      %v5144 = vpop.f32.mrf.mxu0
      %v5145 = vadd.f32 0.0, %v5144
      %v5146 = vpop.f32.mrf.mxu0
      %5147 = vmatprep.mubr.bf16.mxu0 %v4401
      %5148 = vmatmul.mubr.bf16.gmra.mxu0 %v4400
      %v5149 = vpop.f32.mrf.mxu0
      %v5150 = vadd.f32 0.0, %v5149
      %v5151 = vpop.f32.mrf.mxu0
      %v5152 = vpop.f32.mrf.mxu0
      %v5153 = vadd.f32 0.0, %v5152
      %v5154 = vpop.f32.mrf.mxu0
      %5155 = vmatprep.mubr.bf16.mxu0 %v4410
      %5156 = vmatmul.mubr.bf16.gmra.mxu0 %v4409
      %v5157 = vpop.f32.mrf.mxu0
      %v5158 = vadd.f32 0.0, %v5157
      %v5159 = vpop.f32.mrf.mxu0
      %v5160 = vpop.f32.mrf.mxu0
      %v5161 = vadd.f32 0.0, %v5160
      %v5162 = vpop.f32.mrf.mxu0
      %5163 = vmatprep.mubr.bf16.mxu0 %v4419
      %5164 = vmatmul.mubr.bf16.gmra.mxu0 %v4418
      %v5165 = vpop.f32.mrf.mxu0
      %v5166 = vadd.f32 0.0, %v5165
      %v5167 = vpop.f32.mrf.mxu0
      %v5168 = vpop.f32.mrf.mxu0
      %v5169 = vadd.f32 0.0, %v5168
      %v5170 = vpop.f32.mrf.mxu0
      %5171 = vmatprep.mubr.bf16.mxu0 %v4428
      %5172 = vmatmul.mubr.bf16.gmra.mxu0 %v4427
      %v5173 = vpop.f32.mrf.mxu0
      %v5174 = vadd.f32 0.0, %v5173
      %v5175 = vpop.f32.mrf.mxu0
      %v5176 = vpop.f32.mrf.mxu0
      %v5177 = vadd.f32 0.0, %v5176
      %v5178 = vpop.f32.mrf.mxu0
      %5179 = vmatprep.mubr.bf16.mxu0 %v4437
      %5180 = vmatmul.mubr.bf16.gmra.mxu0 %v4436
      %v5181 = vpop.f32.mrf.mxu0
      %v5182 = vadd.f32 0.0, %v5181
      %v5183 = vpop.f32.mrf.mxu0
      %v5184 = vpop.f32.mrf.mxu0
      %v5185 = vadd.f32 0.0, %v5184
      %v5186 = vpop.f32.mrf.mxu0
      %5187 = vmatprep.mubr.bf16.mxu0 %v4446
      %5188 = vmatmul.mubr.bf16.gmra.mxu0 %v4445
      %v5189 = vpop.f32.mrf.mxu0
      %v5190 = vadd.f32 0.0, %v5189
      %v5191 = vpop.f32.mrf.mxu0
      %v5192 = vpop.f32.mrf.mxu0
      %v5193 = vadd.f32 0.0, %v5192
      %v5194 = vpop.f32.mrf.mxu0
      %5195 = vmatprep.mubr.bf16.mxu0 %v4455
      %5196 = vmatmul.mubr.bf16.gmra.mxu0 %v4454
      %v5197 = vpop.f32.mrf.mxu0
      %v5198 = vadd.f32 0.0, %v5197
      %v5199 = vpop.f32.mrf.mxu0
      %v5200 = vpop.f32.mrf.mxu0
      %v5201 = vadd.f32 0.0, %v5200
      %v5202 = vpop.f32.mrf.mxu0
      %5203 = vmatprep.mubr.bf16.mxu0 %v4464
      %5204 = vmatmul.mubr.bf16.gmra.mxu0 %v4463
      %v5205 = vpop.f32.mrf.mxu0
      %v5206 = vadd.f32 0.0, %v5205
      %v5207 = vpop.f32.mrf.mxu0
      %v5208 = vpop.f32.mrf.mxu0
      %v5209 = vadd.f32 0.0, %v5208
      %v5210 = vpop.f32.mrf.mxu0
      %5211 = vmatprep.mubr.bf16.mxu0 %v4473
      %5212 = vmatmul.mubr.bf16.gmra.mxu0 %v4472
      %v5213 = vpop.f32.mrf.mxu0
      %v5214 = vadd.f32 0.0, %v5213
      %v5215 = vpop.f32.mrf.mxu0
      %v5216 = vpop.f32.mrf.mxu0
      %v5217 = vadd.f32 0.0, %v5216
      %v5218 = vpop.f32.mrf.mxu0
      %5219 = vmatprep.mubr.bf16.mxu0 %v4482
      %5220 = vmatmul.mubr.bf16.gmra.mxu0 %v4481
      %v5221 = vpop.f32.mrf.mxu0
      %v5222 = vadd.f32 0.0, %v5221
      %v5223 = vpop.f32.mrf.mxu0
      %v5224 = vpop.f32.mrf.mxu0
      %v5225 = vadd.f32 0.0, %v5224
      %v5226 = vpop.f32.mrf.mxu0
      %5227 = vmatprep.mubr.bf16.mxu0 %v4491
      %5228 = vmatmul.mubr.bf16.gmra.mxu0 %v4490
      %v5229 = vpop.f32.mrf.mxu0
      %v5230 = vadd.f32 0.0, %v5229
      %v5231 = vpop.f32.mrf.mxu0
      %v5232 = vpop.f32.mrf.mxu0
      %v5233 = vadd.f32 0.0, %v5232
      %v5234 = vpop.f32.mrf.mxu0
      %5235 = vdwg.mxu0
      %5236 = vmatprep.subr.bf16.mxu0 0
      %5237 = vmatpush1.bf16.msra.mxu0 %v4954
      %5238 = vmatprep.subr.bf16.mxu0 0
      %5239 = vmatpush1.bf16.msra.mxu0 %v4953
      %5240 = vmatprep.subr.bf16.mxu0 0
      %5241 = vmatpush1.bf16.msra.mxu0 %v4952
      %5242 = vmatprep.subr.bf16.mxu0 0
      %5243 = vmatpush1.bf16.msra.mxu0 %v4951
      %5244 = vmatprep.subr.bf16.mxu0 0
      %5245 = vmatpush1.bf16.msra.mxu0 %v4950
      %5246 = vmatprep.subr.bf16.mxu0 0
      %5247 = vmatpush1.bf16.msra.mxu0 %v4949
      %5248 = vmatprep.subr.bf16.mxu0 0
      %5249 = vmatpush1.bf16.msra.mxu0 %v4948
      %5250 = vmatprep.subr.bf16.mxu0 0
      %5251 = vmatpush1.bf16.msra.mxu0 %v4947
      %5252 = vmatprep.subr.bf16.mxu0 0
      %5253 = vmatpush2.bf16.msra.mxu0 %v4962
      %5254 = vmatprep.subr.bf16.mxu0 0
      %5255 = vmatpush2.bf16.msra.mxu0 %v4961
      %5256 = vmatprep.subr.bf16.mxu0 0
      %5257 = vmatpush2.bf16.msra.mxu0 %v4960
      %5258 = vmatprep.subr.bf16.mxu0 0
      %5259 = vmatpush2.bf16.msra.mxu0 %v4959
      %5260 = vmatprep.subr.bf16.mxu0 0
      %5261 = vmatpush2.bf16.msra.mxu0 %v4958
      %5262 = vmatprep.subr.bf16.mxu0 0
      %5263 = vmatpush2.bf16.msra.mxu0 %v4957
      %5264 = vmatprep.subr.bf16.mxu0 0
      %5265 = vmatpush2.bf16.msra.mxu0 %v4956
      %5266 = vmatprep.subr.bf16.mxu0 0
      %5267 = vmatpush2.bf16.msra.mxu0 %v4955
      %5268 = vmatprep.mubr.bf16.mxu0 %v4358
      %5269 = vmatmul.mubr.bf16.gmra.mxu0 %v4357
      %v5270 = vpop.f32.mrf.mxu0
      %v5271 = vadd.f32 %v5110, %v5270
      %v5272 = vpop.f32.mrf.mxu0
      %v5273 = vpop.f32.mrf.mxu0
      %v5274 = vadd.f32 %v5113, %v5273
      %v5275 = vpop.f32.mrf.mxu0
      %5276 = vmatprep.mubr.bf16.mxu0 %v4367
      %5277 = vmatmul.mubr.bf16.gmra.mxu0 %v4366
      %v5278 = vpop.f32.mrf.mxu0
      %v5279 = vadd.f32 %v5118, %v5278
      %v5280 = vpop.f32.mrf.mxu0
      %v5281 = vpop.f32.mrf.mxu0
      %v5282 = vadd.f32 %v5121, %v5281
      %v5283 = vpop.f32.mrf.mxu0
      %5284 = vmatprep.mubr.bf16.mxu0 %v4376
      %5285 = vmatmul.mubr.bf16.gmra.mxu0 %v4375
      %v5286 = vpop.f32.mrf.mxu0
      %v5287 = vadd.f32 %v5126, %v5286
      %v5288 = vpop.f32.mrf.mxu0
      %v5289 = vpop.f32.mrf.mxu0
      %v5290 = vadd.f32 %v5129, %v5289
      %v5291 = vpop.f32.mrf.mxu0
      %5292 = vmatprep.mubr.bf16.mxu0 %v4385
      %5293 = vmatmul.mubr.bf16.gmra.mxu0 %v4384
      %v5294 = vpop.f32.mrf.mxu0
      %v5295 = vadd.f32 %v5134, %v5294
      %v5296 = vpop.f32.mrf.mxu0
      %v5297 = vpop.f32.mrf.mxu0
      %v5298 = vadd.f32 %v5137, %v5297
      %v5299 = vpop.f32.mrf.mxu0
      %5300 = vmatprep.mubr.bf16.mxu0 %v4394
      %5301 = vmatmul.mubr.bf16.gmra.mxu0 %v4393
      %v5302 = vpop.f32.mrf.mxu0
      %v5303 = vadd.f32 %v5142, %v5302
      %v5304 = vpop.f32.mrf.mxu0
      %v5305 = vpop.f32.mrf.mxu0
      %v5306 = vadd.f32 %v5145, %v5305
      %v5307 = vpop.f32.mrf.mxu0
      %5308 = vmatprep.mubr.bf16.mxu0 %v4403
      %5309 = vmatmul.mubr.bf16.gmra.mxu0 %v4402
      %v5310 = vpop.f32.mrf.mxu0
      %v5311 = vadd.f32 %v5150, %v5310
      %v5312 = vpop.f32.mrf.mxu0
      %v5313 = vpop.f32.mrf.mxu0
      %v5314 = vadd.f32 %v5153, %v5313
      %v5315 = vpop.f32.mrf.mxu0
      %5316 = vmatprep.mubr.bf16.mxu0 %v4412
      %5317 = vmatmul.mubr.bf16.gmra.mxu0 %v4411
      %v5318 = vpop.f32.mrf.mxu0
      %v5319 = vadd.f32 %v5158, %v5318
      %v5320 = vpop.f32.mrf.mxu0
      %v5321 = vpop.f32.mrf.mxu0
      %v5322 = vadd.f32 %v5161, %v5321
      %v5323 = vpop.f32.mrf.mxu0
      %5324 = vmatprep.mubr.bf16.mxu0 %v4421
      %5325 = vmatmul.mubr.bf16.gmra.mxu0 %v4420
      %v5326 = vpop.f32.mrf.mxu0
      %v5327 = vadd.f32 %v5166, %v5326
      %v5328 = vpop.f32.mrf.mxu0
      %v5329 = vpop.f32.mrf.mxu0
      %v5330 = vadd.f32 %v5169, %v5329
      %v5331 = vpop.f32.mrf.mxu0
      %5332 = vmatprep.mubr.bf16.mxu0 %v4430
      %5333 = vmatmul.mubr.bf16.gmra.mxu0 %v4429
      %v5334 = vpop.f32.mrf.mxu0
      %v5335 = vadd.f32 %v5174, %v5334
      %v5336 = vpop.f32.mrf.mxu0
      %v5337 = vpop.f32.mrf.mxu0
      %v5338 = vadd.f32 %v5177, %v5337
      %v5339 = vpop.f32.mrf.mxu0
      %5340 = vmatprep.mubr.bf16.mxu0 %v4439
      %5341 = vmatmul.mubr.bf16.gmra.mxu0 %v4438
      %v5342 = vpop.f32.mrf.mxu0
      %v5343 = vadd.f32 %v5182, %v5342
      %v5344 = vpop.f32.mrf.mxu0
      %v5345 = vpop.f32.mrf.mxu0
      %v5346 = vadd.f32 %v5185, %v5345
      %v5347 = vpop.f32.mrf.mxu0
      %5348 = vmatprep.mubr.bf16.mxu0 %v4448
      %5349 = vmatmul.mubr.bf16.gmra.mxu0 %v4447
      %v5350 = vpop.f32.mrf.mxu0
      %v5351 = vadd.f32 %v5190, %v5350
      %v5352 = vpop.f32.mrf.mxu0
      %v5353 = vpop.f32.mrf.mxu0
      %v5354 = vadd.f32 %v5193, %v5353
      %v5355 = vpop.f32.mrf.mxu0
      %5356 = vmatprep.mubr.bf16.mxu0 %v4457
      %5357 = vmatmul.mubr.bf16.gmra.mxu0 %v4456
      %v5358 = vpop.f32.mrf.mxu0
      %v5359 = vadd.f32 %v5198, %v5358
      %v5360 = vpop.f32.mrf.mxu0
      %v5361 = vpop.f32.mrf.mxu0
      %v5362 = vadd.f32 %v5201, %v5361
      %v5363 = vpop.f32.mrf.mxu0
      %5364 = vmatprep.mubr.bf16.mxu0 %v4466
      %5365 = vmatmul.mubr.bf16.gmra.mxu0 %v4465
      %v5366 = vpop.f32.mrf.mxu0
      %v5367 = vadd.f32 %v5206, %v5366
      %v5368 = vpop.f32.mrf.mxu0
      %v5369 = vpop.f32.mrf.mxu0
      %v5370 = vadd.f32 %v5209, %v5369
      %v5371 = vpop.f32.mrf.mxu0
      %5372 = vmatprep.mubr.bf16.mxu0 %v4475
      %5373 = vmatmul.mubr.bf16.gmra.mxu0 %v4474
      %v5374 = vpop.f32.mrf.mxu0
      %v5375 = vadd.f32 %v5214, %v5374
      %v5376 = vpop.f32.mrf.mxu0
      %v5377 = vpop.f32.mrf.mxu0
      %v5378 = vadd.f32 %v5217, %v5377
      %v5379 = vpop.f32.mrf.mxu0
      %5380 = vmatprep.mubr.bf16.mxu0 %v4484
      %5381 = vmatmul.mubr.bf16.gmra.mxu0 %v4483
      %v5382 = vpop.f32.mrf.mxu0
      %v5383 = vadd.f32 %v5222, %v5382
      %v5384 = vpop.f32.mrf.mxu0
      %v5385 = vpop.f32.mrf.mxu0
      %v5386 = vadd.f32 %v5225, %v5385
      %v5387 = vpop.f32.mrf.mxu0
      %5388 = vmatprep.mubr.bf16.mxu0 %v4493
      %5389 = vmatmul.mubr.bf16.gmra.mxu0 %v4492
      %v5390 = vpop.f32.mrf.mxu0
      %v5391 = vadd.f32 %v5230, %v5390
      %v5392 = vpop.f32.mrf.mxu0
      %v5393 = vpop.f32.mrf.mxu0
      %v5394 = vadd.f32 %v5233, %v5393
      %v5395 = vpop.f32.mrf.mxu0
      %5396 = vdwg.mxu0
      %5397 = vmatprep.subr.bf16.mxu0 0
      %5398 = vmatpush1.bf16.msra.mxu0 %v4970
      %5399 = vmatprep.subr.bf16.mxu0 0
      %5400 = vmatpush1.bf16.msra.mxu0 %v4969
      %5401 = vmatprep.subr.bf16.mxu0 0
      %5402 = vmatpush1.bf16.msra.mxu0 %v4968
      %5403 = vmatprep.subr.bf16.mxu0 0
      %5404 = vmatpush1.bf16.msra.mxu0 %v4967
      %5405 = vmatprep.subr.bf16.mxu0 0
      %5406 = vmatpush1.bf16.msra.mxu0 %v4966
      %5407 = vmatprep.subr.bf16.mxu0 0
      %5408 = vmatpush1.bf16.msra.mxu0 %v4965
      %5409 = vmatprep.subr.bf16.mxu0 0
      %5410 = vmatpush1.bf16.msra.mxu0 %v4964
      %5411 = vmatprep.subr.bf16.mxu0 0
      %5412 = vmatpush1.bf16.msra.mxu0 %v4963
      %5413 = vmatprep.subr.bf16.mxu0 0
      %5414 = vmatpush2.bf16.msra.mxu0 %v4978
      %5415 = vmatprep.subr.bf16.mxu0 0
      %5416 = vmatpush2.bf16.msra.mxu0 %v4977
      %5417 = vmatprep.subr.bf16.mxu0 0
      %5418 = vmatpush2.bf16.msra.mxu0 %v4976
      %5419 = vmatprep.subr.bf16.mxu0 0
      %5420 = vmatpush2.bf16.msra.mxu0 %v4975
      %5421 = vmatprep.subr.bf16.mxu0 0
      %5422 = vmatpush2.bf16.msra.mxu0 %v4974
      %5423 = vmatprep.subr.bf16.mxu0 0
      %5424 = vmatpush2.bf16.msra.mxu0 %v4973
      %5425 = vmatprep.subr.bf16.mxu0 0
      %5426 = vmatpush2.bf16.msra.mxu0 %v4972
      %5427 = vmatprep.subr.bf16.mxu0 0
      %5428 = vmatpush2.bf16.msra.mxu0 %v4971
      %5429 = vmatprep.mubr.bf16.mxu0 %v4360
      %5430 = vmatmul.mubr.bf16.gmra.mxu0 %v4359
      %v5431 = vpop.f32.mrf.mxu0
      %v5432 = vadd.f32 %v5271, %v5431
      %v5433 = vpop.f32.mrf.mxu0
      %v5434 = vpop.f32.mrf.mxu0
      %v5435 = vadd.f32 %v5274, %v5434
      %v5436 = vpop.f32.mrf.mxu0
      %5437 = vmatprep.mubr.bf16.mxu0 %v4369
      %5438 = vmatmul.mubr.bf16.gmra.mxu0 %v4368
      %v5439 = vpop.f32.mrf.mxu0
      %v5440 = vadd.f32 %v5279, %v5439
      %v5441 = vpop.f32.mrf.mxu0
      %v5442 = vpop.f32.mrf.mxu0
      %v5443 = vadd.f32 %v5282, %v5442
      %v5444 = vpop.f32.mrf.mxu0
      %5445 = vmatprep.mubr.bf16.mxu0 %v4378
      %5446 = vmatmul.mubr.bf16.gmra.mxu0 %v4377
      %v5447 = vpop.f32.mrf.mxu0
      %v5448 = vadd.f32 %v5287, %v5447
      %v5449 = vpop.f32.mrf.mxu0
      %v5450 = vpop.f32.mrf.mxu0
      %v5451 = vadd.f32 %v5290, %v5450
      %v5452 = vpop.f32.mrf.mxu0
      %5453 = vmatprep.mubr.bf16.mxu0 %v4387
      %5454 = vmatmul.mubr.bf16.gmra.mxu0 %v4386
      %v5455 = vpop.f32.mrf.mxu0
      %v5456 = vadd.f32 %v5295, %v5455
      %v5457 = vpop.f32.mrf.mxu0
      %v5458 = vpop.f32.mrf.mxu0
      %v5459 = vadd.f32 %v5298, %v5458
      %v5460 = vpop.f32.mrf.mxu0
      %5461 = vmatprep.mubr.bf16.mxu0 %v4396
      %5462 = vmatmul.mubr.bf16.gmra.mxu0 %v4395
      %v5463 = vpop.f32.mrf.mxu0
      %v5464 = vadd.f32 %v5303, %v5463
      %v5465 = vpop.f32.mrf.mxu0
      %v5466 = vpop.f32.mrf.mxu0
      %v5467 = vadd.f32 %v5306, %v5466
      %v5468 = vpop.f32.mrf.mxu0
      %5469 = vmatprep.mubr.bf16.mxu0 %v4405
      %5470 = vmatmul.mubr.bf16.gmra.mxu0 %v4404
      %v5471 = vpop.f32.mrf.mxu0
      %v5472 = vadd.f32 %v5311, %v5471
      %v5473 = vpop.f32.mrf.mxu0
      %v5474 = vpop.f32.mrf.mxu0
      %v5475 = vadd.f32 %v5314, %v5474
      %v5476 = vpop.f32.mrf.mxu0
      %5477 = vmatprep.mubr.bf16.mxu0 %v4414
      %5478 = vmatmul.mubr.bf16.gmra.mxu0 %v4413
      %v5479 = vpop.f32.mrf.mxu0
      %v5480 = vadd.f32 %v5319, %v5479
      %v5481 = vpop.f32.mrf.mxu0
      %v5482 = vpop.f32.mrf.mxu0
      %v5483 = vadd.f32 %v5322, %v5482
      %v5484 = vpop.f32.mrf.mxu0
      %5485 = vmatprep.mubr.bf16.mxu0 %v4423
      %5486 = vmatmul.mubr.bf16.gmra.mxu0 %v4422
      %v5487 = vpop.f32.mrf.mxu0
      %v5488 = vadd.f32 %v5327, %v5487
      %v5489 = vpop.f32.mrf.mxu0
      %v5490 = vpop.f32.mrf.mxu0
      %v5491 = vadd.f32 %v5330, %v5490
      %v5492 = vpop.f32.mrf.mxu0
      %5493 = vmatprep.mubr.bf16.mxu0 %v4432
      %5494 = vmatmul.mubr.bf16.gmra.mxu0 %v4431
      %v5495 = vpop.f32.mrf.mxu0
      %v5496 = vadd.f32 %v5335, %v5495
      %v5497 = vpop.f32.mrf.mxu0
      %v5498 = vpop.f32.mrf.mxu0
      %v5499 = vadd.f32 %v5338, %v5498
      %v5500 = vpop.f32.mrf.mxu0
      %5501 = vmatprep.mubr.bf16.mxu0 %v4441
      %5502 = vmatmul.mubr.bf16.gmra.mxu0 %v4440
      %v5503 = vpop.f32.mrf.mxu0
      %v5504 = vadd.f32 %v5343, %v5503
      %v5505 = vpop.f32.mrf.mxu0
      %v5506 = vpop.f32.mrf.mxu0
      %v5507 = vadd.f32 %v5346, %v5506
      %v5508 = vpop.f32.mrf.mxu0
      %5509 = vmatprep.mubr.bf16.mxu0 %v4450
      %5510 = vmatmul.mubr.bf16.gmra.mxu0 %v4449
      %v5511 = vpop.f32.mrf.mxu0
      %v5512 = vadd.f32 %v5351, %v5511
      %v5513 = vpop.f32.mrf.mxu0
      %v5514 = vpop.f32.mrf.mxu0
      %v5515 = vadd.f32 %v5354, %v5514
      %v5516 = vpop.f32.mrf.mxu0
      %5517 = vmatprep.mubr.bf16.mxu0 %v4459
      %5518 = vmatmul.mubr.bf16.gmra.mxu0 %v4458
      %v5519 = vpop.f32.mrf.mxu0
      %v5520 = vadd.f32 %v5359, %v5519
      %v5521 = vpop.f32.mrf.mxu0
      %v5522 = vpop.f32.mrf.mxu0
      %v5523 = vadd.f32 %v5362, %v5522
      %v5524 = vpop.f32.mrf.mxu0
      %5525 = vmatprep.mubr.bf16.mxu0 %v4468
      %5526 = vmatmul.mubr.bf16.gmra.mxu0 %v4467
      %v5527 = vpop.f32.mrf.mxu0
      %v5528 = vadd.f32 %v5367, %v5527
      %v5529 = vpop.f32.mrf.mxu0
      %v5530 = vpop.f32.mrf.mxu0
      %v5531 = vadd.f32 %v5370, %v5530
      %v5532 = vpop.f32.mrf.mxu0
      %5533 = vmatprep.mubr.bf16.mxu0 %v4477
      %5534 = vmatmul.mubr.bf16.gmra.mxu0 %v4476
      %v5535 = vpop.f32.mrf.mxu0
      %v5536 = vadd.f32 %v5375, %v5535
      %v5537 = vpop.f32.mrf.mxu0
      %v5538 = vpop.f32.mrf.mxu0
      %v5539 = vadd.f32 %v5378, %v5538
      %v5540 = vpop.f32.mrf.mxu0
      %5541 = vmatprep.mubr.bf16.mxu0 %v4486
      %5542 = vmatmul.mubr.bf16.gmra.mxu0 %v4485
      %v5543 = vpop.f32.mrf.mxu0
      %v5544 = vadd.f32 %v5383, %v5543
      %v5545 = vpop.f32.mrf.mxu0
      %v5546 = vpop.f32.mrf.mxu0
      %v5547 = vadd.f32 %v5386, %v5546
      %v5548 = vpop.f32.mrf.mxu0
      %5549 = vmatprep.mubr.bf16.mxu0 %v4495
      %5550 = vmatmul.mubr.bf16.gmra.mxu0 %v4494
      %v5551 = vpop.f32.mrf.mxu0
      %v5552 = vadd.f32 %v5391, %v5551
      %v5553 = vpop.f32.mrf.mxu0
      %v5554 = vpop.f32.mrf.mxu0
      %v5555 = vadd.f32 %v5394, %v5554
      %v5556 = vpop.f32.mrf.mxu0
      %5557 = vdwg.mxu0
      %5558 = vmatprep.subr.bf16.mxu0 0
      %5559 = vmatpush1.bf16.msra.mxu0 %v4986
      %5560 = vmatprep.subr.bf16.mxu0 0
      %5561 = vmatpush1.bf16.msra.mxu0 %v4985
      %5562 = vmatprep.subr.bf16.mxu0 0
      %5563 = vmatpush1.bf16.msra.mxu0 %v4984
      %5564 = vmatprep.subr.bf16.mxu0 0
      %5565 = vmatpush1.bf16.msra.mxu0 %v4983
      %5566 = vmatprep.subr.bf16.mxu0 0
      %5567 = vmatpush1.bf16.msra.mxu0 %v4982
      %5568 = vmatprep.subr.bf16.mxu0 0
      %5569 = vmatpush1.bf16.msra.mxu0 %v4981
      %5570 = vmatprep.subr.bf16.mxu0 0
      %5571 = vmatpush1.bf16.msra.mxu0 %v4980
      %5572 = vmatprep.subr.bf16.mxu0 0
      %5573 = vmatpush1.bf16.msra.mxu0 %v4979
      %5574 = vmatprep.subr.bf16.mxu0 0
      %5575 = vmatpush2.bf16.msra.mxu0 %v4994
      %5576 = vmatprep.subr.bf16.mxu0 0
      %5577 = vmatpush2.bf16.msra.mxu0 %v4993
      %5578 = vmatprep.subr.bf16.mxu0 0
      %5579 = vmatpush2.bf16.msra.mxu0 %v4992
      %5580 = vmatprep.subr.bf16.mxu0 0
      %5581 = vmatpush2.bf16.msra.mxu0 %v4991
      %5582 = vmatprep.subr.bf16.mxu0 0
      %5583 = vmatpush2.bf16.msra.mxu0 %v4990
      %5584 = vmatprep.subr.bf16.mxu0 0
      %5585 = vmatpush2.bf16.msra.mxu0 %v4989
      %5586 = vmatprep.subr.bf16.mxu0 0
      %5587 = vmatpush2.bf16.msra.mxu0 %v4988
      %5588 = vmatprep.subr.bf16.mxu0 0
      %5589 = vmatpush2.bf16.msra.mxu0 %v4987
      %5590 = vmatprep.mubr.bf16.mxu0 %v4362
      %5591 = vmatmul.mubr.bf16.gmra.mxu0 %v4361
      %v5592 = vpop.f32.mrf.mxu0
      %v5593 = vadd.f32 %v5432, %v5592
      %v5594 = vpop.f32.mrf.mxu0
      %v5595 = vpop.f32.mrf.mxu0
      %v5596 = vadd.f32 %v5435, %v5595
      %v5597 = vpop.f32.mrf.mxu0
      %5598 = vmatprep.mubr.bf16.mxu0 %v4371
      %5599 = vmatmul.mubr.bf16.gmra.mxu0 %v4370
      %v5600 = vpop.f32.mrf.mxu0
      %v5601 = vadd.f32 %v5440, %v5600
      %v5602 = vpop.f32.mrf.mxu0
      %v5603 = vpop.f32.mrf.mxu0
      %v5604 = vadd.f32 %v5443, %v5603
      %v5605 = vpop.f32.mrf.mxu0
      %5606 = vmatprep.mubr.bf16.mxu0 %v4380
      %5607 = vmatmul.mubr.bf16.gmra.mxu0 %v4379
      %v5608 = vpop.f32.mrf.mxu0
      %v5609 = vadd.f32 %v5448, %v5608
      %v5610 = vpop.f32.mrf.mxu0
      %v5611 = vpop.f32.mrf.mxu0
      %v5612 = vadd.f32 %v5451, %v5611
      %v5613 = vpop.f32.mrf.mxu0
      %5614 = vmatprep.mubr.bf16.mxu0 %v4389
      %5615 = vmatmul.mubr.bf16.gmra.mxu0 %v4388
      %v5616 = vpop.f32.mrf.mxu0
      %v5617 = vadd.f32 %v5456, %v5616
      %v5618 = vpop.f32.mrf.mxu0
      %v5619 = vpop.f32.mrf.mxu0
      %v5620 = vadd.f32 %v5459, %v5619
      %v5621 = vpop.f32.mrf.mxu0
      %5622 = vmatprep.mubr.bf16.mxu0 %v4398
      %5623 = vmatmul.mubr.bf16.gmra.mxu0 %v4397
      %v5624 = vpop.f32.mrf.mxu0
      %v5625 = vadd.f32 %v5464, %v5624
      %v5626 = vpop.f32.mrf.mxu0
      %v5627 = vpop.f32.mrf.mxu0
      %v5628 = vadd.f32 %v5467, %v5627
      %v5629 = vpop.f32.mrf.mxu0
      %5630 = vmatprep.mubr.bf16.mxu0 %v4407
      %5631 = vmatmul.mubr.bf16.gmra.mxu0 %v4406
      %v5632 = vpop.f32.mrf.mxu0
      %v5633 = vadd.f32 %v5472, %v5632
      %v5634 = vpop.f32.mrf.mxu0
      %v5635 = vpop.f32.mrf.mxu0
      %v5636 = vadd.f32 %v5475, %v5635
      %v5637 = vpop.f32.mrf.mxu0
      %5638 = vmatprep.mubr.bf16.mxu0 %v4416
      %5639 = vmatmul.mubr.bf16.gmra.mxu0 %v4415
      %v5640 = vpop.f32.mrf.mxu0
      %v5641 = vadd.f32 %v5480, %v5640
      %v5642 = vpop.f32.mrf.mxu0
      %v5643 = vpop.f32.mrf.mxu0
      %v5644 = vadd.f32 %v5483, %v5643
      %v5645 = vpop.f32.mrf.mxu0
      %5646 = vmatprep.mubr.bf16.mxu0 %v4425
      %5647 = vmatmul.mubr.bf16.gmra.mxu0 %v4424
      %v5648 = vpop.f32.mrf.mxu0
      %v5649 = vadd.f32 %v5488, %v5648
      %v5650 = vpop.f32.mrf.mxu0
      %v5651 = vpop.f32.mrf.mxu0
      %v5652 = vadd.f32 %v5491, %v5651
      %v5653 = vpop.f32.mrf.mxu0
      %5654 = vmatprep.mubr.bf16.mxu0 %v4434
      %5655 = vmatmul.mubr.bf16.gmra.mxu0 %v4433
      %v5656 = vpop.f32.mrf.mxu0
      %v5657 = vadd.f32 %v5496, %v5656
      %v5658 = vpop.f32.mrf.mxu0
      %v5659 = vpop.f32.mrf.mxu0
      %v5660 = vadd.f32 %v5499, %v5659
      %v5661 = vpop.f32.mrf.mxu0
      %5662 = vmatprep.mubr.bf16.mxu0 %v4443
      %5663 = vmatmul.mubr.bf16.gmra.mxu0 %v4442
      %v5664 = vpop.f32.mrf.mxu0
      %v5665 = vadd.f32 %v5504, %v5664
      %v5666 = vpop.f32.mrf.mxu0
      %v5667 = vpop.f32.mrf.mxu0
      %v5668 = vadd.f32 %v5507, %v5667
      %v5669 = vpop.f32.mrf.mxu0
      %5670 = vmatprep.mubr.bf16.mxu0 %v4452
      %5671 = vmatmul.mubr.bf16.gmra.mxu0 %v4451
      %v5672 = vpop.f32.mrf.mxu0
      %v5673 = vadd.f32 %v5512, %v5672
      %v5674 = vpop.f32.mrf.mxu0
      %v5675 = vpop.f32.mrf.mxu0
      %v5676 = vadd.f32 %v5515, %v5675
      %v5677 = vpop.f32.mrf.mxu0
      %5678 = vmatprep.mubr.bf16.mxu0 %v4461
      %5679 = vmatmul.mubr.bf16.gmra.mxu0 %v4460
      %v5680 = vpop.f32.mrf.mxu0
      %v5681 = vadd.f32 %v5520, %v5680
      %v5682 = vpop.f32.mrf.mxu0
      %v5683 = vpop.f32.mrf.mxu0
      %v5684 = vadd.f32 %v5523, %v5683
      %v5685 = vpop.f32.mrf.mxu0
      %5686 = vmatprep.mubr.bf16.mxu0 %v4470
      %5687 = vmatmul.mubr.bf16.gmra.mxu0 %v4469
      %v5688 = vpop.f32.mrf.mxu0
      %v5689 = vadd.f32 %v5528, %v5688
      %v5690 = vpop.f32.mrf.mxu0
      %v5691 = vpop.f32.mrf.mxu0
      %v5692 = vadd.f32 %v5531, %v5691
      %v5693 = vpop.f32.mrf.mxu0
      %5694 = vmatprep.mubr.bf16.mxu0 %v4479
      %5695 = vmatmul.mubr.bf16.gmra.mxu0 %v4478
      %v5696 = vpop.f32.mrf.mxu0
      %v5697 = vadd.f32 %v5536, %v5696
      %v5698 = vpop.f32.mrf.mxu0
      %v5699 = vpop.f32.mrf.mxu0
      %v5700 = vadd.f32 %v5539, %v5699
      %v5701 = vpop.f32.mrf.mxu0
      %5702 = vmatprep.mubr.bf16.mxu0 %v4488
      %5703 = vmatmul.mubr.bf16.gmra.mxu0 %v4487
      %v5704 = vpop.f32.mrf.mxu0
      %v5705 = vadd.f32 %v5544, %v5704
      %v5706 = vpop.f32.mrf.mxu0
      %v5707 = vpop.f32.mrf.mxu0
      %v5708 = vadd.f32 %v5547, %v5707
      %v5709 = vpop.f32.mrf.mxu0
      %5710 = vmatprep.mubr.bf16.mxu0 %v4497
      %5711 = vmatmul.mubr.bf16.gmra.mxu0 %v4496
      %v5712 = vpop.f32.mrf.mxu0
      %v5713 = vadd.f32 %v5552, %v5712
      %v5714 = vpop.f32.mrf.mxu0
      %v5715 = vpop.f32.mrf.mxu0
      %v5716 = vadd.f32 %v5555, %v5715
      %v5717 = vpop.f32.mrf.mxu0
      %5718 = vdwg.mxu0
      %5719 = vmatprep.subr.bf16.mxu0 0
      %5720 = vmatpush1.bf16.msra.mxu0 %v5002
      %5721 = vmatprep.subr.bf16.mxu0 0
      %5722 = vmatpush1.bf16.msra.mxu0 %v5001
      %5723 = vmatprep.subr.bf16.mxu0 0
      %5724 = vmatpush1.bf16.msra.mxu0 %v5000
      %5725 = vmatprep.subr.bf16.mxu0 0
      %5726 = vmatpush1.bf16.msra.mxu0 %v4999
      %5727 = vmatprep.subr.bf16.mxu0 0
      %5728 = vmatpush1.bf16.msra.mxu0 %v4998
      %5729 = vmatprep.subr.bf16.mxu0 0
      %5730 = vmatpush1.bf16.msra.mxu0 %v4997
      %5731 = vmatprep.subr.bf16.mxu0 0
      %5732 = vmatpush1.bf16.msra.mxu0 %v4996
      %5733 = vmatprep.subr.bf16.mxu0 0
      %5734 = vmatpush1.bf16.msra.mxu0 %v4995
      %5735 = vmatprep.subr.bf16.mxu0 0
      %5736 = vmatpush2.bf16.msra.mxu0 0
      %5737 = vmatprep.subr.bf16.mxu0 0
      %5738 = vmatpush2.bf16.msra.mxu0 0
      %5739 = vmatprep.subr.bf16.mxu0 0
      %5740 = vmatpush2.bf16.msra.mxu0 0
      %5741 = vmatprep.subr.bf16.mxu0 0
      %5742 = vmatpush2.bf16.msra.mxu0 0
      %5743 = vmatprep.subr.bf16.mxu0 0
      %5744 = vmatpush2.bf16.msra.mxu0 0
      %5745 = vmatprep.subr.bf16.mxu0 0
      %5746 = vmatpush2.bf16.msra.mxu0 0
      %5747 = vmatprep.subr.bf16.mxu0 0
      %5748 = vmatpush2.bf16.msra.mxu0 0
      %5749 = vmatprep.subr.bf16.mxu0 0
      %5750 = vmatpush2.bf16.msra.mxu0 0
      %5751 = vmatprep.mubr.bf16.mxu0 0
      %5752 = vmatmul.mubr.bf16.gmra.mxu0 %v4363
      %v5753 = vpop.f32.mrf.mxu0
      %v5754 = vadd.f32 %v5593, %v5753
      %v5755 = vpop.f32.mrf.mxu0
      %v5756 = vpop.f32.mrf.mxu0
      %v5757 = vadd.f32 %v5596, %v5756
      %v5758 = vpop.f32.mrf.mxu0
      %5759 = vmatprep.mubr.bf16.mxu0 0
      %5760 = vmatmul.mubr.bf16.gmra.mxu0 %v4372
      %v5761 = vpop.f32.mrf.mxu0
      %v5762 = vadd.f32 %v5601, %v5761
      %v5763 = vpop.f32.mrf.mxu0
      %v5764 = vpop.f32.mrf.mxu0
      %v5765 = vadd.f32 %v5604, %v5764
      %v5766 = vpop.f32.mrf.mxu0
      %5767 = vmatprep.mubr.bf16.mxu0 0
      %5768 = vmatmul.mubr.bf16.gmra.mxu0 %v4381
      %v5769 = vpop.f32.mrf.mxu0
      %v5770 = vadd.f32 %v5609, %v5769
      %v5771 = vpop.f32.mrf.mxu0
      %v5772 = vpop.f32.mrf.mxu0
      %v5773 = vadd.f32 %v5612, %v5772
      %v5774 = vpop.f32.mrf.mxu0
      %5775 = vmatprep.mubr.bf16.mxu0 0
      %5776 = vmatmul.mubr.bf16.gmra.mxu0 %v4390
      %v5777 = vpop.f32.mrf.mxu0
      %v5778 = vadd.f32 %v5617, %v5777
      %v5779 = vpop.f32.mrf.mxu0
      %v5780 = vpop.f32.mrf.mxu0
      %v5781 = vadd.f32 %v5620, %v5780
      %v5782 = vpop.f32.mrf.mxu0
      %5783 = vmatprep.mubr.bf16.mxu0 0
      %5784 = vmatmul.mubr.bf16.gmra.mxu0 %v4399
      %v5785 = vpop.f32.mrf.mxu0
      %v5786 = vadd.f32 %v5625, %v5785
      %v5787 = vpop.f32.mrf.mxu0
      %v5788 = vpop.f32.mrf.mxu0
      %v5789 = vadd.f32 %v5628, %v5788
      %v5790 = vpop.f32.mrf.mxu0
      %5791 = vmatprep.mubr.bf16.mxu0 0
      %5792 = vmatmul.mubr.bf16.gmra.mxu0 %v4408
      %v5793 = vpop.f32.mrf.mxu0
      %v5794 = vadd.f32 %v5633, %v5793
      %v5795 = vpop.f32.mrf.mxu0
      %v5796 = vpop.f32.mrf.mxu0
      %v5797 = vadd.f32 %v5636, %v5796
      %v5798 = vpop.f32.mrf.mxu0
      %5799 = vmatprep.mubr.bf16.mxu0 0
      %5800 = vmatmul.mubr.bf16.gmra.mxu0 %v4417
      %v5801 = vpop.f32.mrf.mxu0
      %v5802 = vadd.f32 %v5641, %v5801
      %v5803 = vpop.f32.mrf.mxu0
      %v5804 = vpop.f32.mrf.mxu0
      %v5805 = vadd.f32 %v5644, %v5804
      %v5806 = vpop.f32.mrf.mxu0
      %5807 = vmatprep.mubr.bf16.mxu0 0
      %5808 = vmatmul.mubr.bf16.gmra.mxu0 %v4426
      %v5809 = vpop.f32.mrf.mxu0
      %v5810 = vadd.f32 %v5649, %v5809
      %v5811 = vpop.f32.mrf.mxu0
      %v5812 = vpop.f32.mrf.mxu0
      %v5813 = vadd.f32 %v5652, %v5812
      %v5814 = vpop.f32.mrf.mxu0
      %5815 = vmatprep.mubr.bf16.mxu0 0
      %5816 = vmatmul.mubr.bf16.gmra.mxu0 %v4435
      %v5817 = vpop.f32.mrf.mxu0
      %v5818 = vadd.f32 %v5657, %v5817
      %v5819 = vpop.f32.mrf.mxu0
      %v5820 = vpop.f32.mrf.mxu0
      %v5821 = vadd.f32 %v5660, %v5820
      %v5822 = vpop.f32.mrf.mxu0
      %5823 = vmatprep.mubr.bf16.mxu0 0
      %5824 = vmatmul.mubr.bf16.gmra.mxu0 %v4444
      %v5825 = vpop.f32.mrf.mxu0
      %v5826 = vadd.f32 %v5665, %v5825
      %v5827 = vpop.f32.mrf.mxu0
      %v5828 = vpop.f32.mrf.mxu0
      %v5829 = vadd.f32 %v5668, %v5828
      %v5830 = vpop.f32.mrf.mxu0
      %5831 = vmatprep.mubr.bf16.mxu0 0
      %5832 = vmatmul.mubr.bf16.gmra.mxu0 %v4453
      %v5833 = vpop.f32.mrf.mxu0
      %v5834 = vadd.f32 %v5673, %v5833
      %v5835 = vpop.f32.mrf.mxu0
      %v5836 = vpop.f32.mrf.mxu0
      %v5837 = vadd.f32 %v5676, %v5836
      %v5838 = vpop.f32.mrf.mxu0
      %5839 = vmatprep.mubr.bf16.mxu0 0
      %5840 = vmatmul.mubr.bf16.gmra.mxu0 %v4462
      %v5841 = vpop.f32.mrf.mxu0
      %v5842 = vadd.f32 %v5681, %v5841
      %v5843 = vpop.f32.mrf.mxu0
      %v5844 = vpop.f32.mrf.mxu0
      %v5845 = vadd.f32 %v5684, %v5844
      %v5846 = vpop.f32.mrf.mxu0
      %5847 = vmatprep.mubr.bf16.mxu0 0
      %5848 = vmatmul.mubr.bf16.gmra.mxu0 %v4471
      %v5849 = vpop.f32.mrf.mxu0
      %v5850 = vadd.f32 %v5689, %v5849
      %v5851 = vpop.f32.mrf.mxu0
      %v5852 = vpop.f32.mrf.mxu0
      %v5853 = vadd.f32 %v5692, %v5852
      %v5854 = vpop.f32.mrf.mxu0
      %5855 = vmatprep.mubr.bf16.mxu0 0
      %5856 = vmatmul.mubr.bf16.gmra.mxu0 %v4480
      %v5857 = vpop.f32.mrf.mxu0
      %v5858 = vadd.f32 %v5697, %v5857
      %v5859 = vpop.f32.mrf.mxu0
      %v5860 = vpop.f32.mrf.mxu0
      %v5861 = vadd.f32 %v5700, %v5860
      %v5862 = vpop.f32.mrf.mxu0
      %5863 = vmatprep.mubr.bf16.mxu0 0
      %5864 = vmatmul.mubr.bf16.gmra.mxu0 %v4489
      %v5865 = vpop.f32.mrf.mxu0
      %v5866 = vadd.f32 %v5705, %v5865
      %v5867 = vpop.f32.mrf.mxu0
      %v5868 = vpop.f32.mrf.mxu0
      %v5869 = vadd.f32 %v5708, %v5868
      %v5870 = vpop.f32.mrf.mxu0
      %5871 = vmatprep.mubr.bf16.mxu0 0
      %5872 = vmatmul.mubr.bf16.gmra.mxu0 %v4498
      %v5873 = vpop.f32.mrf.mxu0
      %v5874 = vadd.f32 %v5713, %v5873
      %v5875 = vpop.f32.mrf.mxu0
      %v5876 = vpop.f32.mrf.mxu0
      %v5877 = vadd.f32 %v5716, %v5876
      %v5878 = vpop.f32.mrf.mxu0
      %5879 = vdwg.mxu0
      %v5880 = vadd.f32 %v369, %v5754
      %v5881 = vadd.f32 %v370, %v5757
      %v5882 = vadd.f32 %v371, %v5762
      %v5883 = vadd.f32 %v372, %v5765
      %v5884 = vadd.f32 %v373, %v5770
      %v5885 = vadd.f32 %v374, %v5773
      %v5886 = vadd.f32 %v375, %v5778
      %v5887 = vadd.f32 %v376, %v5781
      %v5888 = vadd.f32 %v377, %v5786
      %v5889 = vadd.f32 %v378, %v5789
      %v5890 = vadd.f32 %v379, %v5794
      %v5891 = vadd.f32 %v380, %v5797
      %v5892 = vadd.f32 %v381, %v5802
      %v5893 = vadd.f32 %v382, %v5805
      %v5894 = vadd.f32 %v383, %v5810
      %v5895 = vadd.f32 %v384, %v5813
      %v5896 = vadd.f32 %v385, %v5818
      %v5897 = vadd.f32 %v386, %v5821
      %v5898 = vadd.f32 %v387, %v5826
      %v5899 = vadd.f32 %v388, %v5829
      %v5900 = vadd.f32 %v389, %v5834
      %v5901 = vadd.f32 %v390, %v5837
      %v5902 = vadd.f32 %v391, %v5842
      %v5903 = vadd.f32 %v392, %v5845
      %v5904 = vadd.f32 %v393, %v5850
      %v5905 = vadd.f32 %v394, %v5853
      %v5906 = vadd.f32 %v395, %v5858
      %v5907 = vadd.f32 %v396, %v5861
      %v5908 = vadd.f32 %v397, %v5866
      %v5909 = vadd.f32 %v398, %v5869
      %v5910 = vadd.f32 %v399, %v5874
      %v5911 = vadd.f32 %v400, %v5877
      %v5912 = vpack.c.bf16 %v5881, %v5880
      %v5913 = vpack.c.bf16 %v5883, %v5882
      %v5914 = vpack.c.bf16 %v5885, %v5884
      %v5915 = vpack.c.bf16 %v5887, %v5886
      %v5916 = vpack.c.bf16 %v5889, %v5888
      %v5917 = vpack.c.bf16 %v5891, %v5890
      %v5918 = vpack.c.bf16 %v5893, %v5892
      %v5919 = vpack.c.bf16 %v5895, %v5894
      %v5920 = vpack.c.bf16 %v5897, %v5896
      %v5921 = vpack.c.bf16 %v5899, %v5898
      %v5922 = vpack.c.bf16 %v5901, %v5900
      %v5923 = vpack.c.bf16 %v5903, %v5902
      %v5924 = vpack.c.bf16 %v5905, %v5904
      %v5925 = vpack.c.bf16 %v5907, %v5906
      %v5926 = vpack.c.bf16 %v5909, %v5908
      %v5927 = vpack.c.bf16 %v5911, %v5910
      %v5944 = vunpack.c.l.b16 %v5912
      %v5945 = vunpack.c.h.b16 %v5912
      %v5946 = vunpack.c.l.b16 %v5913
      %v5947 = vunpack.c.h.b16 %v5913
      %v5948 = vunpack.c.l.b16 %v5914
      %v5949 = vunpack.c.h.b16 %v5914
      %v5950 = vunpack.c.l.b16 %v5915
      %v5951 = vunpack.c.h.b16 %v5915
      %v5952 = vunpack.c.l.b16 %v5916
      %v5953 = vunpack.c.h.b16 %v5916
      %v5954 = vunpack.c.l.b16 %v5917
      %v5955 = vunpack.c.h.b16 %v5917
      %v5956 = vunpack.c.l.b16 %v5918
      %v5957 = vunpack.c.h.b16 %v5918
      %v5958 = vunpack.c.l.b16 %v5919
      %v5959 = vunpack.c.h.b16 %v5919
      %v5960 = vunpack.c.l.b16 %v5920
      %v5961 = vunpack.c.h.b16 %v5920
      %v5962 = vunpack.c.l.b16 %v5921
      %v5963 = vunpack.c.h.b16 %v5921
      %v5964 = vunpack.c.l.b16 %v5922
      %v5965 = vunpack.c.h.b16 %v5922
      %v5966 = vunpack.c.l.b16 %v5923
      %v5967 = vunpack.c.h.b16 %v5923
      %v5968 = vunpack.c.l.b16 %v5924
      %v5969 = vunpack.c.h.b16 %v5924
      %v5970 = vunpack.c.l.b16 %v5925
      %v5971 = vunpack.c.h.b16 %v5925
      %v5972 = vunpack.c.l.b16 %v5926
      %v5973 = vunpack.c.h.b16 %v5926
      %v5974 = vunpack.c.l.b16 %v5927
      %v5975 = vunpack.c.h.b16 %v5927
      %v5976 = vpack.c.b16 %v5944, %v5944
      %v5977 = vpack.c.b16 %v5945, %v5945
      %v5978 = vpack.c.b16 %v5946, %v5946
      %v5979 = vpack.c.b16 %v5947, %v5947
      %v5980 = vpack.c.b16 %v5948, %v5948
      %v5981 = vpack.c.b16 %v5949, %v5949
      %v5982 = vpack.c.b16 %v5950, %v5950
      %v5983 = vpack.c.b16 %v5951, %v5951
      %v5984 = vpack.c.b16 %v5952, %v5952
      %v5985 = vpack.c.b16 %v5953, %v5953
      %v5986 = vpack.c.b16 %v5954, %v5954
      %v5987 = vpack.c.b16 %v5955, %v5955
      %v5988 = vpack.c.b16 %v5956, %v5956
      %v5989 = vpack.c.b16 %v5957, %v5957
      %v5990 = vpack.c.b16 %v5958, %v5958
      %v5991 = vpack.c.b16 %v5959, %v5959
      %v5992 = vpack.c.b16 %v5960, %v5960
      %v5993 = vpack.c.b16 %v5961, %v5961
      %v5994 = vpack.c.b16 %v5962, %v5962
      %v5995 = vpack.c.b16 %v5963, %v5963
      %v5996 = vpack.c.b16 %v5964, %v5964
      %v5997 = vpack.c.b16 %v5965, %v5965
      %v5998 = vpack.c.b16 %v5966, %v5966
      %v5999 = vpack.c.b16 %v5967, %v5967
      %v6000 = vpack.c.b16 %v5968, %v5968
      %v6001 = vpack.c.b16 %v5969, %v5969
      %v6002 = vpack.c.b16 %v5970, %v5970
      %v6003 = vpack.c.b16 %v5971, %v5971
      %v6004 = vpack.c.b16 %v5972, %v5972
      %v6005 = vpack.c.b16 %v5973, %v5973
      %v6006 = vpack.c.b16 %v5974, %v5974
      %v6007 = vpack.c.b16 %v5975, %v5975
      %6040 = vst [vmem:[%s334] sm:$0xf] %v5976
      %6041 = vst [vmem:[%s334 + $0x4] sm:$0xf] %v5977
      %6042 = vst [vmem:[%s334 + $0x8] sm:$0xf] %v5978
      %6043 = vst [vmem:[%s334 + $0xc] sm:$0xf] %v5979
      %6044 = vst [vmem:[%s334 + $0x10] sm:$0xf] %v5980
      %6045 = vst [vmem:[%s334 + $0x14] sm:$0xf] %v5981
      %6046 = vst [vmem:[%s334 + $0x18] sm:$0xf] %v5982
      %6047 = vst [vmem:[%s334 + $0x1c] sm:$0xf] %v5983
      %6048 = vst [vmem:[%s334 + $0x20] sm:$0xf] %v5984
      %6049 = vst [vmem:[%s334 + $0x24] sm:$0xf] %v5985
      %6050 = vst [vmem:[%s334 + $0x28] sm:$0xf] %v5986
      %6051 = vst [vmem:[%s334 + $0x2c] sm:$0xf] %v5987
      %6052 = vst [vmem:[%s334 + $0x30] sm:$0xf] %v5988
      %6053 = vst [vmem:[%s334 + $0x34] sm:$0xf] %v5989
      %6054 = vst [vmem:[%s334 + $0x38] sm:$0xf] %v5990
      %6055 = vst [vmem:[%s334 + $0x3c] sm:$0xf] %v5991
      %6056 = vst [vmem:[%s334 + $0x40] sm:$0xf] %v5992
      %6057 = vst [vmem:[%s334 + $0x44] sm:$0xf] %v5993
      %6058 = vst [vmem:[%s334 + $0x48] sm:$0xf] %v5994
      %6059 = vst [vmem:[%s334 + $0x4c] sm:$0xf] %v5995
      %6060 = vst [vmem:[%s334 + $0x50] sm:$0xf] %v5996
      %6061 = vst [vmem:[%s334 + $0x54] sm:$0xf] %v5997
      %6062 = vst [vmem:[%s334 + $0x58] sm:$0xf] %v5998
      %6063 = vst [vmem:[%s334 + $0x5c] sm:$0xf] %v5999
      %6064 = vst [vmem:[%s334 + $0x60] sm:$0xf] %v6000
      %6065 = vst [vmem:[%s334 + $0x64] sm:$0xf] %v6001
      %6066 = vst [vmem:[%s334 + $0x68] sm:$0xf] %v6002
      %6067 = vst [vmem:[%s334 + $0x6c] sm:$0xf] %v6003
      %6068 = vst [vmem:[%s334 + $0x70] sm:$0xf] %v6004
      %6069 = vst [vmem:[%s334 + $0x74] sm:$0xf] %v6005
      %6070 = vst [vmem:[%s334 + $0x78] sm:$0xf] %v6006
      %6071 = vst [vmem:[%s334 + $0x7c] sm:$0xf] %v6007
      %s6072 = smul.u32 32, %s20
      %p6073 = scmp.lt.s32.totalorder %s6072, 63
      %s6074 = scalar_select %p6073, %s6072, 63
      %s6075 = smul.addr %s6074, 4
      %s6076 = scalar_lea.vmem %s9, %s6075
      // Predicated region
      $region57: #{densenet_forward.4} parent=55 // pred_check
        %p6077 = pneg %p232
      $region58: #{densenet_forward.4} parent=55 // pred_check_branch
        %6079 = sbr.rel (%p6077) target = $region60
      $region59: #{densenet_forward.4} parent=55 // pred_region
        %s6080 = smul.u32 32, %s20
      $region60: #{densenet_forward.4} parent=55 // pred_fallthru
        _
    $region56: #{densenet_forward.4} parent=5 // pred_fallthru
      _
    %p6081 = scmp.le.s32.totalorder 2, %s15
    // Predicated region
    $region61: #{densenet_forward.4} parent=5 // pred_check
      %p6082 = pneg %p6081
    $region62: #{densenet_forward.4} parent=5 // pred_check_branch
      %6084 = sbr.rel (%p6082) target = $region64
    $region63: #{densenet_forward.4} parent=5 // pred_region
      %s6085 = ssub.s32 %s15, 2
      // Predicated region
      $region65: #{densenet_forward.4} parent=63 // pred_check
        %p6086 = pneg %p238
      $region66: #{densenet_forward.4} parent=63 // pred_check_branch
        %6088 = sbr.rel (%p6086) target = $region68
      $region67: #{densenet_forward.4} parent=63 // pred_region
        %s6089 = smul.u32 32, %s21
        %p6090 = scmp.lt.s32.totalorder %s6089, 63
        %s6091 = scalar_select %p6090, %s6089, 63
        %s6092 = smul.addr %s6091, 4
        %s6093 = scalar_lea.vmem %s9, %s6092
      $region68: #{densenet_forward.4} parent=63 // pred_fallthru
        _
    $region64: #{densenet_forward.4} parent=5 // pred_fallthru
      _
  $region6: #{densenet_forward.4} parent=0 // loop_footer
    %s19 = sadd.s32 1, %s15
  $region7: #{densenet_forward.4} parent=0 // loop_footer_branch
    %14 = sbr.rel target = $region3
  $region8: #{densenet_forward.4} parent=0 // loop_exit
    _

</llo_original>
